<compile_context>
chip_gen: v7x
topology: tpu7x:2x2x1
jax: 0.10.0
libtpu: 0.0.40
codegen_flags: <defaults>
</compile_context>

<pallas_src>
import math
import functools

import jax
import jax.numpy as jnp
from jax import lax
from jax.experimental import pallas as pl
from jax.experimental.pallas import tpu as pltpu


# Which 3x3 kernel rows (or columns) contribute for output parity p and original-grid
# offset tap a in {0, 1}:
#   parity 0: a=0 -> offset -1, kernel rows {0};   a=1 -> offset 0,  kernel rows {1, 2}
#   parity 1: a=0 -> offset  0, kernel rows {0,1}; a=1 -> offset +1, kernel rows {2}
_TAP_SETS = (((0,), (1, 2)), ((0, 1), (2,)))


def _effective_taps(conv_w):
    """Fold (C_out, C_in, 3, 3) conv weight into (4, 4*C_in, C_out) K-stacked taps.

    Row-block order along the 4*C_in axis is (a, b) = (0,0), (0,1), (1,0), (1,1) and
    must match the window concatenation order in the kernel.
    """
    wt = jnp.transpose(conv_w, (2, 3, 1, 0))               # (ky, kx, C_in, C_out)
    mats = []
    for py in range(2):
        for px in range(2):
            blocks = []
            for a in range(2):
                for b in range(2):
                    m = None
                    for ky in _TAP_SETS[py][a]:
                        for kx in _TAP_SETS[px][b]:
                            t = wt[ky, kx]
                            m = t if m is None else m + t
                    blocks.append(m)                        # (C_in, C_out)
            mats.append(jnp.concatenate(blocks, axis=0))    # (4*C_in, C_out)
    return jnp.stack(mats, axis=0)                          # (4, 4*C_in, C_out)


def _upsample_conv_kernel(x_ref, w_ref, b_ref, o_ref, *, rows, width, channels):
    """One grid step = one batch element x one block of R original rows.

    x_ref: (1, 1, R+2, W+2, C)   spatially padded input slab (1-row halo top/bottom).
    w_ref: (4, 4C, C)            K-stacked folded taps, one matrix per output parity.
    b_ref: (1, C)                bias, f32.
    o_ref: (1, R, 2, W, 2, C)    parity-interleaved output: [.., r, py, j, px, c] is
                                 output pixel (2*(row0+r)+py, 2*j+px).
    """
    R, W, C = rows, width, channels
    bias = b_ref[...]                                       # (1, C) f32

    # Load the R+2 padded rows once (deduped across parities / shifts).
    row_vals = [x_ref[0, 0, k] for k in range(R + 2)]       # each (W+2, C)

    for py in range(2):
        planes = []
        for px in range(2):
            lhs_rows = []
            for r in range(R):
                # Four shifted (W, C) windows concatenated along K -> (W, 4C).
                parts = [row_vals[r + py + a][px + bb: px + bb + W, :]
                         for a in range(2) for bb in range(2)]
                lhs_rows.append(jnp.concatenate(parts, axis=-1))
            lhs = jnp.concatenate(lhs_rows, axis=0)         # (R*W, 4C)
            acc = jnp.dot(lhs, w_ref[2 * py + px],
                          preferred_element_type=jnp.float32) + bias
            planes.append(acc.reshape(R, W, C))             # f32
        # Interleave the two column parities and store this row-parity plane now.
        o_ref[0, :, py] = jnp.stack(planes, axis=2).astype(o_ref.dtype)


def _pick_row_block(h, max_rows=8):
    """Largest divisor of h that is <= max_rows (keeps >=2 blocks when h > max_rows)."""
    for r in range(min(h, max_rows), 0, -1):
        if h % r == 0:
            return r
    return 1


def upsample(x, params, use_conv=True):
    """x: (B, C, H, W) NCHW -> (B, C, 2H, 2W).  Matches PyTorch Upsample.forward."""
    B, C, H, W = x.shape
    if not use_conv:
        # No compute to kernelize: pure nearest replication.
        return jnp.repeat(jnp.repeat(x, 2, axis=2), 2, axis=3)
    # TODO(synk): only the default dims=2 (Conv2d) variant is implemented as a kernel.

    R = _pick_row_block(H)
    n_blocks = H // R

    # Channels-last so the channel contraction maps onto the MXU lanes.
    x_nhwc = jnp.transpose(x, (0, 2, 3, 1))                     # (B, H, W, C)
    xp = jnp.pad(x_nhwc, ((0, 0), (1, 1), (1, 1), (0, 0)))      # (B, H+2, W+2, C)
    # Overlapping (R+2)-row slabs with a 1-row halo; pad + stack fuse into one pass.
    x_slabs = jnp.stack([xp[:, i0:i0 + R + 2] for i0 in range(0, H, R)],
                        axis=1)                                  # (B, nB, R+2, W+2, C)

    # One-time weight fold (upsample fused into the conv), K-stacked per parity.
    weff = _effective_taps(params["conv_w"]).astype(x.dtype)    # (4, 4C, C)
    bias = params["conv_b"].reshape(1, C).astype(jnp.float32)

    kernel = functools.partial(_upsample_conv_kernel, rows=R, width=W, channels=C)

    # Raise the scoped VMEM limit only when the (double-buffered) footprint would
    # exceed v5e's 16 MiB default; cap at 64 MiB so it also fits v7x.
    itemsize = jnp.dtype(x.dtype).itemsize
    est = (2 * (R + 2) * (W + 2) * C * itemsize        # input slab (double-buffered)
           + 2 * 4 * R * W * C * itemsize              # output block (double-buffered)
           + 2 * 16 * C * C * itemsize + 8 * C)        # folded taps + bias
    vmem_limit = int(min(2 * est, 64 * 1024 * 1024)) if est > 12 * 1024 * 1024 else None

    out = pl.pallas_call(
        kernel,
        out_shape=jax.ShapeDtypeStruct((B, H, 2, W, 2, C), x.dtype),
        grid=(B, n_blocks),
        in_specs=[
            # One halo'd slab per step.
            pl.BlockSpec((1, 1, R + 2, W + 2, C), lambda b, i: (b, i, 0, 0, 0)),
            # Grid-invariant folded taps + bias (constant index_map -> fetched once).
            pl.BlockSpec((4, 4 * C, C), lambda b, i: (0, 0, 0)),
            pl.BlockSpec((1, C), lambda b, i: (0, 0)),
        ],
        out_specs=pl.BlockSpec((1, R, 2, W, 2, C),
                               lambda b, i: (b, i, 0, 0, 0, 0)),
        compiler_params=pltpu.CompilerParams(
            dimension_semantics=("parallel", "parallel"),
            vmem_limit_bytes=vmem_limit),
    )(x_slabs, weff, bias)

    # (B, H, py, W, px, C) -> (B, 2H, 2W, C) is a pure reshape (free), then NCHW.
    out = out.reshape(B, 2 * H, 2 * W, C)
    return jnp.transpose(out, (0, 3, 1, 2))


def reference(x, params, use_conv=True):
    """Pure-JAX replica of the PyTorch forward (nearest 2x + Conv2d pad=1)."""
    up = jnp.repeat(jnp.repeat(x, 2, axis=2), 2, axis=3)
    if not use_conv:
        return up
    out = lax.conv_general_dilated(
        up, params["conv_w"], window_strides=(1, 1), padding=((1, 1), (1, 1)),
        dimension_numbers=("NCHW", "OIHW", "NCHW"),
        precision=lax.Precision.HIGHEST)
    return out + params["conv_b"][None, :, None, None]


def init_params(key, channels):
    """Conv2d(channels, channels, 3, padding=1) with PyTorch-style nonzero init."""
    C = channels
    k1, k2 = jax.random.split(key)
    bound = 1.0 / math.sqrt(C * 3 * 3)
    return {
        "conv_w": jax.random.uniform(k1, (C, C, 3, 3), jnp.float32, -bound, bound),
        "conv_b": jax.random.uniform(k2, (C,), jnp.float32, -bound, bound),
    }


if __name__ == "__main__":
    key = jax.random.PRNGKey(0)
    kx, kp = jax.random.split(key)

    B, C, H, W = 2, 4, 16, 16
    x = jax.random.normal(kx, (B, C, H, W), jnp.float32)
    params = init_params(kp, C)

    out = jax.block_until_ready(upsample(x, params))
    ref = jax.block_until_ready(reference(x, params))

    assert out.shape == (B, C, 2 * H, 2 * W)
    assert jnp.allclose(out, ref, atol=2e-3, rtol=2e-3), "mismatch vs reference"

    print("KERNEL_OK")
</pallas_src>

<mosaic_0001>
module attributes {stable_mosaic.version = 11 : i64} {
  func.func @_upsample_conv_kernel(%arg0: i32, %arg1: i32, %arg2: memref<1x1x10x18x4xf32, #tpu.memory_space<vmem>>, %arg3: memref<4x16x4xf32, #tpu.memory_space<vmem>>, %arg4: memref<1x4xf32, #tpu.memory_space<vmem>>, %arg5: memref<1x8x2x16x2x4xf32, #tpu.memory_space<vmem>>) attributes {dimension_semantics = [#tpu.dimension_semantics<parallel>, #tpu.dimension_semantics<parallel>], iteration_bounds = array<i64: 2, 2>, scalar_prefetch = 0 : i64, scratch_operands = 0 : i64, tpu.core_type = #tpu.core_type<tc>, window_params = [{transform_indices = @transform_0, window_bounds = array<i64: 1, 1, 10, 18, 4>}, {pipeline_mode = #tpu.pipeline_mode<synchronous>, transform_indices = @transform_1, window_bounds = array<i64: 4, 16, 4>}, {pipeline_mode = #tpu.pipeline_mode<synchronous>, transform_indices = @transform_2, window_bounds = array<i64: 1, 4>}, {transform_indices = @transform_3, window_bounds = array<i64: 1, 8, 2, 16, 2, 4>}]} {
    %c0 = arith.constant 0 : index
    %c0_0 = arith.constant 0 : index
    %0 = vector.load %arg4[%c0, %c0_0] : memref<1x4xf32, #tpu.memory_space<vmem>>, vector<1x4xf32>
    %c0_1 = arith.constant 0 : index
    %c0_2 = arith.constant 0 : index
    %c0_3 = arith.constant 0 : index
    %c0_4 = arith.constant 0 : index
    %c0_5 = arith.constant 0 : index
    %1 = vector.load %arg2[%c0_1, %c0_2, %c0_3, %c0_4, %c0_5] : memref<1x1x10x18x4xf32, #tpu.memory_space<vmem>>, vector<1x1x1x18x4xf32>
    %2 = vector.shape_cast %1 : vector<1x1x1x18x4xf32> to vector<18x4xf32>
    %c0_6 = arith.constant 0 : index
    %c0_7 = arith.constant 0 : index
    %c1 = arith.constant 1 : index
    %c0_8 = arith.constant 0 : index
    %c0_9 = arith.constant 0 : index
    %3 = vector.load %arg2[%c0_6, %c0_7, %c1, %c0_8, %c0_9] : memref<1x1x10x18x4xf32, #tpu.memory_space<vmem>>, vector<1x1x1x18x4xf32>
    %4 = vector.shape_cast %3 : vector<1x1x1x18x4xf32> to vector<18x4xf32>
    %c0_10 = arith.constant 0 : index
    %c0_11 = arith.constant 0 : index
    %c2 = arith.constant 2 : index
    %c0_12 = arith.constant 0 : index
    %c0_13 = arith.constant 0 : index
    %5 = vector.load %arg2[%c0_10, %c0_11, %c2, %c0_12, %c0_13] : memref<1x1x10x18x4xf32, #tpu.memory_space<vmem>>, vector<1x1x1x18x4xf32>
    %6 = vector.shape_cast %5 : vector<1x1x1x18x4xf32> to vector<18x4xf32>
    %c0_14 = arith.constant 0 : index
    %c0_15 = arith.constant 0 : index
    %c3 = arith.constant 3 : index
    %c0_16 = arith.constant 0 : index
    %c0_17 = arith.constant 0 : index
    %7 = vector.load %arg2[%c0_14, %c0_15, %c3, %c0_16, %c0_17] : memref<1x1x10x18x4xf32, #tpu.memory_space<vmem>>, vector<1x1x1x18x4xf32>
    %8 = vector.shape_cast %7 : vector<1x1x1x18x4xf32> to vector<18x4xf32>
    %c0_18 = arith.constant 0 : index
    %c0_19 = arith.constant 0 : index
    %c4 = arith.constant 4 : index
    %c0_20 = arith.constant 0 : index
    %c0_21 = arith.constant 0 : index
    %9 = vector.load %arg2[%c0_18, %c0_19, %c4, %c0_20, %c0_21] : memref<1x1x10x18x4xf32, #tpu.memory_space<vmem>>, vector<1x1x1x18x4xf32>
    %10 = vector.shape_cast %9 : vector<1x1x1x18x4xf32> to vector<18x4xf32>
    %c0_22 = arith.constant 0 : index
    %c0_23 = arith.constant 0 : index
    %c5 = arith.constant 5 : index
    %c0_24 = arith.constant 0 : index
    %c0_25 = arith.constant 0 : index
    %11 = vector.load %arg2[%c0_22, %c0_23, %c5, %c0_24, %c0_25] : memref<1x1x10x18x4xf32, #tpu.memory_space<vmem>>, vector<1x1x1x18x4xf32>
    %12 = vector.shape_cast %11 : vector<1x1x1x18x4xf32> to vector<18x4xf32>
    %c0_26 = arith.constant 0 : index
    %c0_27 = arith.constant 0 : index
    %c6 = arith.constant 6 : index
    %c0_28 = arith.constant 0 : index
    %c0_29 = arith.constant 0 : index
    %13 = vector.load %arg2[%c0_26, %c0_27, %c6, %c0_28, %c0_29] : memref<1x1x10x18x4xf32, #tpu.memory_space<vmem>>, vector<1x1x1x18x4xf32>
    %14 = vector.shape_cast %13 : vector<1x1x1x18x4xf32> to vector<18x4xf32>
    %c0_30 = arith.constant 0 : index
    %c0_31 = arith.constant 0 : index
    %c7 = arith.constant 7 : index
    %c0_32 = arith.constant 0 : index
    %c0_33 = arith.constant 0 : index
    %15 = vector.load %arg2[%c0_30, %c0_31, %c7, %c0_32, %c0_33] : memref<1x1x10x18x4xf32, #tpu.memory_space<vmem>>, vector<1x1x1x18x4xf32>
    %16 = vector.shape_cast %15 : vector<1x1x1x18x4xf32> to vector<18x4xf32>
    %c0_34 = arith.constant 0 : index
    %c0_35 = arith.constant 0 : index
    %c8 = arith.constant 8 : index
    %c0_36 = arith.constant 0 : index
    %c0_37 = arith.constant 0 : index
    %17 = vector.load %arg2[%c0_34, %c0_35, %c8, %c0_36, %c0_37] : memref<1x1x10x18x4xf32, #tpu.memory_space<vmem>>, vector<1x1x1x18x4xf32>
    %18 = vector.shape_cast %17 : vector<1x1x1x18x4xf32> to vector<18x4xf32>
    %c0_38 = arith.constant 0 : index
    %c0_39 = arith.constant 0 : index
    %c9 = arith.constant 9 : index
    %c0_40 = arith.constant 0 : index
    %c0_41 = arith.constant 0 : index
    %19 = vector.load %arg2[%c0_38, %c0_39, %c9, %c0_40, %c0_41] : memref<1x1x10x18x4xf32, #tpu.memory_space<vmem>>, vector<1x1x1x18x4xf32>
    %20 = vector.shape_cast %19 : vector<1x1x1x18x4xf32> to vector<18x4xf32>
    %21 = vector.extract_strided_slice %2 {offsets = [0, 0], sizes = [16, 4], strides = [1, 1]} : vector<18x4xf32> to vector<16x4xf32>
    %22 = vector.extract_strided_slice %2 {offsets = [1, 0], sizes = [16, 4], strides = [1, 1]} : vector<18x4xf32> to vector<16x4xf32>
    %23 = vector.extract_strided_slice %4 {offsets = [0, 0], sizes = [16, 4], strides = [1, 1]} : vector<18x4xf32> to vector<16x4xf32>
    %24 = vector.extract_strided_slice %4 {offsets = [1, 0], sizes = [16, 4], strides = [1, 1]} : vector<18x4xf32> to vector<16x4xf32>
    %25 = tpu.concatenate %21, %22, %23, %24 in 1 : vector<16x4xf32>, vector<16x4xf32>, vector<16x4xf32>, vector<16x4xf32> -> vector<16x16xf32>
    %26 = vector.extract_strided_slice %4 {offsets = [0, 0], sizes = [16, 4], strides = [1, 1]} : vector<18x4xf32> to vector<16x4xf32>
    %27 = vector.extract_strided_slice %4 {offsets = [1, 0], sizes = [16, 4], strides = [1, 1]} : vector<18x4xf32> to vector<16x4xf32>
    %28 = vector.extract_strided_slice %6 {offsets = [0, 0], sizes = [16, 4], strides = [1, 1]} : vector<18x4xf32> to vector<16x4xf32>
    %29 = vector.extract_strided_slice %6 {offsets = [1, 0], sizes = [16, 4], strides = [1, 1]} : vector<18x4xf32> to vector<16x4xf32>
    %30 = tpu.concatenate %26, %27, %28, %29 in 1 : vector<16x4xf32>, vector<16x4xf32>, vector<16x4xf32>, vector<16x4xf32> -> vector<16x16xf32>
    %31 = vector.extract_strided_slice %6 {offsets = [0, 0], sizes = [16, 4], strides = [1, 1]} : vector<18x4xf32> to vector<16x4xf32>
    %32 = vector.extract_strided_slice %6 {offsets = [1, 0], sizes = [16, 4], strides = [1, 1]} : vector<18x4xf32> to vector<16x4xf32>
    %33 = vector.extract_strided_slice %8 {offsets = [0, 0], sizes = [16, 4], strides = [1, 1]} : vector<18x4xf32> to vector<16x4xf32>
    %34 = vector.extract_strided_slice %8 {offsets = [1, 0], sizes = [16, 4], strides = [1, 1]} : vector<18x4xf32> to vector<16x4xf32>
    %35 = tpu.concatenate %31, %32, %33, %34 in 1 : vector<16x4xf32>, vector<16x4xf32>, vector<16x4xf32>, vector<16x4xf32> -> vector<16x16xf32>
    %36 = vector.extract_strided_slice %8 {offsets = [0, 0], sizes = [16, 4], strides = [1, 1]} : vector<18x4xf32> to vector<16x4xf32>
    %37 = vector.extract_strided_slice %8 {offsets = [1, 0], sizes = [16, 4], strides = [1, 1]} : vector<18x4xf32> to vector<16x4xf32>
    %38 = vector.extract_strided_slice %10 {offsets = [0, 0], sizes = [16, 4], strides = [1, 1]} : vector<18x4xf32> to vector<16x4xf32>
    %39 = vector.extract_strided_slice %10 {offsets = [1, 0], sizes = [16, 4], strides = [1, 1]} : vector<18x4xf32> to vector<16x4xf32>
    %40 = tpu.concatenate %36, %37, %38, %39 in 1 : vector<16x4xf32>, vector<16x4xf32>, vector<16x4xf32>, vector<16x4xf32> -> vector<16x16xf32>
    %41 = vector.extract_strided_slice %10 {offsets = [0, 0], sizes = [16, 4], strides = [1, 1]} : vector<18x4xf32> to vector<16x4xf32>
    %42 = vector.extract_strided_slice %10 {offsets = [1, 0], sizes = [16, 4], strides = [1, 1]} : vector<18x4xf32> to vector<16x4xf32>
    %43 = vector.extract_strided_slice %12 {offsets = [0, 0], sizes = [16, 4], strides = [1, 1]} : vector<18x4xf32> to vector<16x4xf32>
    %44 = vector.extract_strided_slice %12 {offsets = [1, 0], sizes = [16, 4], strides = [1, 1]} : vector<18x4xf32> to vector<16x4xf32>
    %45 = tpu.concatenate %41, %42, %43, %44 in 1 : vector<16x4xf32>, vector<16x4xf32>, vector<16x4xf32>, vector<16x4xf32> -> vector<16x16xf32>
    %46 = vector.extract_strided_slice %12 {offsets = [0, 0], sizes = [16, 4], strides = [1, 1]} : vector<18x4xf32> to vector<16x4xf32>
    %47 = vector.extract_strided_slice %12 {offsets = [1, 0], sizes = [16, 4], strides = [1, 1]} : vector<18x4xf32> to vector<16x4xf32>
    %48 = vector.extract_strided_slice %14 {offsets = [0, 0], sizes = [16, 4], strides = [1, 1]} : vector<18x4xf32> to vector<16x4xf32>
    %49 = vector.extract_strided_slice %14 {offsets = [1, 0], sizes = [16, 4], strides = [1, 1]} : vector<18x4xf32> to vector<16x4xf32>
    %50 = tpu.concatenate %46, %47, %48, %49 in 1 : vector<16x4xf32>, vector<16x4xf32>, vector<16x4xf32>, vector<16x4xf32> -> vector<16x16xf32>
    %51 = vector.extract_strided_slice %14 {offsets = [0, 0], sizes = [16, 4], strides = [1, 1]} : vector<18x4xf32> to vector<16x4xf32>
    %52 = vector.extract_strided_slice %14 {offsets = [1, 0], sizes = [16, 4], strides = [1, 1]} : vector<18x4xf32> to vector<16x4xf32>
    %53 = vector.extract_strided_slice %16 {offsets = [0, 0], sizes = [16, 4], strides = [1, 1]} : vector<18x4xf32> to vector<16x4xf32>
    %54 = vector.extract_strided_slice %16 {offsets = [1, 0], sizes = [16, 4], strides = [1, 1]} : vector<18x4xf32> to vector<16x4xf32>
    %55 = tpu.concatenate %51, %52, %53, %54 in 1 : vector<16x4xf32>, vector<16x4xf32>, vector<16x4xf32>, vector<16x4xf32> -> vector<16x16xf32>
    %56 = vector.extract_strided_slice %16 {offsets = [0, 0], sizes = [16, 4], strides = [1, 1]} : vector<18x4xf32> to vector<16x4xf32>
    %57 = vector.extract_strided_slice %16 {offsets = [1, 0], sizes = [16, 4], strides = [1, 1]} : vector<18x4xf32> to vector<16x4xf32>
    %58 = vector.extract_strided_slice %18 {offsets = [0, 0], sizes = [16, 4], strides = [1, 1]} : vector<18x4xf32> to vector<16x4xf32>
    %59 = vector.extract_strided_slice %18 {offsets = [1, 0], sizes = [16, 4], strides = [1, 1]} : vector<18x4xf32> to vector<16x4xf32>
    %60 = tpu.concatenate %56, %57, %58, %59 in 1 : vector<16x4xf32>, vector<16x4xf32>, vector<16x4xf32>, vector<16x4xf32> -> vector<16x16xf32>
    %61 = tpu.concatenate %25, %30, %35, %40, %45, %50, %55, %60 in 0 : vector<16x16xf32>, vector<16x16xf32>, vector<16x16xf32>, vector<16x16xf32>, vector<16x16xf32>, vector<16x16xf32>, vector<16x16xf32>, vector<16x16xf32> -> vector<128x16xf32>
    %c0_42 = arith.constant 0 : index
    %c0_43 = arith.constant 0 : index
    %c0_44 = arith.constant 0 : index
    %62 = vector.load %arg3[%c0_42, %c0_43, %c0_44] : memref<4x16x4xf32, #tpu.memory_space<vmem>>, vector<1x16x4xf32>
    %63 = vector.shape_cast %62 : vector<1x16x4xf32> to vector<16x4xf32>
    %cst = arith.constant dense<0.000000e+00> : vector<128x4xf32>
    %64 = tpu.matmul %61, %63, %cst {dimension_numbers = #tpu.dot_dimension_numbers<[1], [0], [0], [1], [0, 0, 1, 1], [], []>} : vector<128x16xf32>, vector<16x4xf32>, vector<128x4xf32> -> vector<128x4xf32>
    %65 = vector.broadcast %0 : vector<1x4xf32> to vector<128x4xf32>
    %66 = arith.addf %64, %65 : vector<128x4xf32>
    %67 = vector.shape_cast %66 : vector<128x4xf32> to vector<8x16x4xf32>
    %68 = vector.extract_strided_slice %2 {offsets = [1, 0], sizes = [16, 4], strides = [1, 1]} : vector<18x4xf32> to vector<16x4xf32>
    %69 = vector.extract_strided_slice %2 {offsets = [2, 0], sizes = [16, 4], strides = [1, 1]} : vector<18x4xf32> to vector<16x4xf32>
    %70 = vector.extract_strided_slice %4 {offsets = [1, 0], sizes = [16, 4], strides = [1, 1]} : vector<18x4xf32> to vector<16x4xf32>
    %71 = vector.extract_strided_slice %4 {offsets = [2, 0], sizes = [16, 4], strides = [1, 1]} : vector<18x4xf32> to vector<16x4xf32>
    %72 = tpu.concatenate %68, %69, %70, %71 in 1 : vector<16x4xf32>, vector<16x4xf32>, vector<16x4xf32>, vector<16x4xf32> -> vector<16x16xf32>
    %73 = vector.extract_strided_slice %4 {offsets = [1, 0], sizes = [16, 4], strides = [1, 1]} : vector<18x4xf32> to vector<16x4xf32>
    %74 = vector.extract_strided_slice %4 {offsets = [2, 0], sizes = [16, 4], strides = [1, 1]} : vector<18x4xf32> to vector<16x4xf32>
    %75 = vector.extract_strided_slice %6 {offsets = [1, 0], sizes = [16, 4], strides = [1, 1]} : vector<18x4xf32> to vector<16x4xf32>
    %76 = vector.extract_strided_slice %6 {offsets = [2, 0], sizes = [16, 4], strides = [1, 1]} : vector<18x4xf32> to vector<16x4xf32>
    %77 = tpu.concatenate %73, %74, %75, %76 in 1 : vector<16x4xf32>, vector<16x4xf32>, vector<16x4xf32>, vector<16x4xf32> -> vector<16x16xf32>
    %78 = vector.extract_strided_slice %6 {offsets = [1, 0], sizes = [16, 4], strides = [1, 1]} : vector<18x4xf32> to vector<16x4xf32>
    %79 = vector.extract_strided_slice %6 {offsets = [2, 0], sizes = [16, 4], strides = [1, 1]} : vector<18x4xf32> to vector<16x4xf32>
    %80 = vector.extract_strided_slice %8 {offsets = [1, 0], sizes = [16, 4], strides = [1, 1]} : vector<18x4xf32> to vector<16x4xf32>
    %81 = vector.extract_strided_slice %8 {offsets = [2, 0], sizes = [16, 4], strides = [1, 1]} : vector<18x4xf32> to vector<16x4xf32>
    %82 = tpu.concatenate %78, %79, %80, %81 in 1 : vector<16x4xf32>, vector<16x4xf32>, vector<16x4xf32>, vector<16x4xf32> -> vector<16x16xf32>
    %83 = vector.extract_strided_slice %8 {offsets = [1, 0], sizes = [16, 4], strides = [1, 1]} : vector<18x4xf32> to vector<16x4xf32>
    %84 = vector.extract_strided_slice %8 {offsets = [2, 0], sizes = [16, 4], strides = [1, 1]} : vector<18x4xf32> to vector<16x4xf32>
    %85 = vector.extract_strided_slice %10 {offsets = [1, 0], sizes = [16, 4], strides = [1, 1]} : vector<18x4xf32> to vector<16x4xf32>
    %86 = vector.extract_strided_slice %10 {offsets = [2, 0], sizes = [16, 4], strides = [1, 1]} : vector<18x4xf32> to vector<16x4xf32>
    %87 = tpu.concatenate %83, %84, %85, %86 in 1 : vector<16x4xf32>, vector<16x4xf32>, vector<16x4xf32>, vector<16x4xf32> -> vector<16x16xf32>
    %88 = vector.extract_strided_slice %10 {offsets = [1, 0], sizes = [16, 4], strides = [1, 1]} : vector<18x4xf32> to vector<16x4xf32>
    %89 = vector.extract_strided_slice %10 {offsets = [2, 0], sizes = [16, 4], strides = [1, 1]} : vector<18x4xf32> to vector<16x4xf32>
    %90 = vector.extract_strided_slice %12 {offsets = [1, 0], sizes = [16, 4], strides = [1, 1]} : vector<18x4xf32> to vector<16x4xf32>
    %91 = vector.extract_strided_slice %12 {offsets = [2, 0], sizes = [16, 4], strides = [1, 1]} : vector<18x4xf32> to vector<16x4xf32>
    %92 = tpu.concatenate %88, %89, %90, %91 in 1 : vector<16x4xf32>, vector<16x4xf32>, vector<16x4xf32>, vector<16x4xf32> -> vector<16x16xf32>
    %93 = vector.extract_strided_slice %12 {offsets = [1, 0], sizes = [16, 4], strides = [1, 1]} : vector<18x4xf32> to vector<16x4xf32>
    %94 = vector.extract_strided_slice %12 {offsets = [2, 0], sizes = [16, 4], strides = [1, 1]} : vector<18x4xf32> to vector<16x4xf32>
    %95 = vector.extract_strided_slice %14 {offsets = [1, 0], sizes = [16, 4], strides = [1, 1]} : vector<18x4xf32> to vector<16x4xf32>
    %96 = vector.extract_strided_slice %14 {offsets = [2, 0], sizes = [16, 4], strides = [1, 1]} : vector<18x4xf32> to vector<16x4xf32>
    %97 = tpu.concatenate %93, %94, %95, %96 in 1 : vector<16x4xf32>, vector<16x4xf32>, vector<16x4xf32>, vector<16x4xf32> -> vector<16x16xf32>
    %98 = vector.extract_strided_slice %14 {offsets = [1, 0], sizes = [16, 4], strides = [1, 1]} : vector<18x4xf32> to vector<16x4xf32>
    %99 = vector.extract_strided_slice %14 {offsets = [2, 0], sizes = [16, 4], strides = [1, 1]} : vector<18x4xf32> to vector<16x4xf32>
    %100 = vector.extract_strided_slice %16 {offsets = [1, 0], sizes = [16, 4], strides = [1, 1]} : vector<18x4xf32> to vector<16x4xf32>
    %101 = vector.extract_strided_slice %16 {offsets = [2, 0], sizes = [16, 4], strides = [1, 1]} : vector<18x4xf32> to vector<16x4xf32>
    %102 = tpu.concatenate %98, %99, %100, %101 in 1 : vector<16x4xf32>, vector<16x4xf32>, vector<16x4xf32>, vector<16x4xf32> -> vector<16x16xf32>
    %103 = vector.extract_strided_slice %16 {offsets = [1, 0], sizes = [16, 4], strides = [1, 1]} : vector<18x4xf32> to vector<16x4xf32>
    %104 = vector.extract_strided_slice %16 {offsets = [2, 0], sizes = [16, 4], strides = [1, 1]} : vector<18x4xf32> to vector<16x4xf32>
    %105 = vector.extract_strided_slice %18 {offsets = [1, 0], sizes = [16, 4], strides = [1, 1]} : vector<18x4xf32> to vector<16x4xf32>
    %106 = vector.extract_strided_slice %18 {offsets = [2, 0], sizes = [16, 4], strides = [1, 1]} : vector<18x4xf32> to vector<16x4xf32>
    %107 = tpu.concatenate %103, %104, %105, %106 in 1 : vector<16x4xf32>, vector<16x4xf32>, vector<16x4xf32>, vector<16x4xf32> -> vector<16x16xf32>
    %108 = tpu.concatenate %72, %77, %82, %87, %92, %97, %102, %107 in 0 : vector<16x16xf32>, vector<16x16xf32>, vector<16x16xf32>, vector<16x16xf32>, vector<16x16xf32>, vector<16x16xf32>, vector<16x16xf32>, vector<16x16xf32> -> vector<128x16xf32>
    %c1_45 = arith.constant 1 : index
    %c0_46 = arith.constant 0 : index
    %c0_47 = arith.constant 0 : index
    %109 = vector.load %arg3[%c1_45, %c0_46, %c0_47] : memref<4x16x4xf32, #tpu.memory_space<vmem>>, vector<1x16x4xf32>
    %110 = vector.shape_cast %109 : vector<1x16x4xf32> to vector<16x4xf32>
    %cst_48 = arith.constant dense<0.000000e+00> : vector<128x4xf32>
    %111 = tpu.matmul %108, %110, %cst_48 {dimension_numbers = #tpu.dot_dimension_numbers<[1], [0], [0], [1], [0, 0, 1, 1], [], []>} : vector<128x16xf32>, vector<16x4xf32>, vector<128x4xf32> -> vector<128x4xf32>
    %112 = vector.broadcast %0 : vector<1x4xf32> to vector<128x4xf32>
    %113 = arith.addf %111, %112 : vector<128x4xf32>
    %114 = vector.shape_cast %113 : vector<128x4xf32> to vector<8x16x4xf32>
    %115 = vector.shape_cast %67 : vector<8x16x4xf32> to vector<8x16x1x4xf32>
    %116 = vector.shape_cast %114 : vector<8x16x4xf32> to vector<8x16x1x4xf32>
    %117 = tpu.concatenate %115, %116 in 2 : vector<8x16x1x4xf32>, vector<8x16x1x4xf32> -> vector<8x16x2x4xf32>
    %c0_49 = arith.constant 0 : index
    %c0_50 = arith.constant 0 : index
    %c0_51 = arith.constant 0 : index
    %c0_52 = arith.constant 0 : index
    %c0_53 = arith.constant 0 : index
    %c0_54 = arith.constant 0 : index
    %118 = vector.load %arg5[%c0_49, %c0_50, %c0_51, %c0_52, %c0_53, %c0_54] : memref<1x8x2x16x2x4xf32, #tpu.memory_space<vmem>>, vector<1x8x1x16x2x4xf32>
    %119 = vector.shape_cast %118 : vector<1x8x1x16x2x4xf32> to vector<8x16x2x4xf32>
    %120 = vector.shape_cast %117 : vector<8x16x2x4xf32> to vector<1x8x1x16x2x4xf32>
    tpu.vector_store %arg5[%c0_49, %c0_50, %c0_51, %c0_52, %c0_53, %c0_54], %120 {strides = array<i32>} : memref<1x8x2x16x2x4xf32, #tpu.memory_space<vmem>>, vector<1x8x1x16x2x4xf32>,
    %121 = vector.extract_strided_slice %4 {offsets = [0, 0], sizes = [16, 4], strides = [1, 1]} : vector<18x4xf32> to vector<16x4xf32>
    %122 = vector.extract_strided_slice %4 {offsets = [1, 0], sizes = [16, 4], strides = [1, 1]} : vector<18x4xf32> to vector<16x4xf32>
    %123 = vector.extract_strided_slice %6 {offsets = [0, 0], sizes = [16, 4], strides = [1, 1]} : vector<18x4xf32> to vector<16x4xf32>
    %124 = vector.extract_strided_slice %6 {offsets = [1, 0], sizes = [16, 4], strides = [1, 1]} : vector<18x4xf32> to vector<16x4xf32>
    %125 = tpu.concatenate %121, %122, %123, %124 in 1 : vector<16x4xf32>, vector<16x4xf32>, vector<16x4xf32>, vector<16x4xf32> -> vector<16x16xf32>
    %126 = vector.extract_strided_slice %6 {offsets = [0, 0], sizes = [16, 4], strides = [1, 1]} : vector<18x4xf32> to vector<16x4xf32>
    %127 = vector.extract_strided_slice %6 {offsets = [1, 0], sizes = [16, 4], strides = [1, 1]} : vector<18x4xf32> to vector<16x4xf32>
    %128 = vector.extract_strided_slice %8 {offsets = [0, 0], sizes = [16, 4], strides = [1, 1]} : vector<18x4xf32> to vector<16x4xf32>
    %129 = vector.extract_strided_slice %8 {offsets = [1, 0], sizes = [16, 4], strides = [1, 1]} : vector<18x4xf32> to vector<16x4xf32>
    %130 = tpu.concatenate %126, %127, %128, %129 in 1 : vector<16x4xf32>, vector<16x4xf32>, vector<16x4xf32>, vector<16x4xf32> -> vector<16x16xf32>
    %131 = vector.extract_strided_slice %8 {offsets = [0, 0], sizes = [16, 4], strides = [1, 1]} : vector<18x4xf32> to vector<16x4xf32>
    %132 = vector.extract_strided_slice %8 {offsets = [1, 0], sizes = [16, 4], strides = [1, 1]} : vector<18x4xf32> to vector<16x4xf32>
    %133 = vector.extract_strided_slice %10 {offsets = [0, 0], sizes = [16, 4], strides = [1, 1]} : vector<18x4xf32> to vector<16x4xf32>
    %134 = vector.extract_strided_slice %10 {offsets = [1, 0], sizes = [16, 4], strides = [1, 1]} : vector<18x4xf32> to vector<16x4xf32>
    %135 = tpu.concatenate %131, %132, %133, %134 in 1 : vector<16x4xf32>, vector<16x4xf32>, vector<16x4xf32>, vector<16x4xf32> -> vector<16x16xf32>
    %136 = vector.extract_strided_slice %10 {offsets = [0, 0], sizes = [16, 4], strides = [1, 1]} : vector<18x4xf32> to vector<16x4xf32>
    %137 = vector.extract_strided_slice %10 {offsets = [1, 0], sizes = [16, 4], strides = [1, 1]} : vector<18x4xf32> to vector<16x4xf32>
    %138 = vector.extract_strided_slice %12 {offsets = [0, 0], sizes = [16, 4], strides = [1, 1]} : vector<18x4xf32> to vector<16x4xf32>
    %139 = vector.extract_strided_slice %12 {offsets = [1, 0], sizes = [16, 4], strides = [1, 1]} : vector<18x4xf32> to vector<16x4xf32>
    %140 = tpu.concatenate %136, %137, %138, %139 in 1 : vector<16x4xf32>, vector<16x4xf32>, vector<16x4xf32>, vector<16x4xf32> -> vector<16x16xf32>
    %141 = vector.extract_strided_slice %12 {offsets = [0, 0], sizes = [16, 4], strides = [1, 1]} : vector<18x4xf32> to vector<16x4xf32>
    %142 = vector.extract_strided_slice %12 {offsets = [1, 0], sizes = [16, 4], strides = [1, 1]} : vector<18x4xf32> to vector<16x4xf32>
    %143 = vector.extract_strided_slice %14 {offsets = [0, 0], sizes = [16, 4], strides = [1, 1]} : vector<18x4xf32> to vector<16x4xf32>
    %144 = vector.extract_strided_slice %14 {offsets = [1, 0], sizes = [16, 4], strides = [1, 1]} : vector<18x4xf32> to vector<16x4xf32>
    %145 = tpu.concatenate %141, %142, %143, %144 in 1 : vector<16x4xf32>, vector<16x4xf32>, vector<16x4xf32>, vector<16x4xf32> -> vector<16x16xf32>
    %146 = vector.extract_strided_slice %14 {offsets = [0, 0], sizes = [16, 4], strides = [1, 1]} : vector<18x4xf32> to vector<16x4xf32>
    %147 = vector.extract_strided_slice %14 {offsets = [1, 0], sizes = [16, 4], strides = [1, 1]} : vector<18x4xf32> to vector<16x4xf32>
    %148 = vector.extract_strided_slice %16 {offsets = [0, 0], sizes = [16, 4], strides = [1, 1]} : vector<18x4xf32> to vector<16x4xf32>
    %149 = vector.extract_strided_slice %16 {offsets = [1, 0], sizes = [16, 4], strides = [1, 1]} : vector<18x4xf32> to vector<16x4xf32>
    %150 = tpu.concatenate %146, %147, %148, %149 in 1 : vector<16x4xf32>, vector<16x4xf32>, vector<16x4xf32>, vector<16x4xf32> -> vector<16x16xf32>
    %151 = vector.extract_strided_slice %16 {offsets = [0, 0], sizes = [16, 4], strides = [1, 1]} : vector<18x4xf32> to vector<16x4xf32>
    %152 = vector.extract_strided_slice %16 {offsets = [1, 0], sizes = [16, 4], strides = [1, 1]} : vector<18x4xf32> to vector<16x4xf32>
    %153 = vector.extract_strided_slice %18 {offsets = [0, 0], sizes = [16, 4], strides = [1, 1]} : vector<18x4xf32> to vector<16x4xf32>
    %154 = vector.extract_strided_slice %18 {offsets = [1, 0], sizes = [16, 4], strides = [1, 1]} : vector<18x4xf32> to vector<16x4xf32>
    %155 = tpu.concatenate %151, %152, %153, %154 in 1 : vector<16x4xf32>, vector<16x4xf32>, vector<16x4xf32>, vector<16x4xf32> -> vector<16x16xf32>
    %156 = vector.extract_strided_slice %18 {offsets = [0, 0], sizes = [16, 4], strides = [1, 1]} : vector<18x4xf32> to vector<16x4xf32>
    %157 = vector.extract_strided_slice %18 {offsets = [1, 0], sizes = [16, 4], strides = [1, 1]} : vector<18x4xf32> to vector<16x4xf32>
    %158 = vector.extract_strided_slice %20 {offsets = [0, 0], sizes = [16, 4], strides = [1, 1]} : vector<18x4xf32> to vector<16x4xf32>
    %159 = vector.extract_strided_slice %20 {offsets = [1, 0], sizes = [16, 4], strides = [1, 1]} : vector<18x4xf32> to vector<16x4xf32>
    %160 = tpu.concatenate %156, %157, %158, %159 in 1 : vector<16x4xf32>, vector<16x4xf32>, vector<16x4xf32>, vector<16x4xf32> -> vector<16x16xf32>
    %161 = tpu.concatenate %125, %130, %135, %140, %145, %150, %155, %160 in 0 : vector<16x16xf32>, vector<16x16xf32>, vector<16x16xf32>, vector<16x16xf32>, vector<16x16xf32>, vector<16x16xf32>, vector<16x16xf32>, vector<16x16xf32> -> vector<128x16xf32>
    %c2_55 = arith.constant 2 : index
    %c0_56 = arith.constant 0 : index
    %c0_57 = arith.constant 0 : index
    %162 = vector.load %arg3[%c2_55, %c0_56, %c0_57] : memref<4x16x4xf32, #tpu.memory_space<vmem>>, vector<1x16x4xf32>
    %163 = vector.shape_cast %162 : vector<1x16x4xf32> to vector<16x4xf32>
    %cst_58 = arith.constant dense<0.000000e+00> : vector<128x4xf32>
    %164 = tpu.matmul %161, %163, %cst_58 {dimension_numbers = #tpu.dot_dimension_numbers<[1], [0], [0], [1], [0, 0, 1, 1], [], []>} : vector<128x16xf32>, vector<16x4xf32>, vector<128x4xf32> -> vector<128x4xf32>
    %165 = vector.broadcast %0 : vector<1x4xf32> to vector<128x4xf32>
    %166 = arith.addf %164, %165 : vector<128x4xf32>
    %167 = vector.shape_cast %166 : vector<128x4xf32> to vector<8x16x4xf32>
    %168 = vector.extract_strided_slice %4 {offsets = [1, 0], sizes = [16, 4], strides = [1, 1]} : vector<18x4xf32> to vector<16x4xf32>
    %169 = vector.extract_strided_slice %4 {offsets = [2, 0], sizes = [16, 4], strides = [1, 1]} : vector<18x4xf32> to vector<16x4xf32>
    %170 = vector.extract_strided_slice %6 {offsets = [1, 0], sizes = [16, 4], strides = [1, 1]} : vector<18x4xf32> to vector<16x4xf32>
    %171 = vector.extract_strided_slice %6 {offsets = [2, 0], sizes = [16, 4], strides = [1, 1]} : vector<18x4xf32> to vector<16x4xf32>
    %172 = tpu.concatenate %168, %169, %170, %171 in 1 : vector<16x4xf32>, vector<16x4xf32>, vector<16x4xf32>, vector<16x4xf32> -> vector<16x16xf32>
    %173 = vector.extract_strided_slice %6 {offsets = [1, 0], sizes = [16, 4], strides = [1, 1]} : vector<18x4xf32> to vector<16x4xf32>
    %174 = vector.extract_strided_slice %6 {offsets = [2, 0], sizes = [16, 4], strides = [1, 1]} : vector<18x4xf32> to vector<16x4xf32>
    %175 = vector.extract_strided_slice %8 {offsets = [1, 0], sizes = [16, 4], strides = [1, 1]} : vector<18x4xf32> to vector<16x4xf32>
    %176 = vector.extract_strided_slice %8 {offsets = [2, 0], sizes = [16, 4], strides = [1, 1]} : vector<18x4xf32> to vector<16x4xf32>
    %177 = tpu.concatenate %173, %174, %175, %176 in 1 : vector<16x4xf32>, vector<16x4xf32>, vector<16x4xf32>, vector<16x4xf32> -> vector<16x16xf32>
    %178 = vector.extract_strided_slice %8 {offsets = [1, 0], sizes = [16, 4], strides = [1, 1]} : vector<18x4xf32> to vector<16x4xf32>
    %179 = vector.extract_strided_slice %8 {offsets = [2, 0], sizes = [16, 4], strides = [1, 1]} : vector<18x4xf32> to vector<16x4xf32>
    %180 = vector.extract_strided_slice %10 {offsets = [1, 0], sizes = [16, 4], strides = [1, 1]} : vector<18x4xf32> to vector<16x4xf32>
    %181 = vector.extract_strided_slice %10 {offsets = [2, 0], sizes = [16, 4], strides = [1, 1]} : vector<18x4xf32> to vector<16x4xf32>
    %182 = tpu.concatenate %178, %179, %180, %181 in 1 : vector<16x4xf32>, vector<16x4xf32>, vector<16x4xf32>, vector<16x4xf32> -> vector<16x16xf32>
    %183 = vector.extract_strided_slice %10 {offsets = [1, 0], sizes = [16, 4], strides = [1, 1]} : vector<18x4xf32> to vector<16x4xf32>
    %184 = vector.extract_strided_slice %10 {offsets = [2, 0], sizes = [16, 4], strides = [1, 1]} : vector<18x4xf32> to vector<16x4xf32>
    %185 = vector.extract_strided_slice %12 {offsets = [1, 0], sizes = [16, 4], strides = [1, 1]} : vector<18x4xf32> to vector<16x4xf32>
    %186 = vector.extract_strided_slice %12 {offsets = [2, 0], sizes = [16, 4], strides = [1, 1]} : vector<18x4xf32> to vector<16x4xf32>
    %187 = tpu.concatenate %183, %184, %185, %186 in 1 : vector<16x4xf32>, vector<16x4xf32>, vector<16x4xf32>, vector<16x4xf32> -> vector<16x16xf32>
    %188 = vector.extract_strided_slice %12 {offsets = [1, 0], sizes = [16, 4], strides = [1, 1]} : vector<18x4xf32> to vector<16x4xf32>
    %189 = vector.extract_strided_slice %12 {offsets = [2, 0], sizes = [16, 4], strides = [1, 1]} : vector<18x4xf32> to vector<16x4xf32>
    %190 = vector.extract_strided_slice %14 {offsets = [1, 0], sizes = [16, 4], strides = [1, 1]} : vector<18x4xf32> to vector<16x4xf32>
    %191 = vector.extract_strided_slice %14 {offsets = [2, 0], sizes = [16, 4], strides = [1, 1]} : vector<18x4xf32> to vector<16x4xf32>
    %192 = tpu.concatenate %188, %189, %190, %191 in 1 : vector<16x4xf32>, vector<16x4xf32>, vector<16x4xf32>, vector<16x4xf32> -> vector<16x16xf32>
    %193 = vector.extract_strided_slice %14 {offsets = [1, 0], sizes = [16, 4], strides = [1, 1]} : vector<18x4xf32> to vector<16x4xf32>
    %194 = vector.extract_strided_slice %14 {offsets = [2, 0], sizes = [16, 4], strides = [1, 1]} : vector<18x4xf32> to vector<16x4xf32>
    %195 = vector.extract_strided_slice %16 {offsets = [1, 0], sizes = [16, 4], strides = [1, 1]} : vector<18x4xf32> to vector<16x4xf32>
    %196 = vector.extract_strided_slice %16 {offsets = [2, 0], sizes = [16, 4], strides = [1, 1]} : vector<18x4xf32> to vector<16x4xf32>
    %197 = tpu.concatenate %193, %194, %195, %196 in 1 : vector<16x4xf32>, vector<16x4xf32>, vector<16x4xf32>, vector<16x4xf32> -> vector<16x16xf32>
    %198 = vector.extract_strided_slice %16 {offsets = [1, 0], sizes = [16, 4], strides = [1, 1]} : vector<18x4xf32> to vector<16x4xf32>
    %199 = vector.extract_strided_slice %16 {offsets = [2, 0], sizes = [16, 4], strides = [1, 1]} : vector<18x4xf32> to vector<16x4xf32>
    %200 = vector.extract_strided_slice %18 {offsets = [1, 0], sizes = [16, 4], strides = [1, 1]} : vector<18x4xf32> to vector<16x4xf32>
    %201 = vector.extract_strided_slice %18 {offsets = [2, 0], sizes = [16, 4], strides = [1, 1]} : vector<18x4xf32> to vector<16x4xf32>
    %202 = tpu.concatenate %198, %199, %200, %201 in 1 : vector<16x4xf32>, vector<16x4xf32>, vector<16x4xf32>, vector<16x4xf32> -> vector<16x16xf32>
    %203 = vector.extract_strided_slice %18 {offsets = [1, 0], sizes = [16, 4], strides = [1, 1]} : vector<18x4xf32> to vector<16x4xf32>
    %204 = vector.extract_strided_slice %18 {offsets = [2, 0], sizes = [16, 4], strides = [1, 1]} : vector<18x4xf32> to vector<16x4xf32>
    %205 = vector.extract_strided_slice %20 {offsets = [1, 0], sizes = [16, 4], strides = [1, 1]} : vector<18x4xf32> to vector<16x4xf32>
    %206 = vector.extract_strided_slice %20 {offsets = [2, 0], sizes = [16, 4], strides = [1, 1]} : vector<18x4xf32> to vector<16x4xf32>
    %207 = tpu.concatenate %203, %204, %205, %206 in 1 : vector<16x4xf32>, vector<16x4xf32>, vector<16x4xf32>, vector<16x4xf32> -> vector<16x16xf32>
    %208 = tpu.concatenate %172, %177, %182, %187, %192, %197, %202, %207 in 0 : vector<16x16xf32>, vector<16x16xf32>, vector<16x16xf32>, vector<16x16xf32>, vector<16x16xf32>, vector<16x16xf32>, vector<16x16xf32>, vector<16x16xf32> -> vector<128x16xf32>
    %c3_59 = arith.constant 3 : index
    %c0_60 = arith.constant 0 : index
    %c0_61 = arith.constant 0 : index
    %209 = vector.load %arg3[%c3_59, %c0_60, %c0_61] : memref<4x16x4xf32, #tpu.memory_space<vmem>>, vector<1x16x4xf32>
    %210 = vector.shape_cast %209 : vector<1x16x4xf32> to vector<16x4xf32>
    %cst_62 = arith.constant dense<0.000000e+00> : vector<128x4xf32>
    %211 = tpu.matmul %208, %210, %cst_62 {dimension_numbers = #tpu.dot_dimension_numbers<[1], [0], [0], [1], [0, 0, 1, 1], [], []>} : vector<128x16xf32>, vector<16x4xf32>, vector<128x4xf32> -> vector<128x4xf32>
    %212 = vector.broadcast %0 : vector<1x4xf32> to vector<128x4xf32>
    %213 = arith.addf %211, %212 : vector<128x4xf32>
    %214 = vector.shape_cast %213 : vector<128x4xf32> to vector<8x16x4xf32>
    %215 = vector.shape_cast %167 : vector<8x16x4xf32> to vector<8x16x1x4xf32>
    %216 = vector.shape_cast %214 : vector<8x16x4xf32> to vector<8x16x1x4xf32>
    %217 = tpu.concatenate %215, %216 in 2 : vector<8x16x1x4xf32>, vector<8x16x1x4xf32> -> vector<8x16x2x4xf32>
    %c0_63 = arith.constant 0 : index
    %c0_64 = arith.constant 0 : index
    %c1_65 = arith.constant 1 : index
    %c0_66 = arith.constant 0 : index
    %c0_67 = arith.constant 0 : index
    %c0_68 = arith.constant 0 : index
    %218 = vector.load %arg5[%c0_63, %c0_64, %c1_65, %c0_66, %c0_67, %c0_68] : memref<1x8x2x16x2x4xf32, #tpu.memory_space<vmem>>, vector<1x8x1x16x2x4xf32>
    %219 = vector.shape_cast %218 : vector<1x8x1x16x2x4xf32> to vector<8x16x2x4xf32>
    %220 = vector.shape_cast %217 : vector<8x16x2x4xf32> to vector<1x8x1x16x2x4xf32>
    tpu.vector_store %arg5[%c0_63, %c0_64, %c1_65, %c0_66, %c0_67, %c0_68], %220 {strides = array<i32>} : memref<1x8x2x16x2x4xf32, #tpu.memory_space<vmem>>, vector<1x8x1x16x2x4xf32>,
    return
  }
  func.func @transform_0(%arg0: i32, %arg1: i32) -> (i32, i32, i32, i32, i32) {
    %c0_i32 = arith.constant 0 : i32
    %c0_i32_0 = arith.constant 0 : i32
    %c0_i32_1 = arith.constant 0 : i32
    %c0_i32_2 = arith.constant 0 : i32
    return %arg0, %arg1, %c0_i32, %c0_i32_0, %c0_i32_1 : i32, i32, i32, i32, i32
  }
  func.func @transform_1(%arg0: i32, %arg1: i32) -> (i32, i32, i32) {
    %c0_i32 = arith.constant 0 : i32
    %c0_i32_0 = arith.constant 0 : i32
    %c0_i32_1 = arith.constant 0 : i32
    %c0_i32_2 = arith.constant 0 : i32
    return %c0_i32, %c0_i32_0, %c0_i32_1 : i32, i32, i32
  }
  func.func @transform_2(%arg0: i32, %arg1: i32) -> (i32, i32) {
    %c0_i32 = arith.constant 0 : i32
    %c0_i32_0 = arith.constant 0 : i32
    %c0_i32_1 = arith.constant 0 : i32
    return %c0_i32, %c0_i32_0 : i32, i32
  }
  func.func @transform_3(%arg0: i32, %arg1: i32) -> (i32, i32, i32, i32, i32, i32) {
    %c0_i32 = arith.constant 0 : i32
    %c0_i32_0 = arith.constant 0 : i32
    %c0_i32_1 = arith.constant 0 : i32
    %c0_i32_2 = arith.constant 0 : i32
    %c0_i32_3 = arith.constant 0 : i32
    return %arg0, %arg1, %c0_i32, %c0_i32_0, %c0_i32_1, %c0_i32_2 : i32, i32, i32, i32, i32, i32
  }
}

</mosaic_0001>

<llo_original>
// kernel: tpu_custom_call.1
$region0: #{tpu_custom_call.1}
  #allocation0 [shape = 'u32[]', space=smem, size = 0x4, offset = 0x4, fixed_abs, tag = 'smem constant byte address 0x4 - core index']
  #allocation1 [shape = 'u32[144,128]{1,0:T(1,128)}', space=vmem, size = 0x12000, scoped, tag = 'internal scratch']
  %s0 = inlined_call_operand.vmem [shape: f32[2,2,10,18,4], index: 0, kind: input, shape index: {}]
  %s1 = inlined_call_operand.vmem [shape: f32[4,16,4], index: 1, kind: input, shape index: {}]
  %s2 = inlined_call_operand.vmem [shape: f32[1,4], index: 2, kind: input, shape index: {}]
  %s3 = inlined_call_operand.vmem [shape: f32[2,16,2,16,2,4], index: 3, kind: output, shape index: {}]
  %s4 = sld [smem:[#allocation0]]
  $region45: #{tpu_custom_call.1} parent=0
    _
  %s6 = ssub.s32 1, %s4
  %s7 = scalar_select 0, %s6, %s4
  loop: start=0, step=1, limit=6
  $region2: #{tpu_custom_call.1} parent=0 // loop_pre_header
    _
  $region3: #{tpu_custom_call.1} parent=0 // loop_header
    %s9 = sphi 0, %s13
    %p10 = scmp.ge.s32.totalorder %s9, 6
    %s16 = sphi 0, %s28
    %s17 = sphi 0, %s24
    %s18 = sphi 0, %s16
    %s19 = sphi 0, %s17
    %s20 = sphi 0, %s18
    %s21 = sphi 0, %s19
    %s33 = sphi 0, %s35
    %s36 = sphi 0, %s33
    %s37 = sphi 0, %s36
    %s53 = sphi 0, %s37
    %s57 = sphi 0, %s57
    %s59 = sphi 0, %s57
    %s60 = sphi 0, %s59
    %s74 = sphi 0, %s60
    %s78 = sphi 0, %s78
    %s80 = sphi 0, %s78
    %s81 = sphi 0, %s80
    %s95 = sphi 0, %s81
    %s103 = sphi 0, %s105
    %s106 = sphi 0, %s103
    %s107 = sphi 0, %s106
    %s123 = sphi 0, %s107
  $region4: #{tpu_custom_call.1} parent=0 // loop_header_branch
    %12 = sbr.rel (%p10) target = $region8
  $region5: #{tpu_custom_call.1} parent=0 // loop_body
    %s14 = ssub.s32 %s9, 1
    %s15 = ssub.s32 %s9, 2
    %s22 = sadd.s32 1, %s17
    %p23 = scmp.ge.s32.totalorder %s22, 2
    %s24 = scalar_select %p23, 0, %s22
    %s25 = sadd.s32 1, %s16
    %s26 = scalar_select %p23, %s25, %s16
    %p27 = scmp.ge.s32.totalorder %s26, 2
    %s28 = scalar_select %p27, 0, %s26
    %s29 = ssub.s32 %s16, %s28
    %s30 = ssub.s32 %s17, %s24
    %s31 = sor.u32 %s29, %s30
    %p32 = scmp.eq.s32.totalorder %s31, 0
    %s34 = sadd.s32 %s33, 1
    %s35 = scalar_select %p32, %s33, %s34
    %p38 = pneg %p32
    %p39 = scmp.eq.s32.totalorder %s9, 3
    %p40 = por %p38, %p39
    %p41 = scmp.ne.s32.totalorder %s33, %s36
    %p42 = scmp.eq.s32.totalorder %s9, 0
    %p43 = por %p41, %p42
    %p44 = scmp.ne.s32.totalorder %s33, %s36
    %p45 = scmp.eq.s32.totalorder %s14, 3
    %p46 = por %p44, %p45
    %p47 = scmp.ne.s32.totalorder %s36, %s37
    %p48 = scmp.eq.s32.totalorder %s14, 0
    %p49 = por %p47, %p48
    %p50 = scmp.ne.s32.totalorder %s36, %s37
    %p51 = scmp.eq.s32.totalorder %s15, 3
    %p52 = por %p50, %p51
    %p54 = scmp.ne.s32.totalorder %s37, %s53
    %p55 = scmp.eq.s32.totalorder %s15, 0
    %p56 = por %p54, %p55
    %s58 = sadd.s32 %s57, 1
    %p61 = scmp.eq.s32.totalorder %s9, 3
    %p62 = scmp.ne.s32.totalorder %s57, %s59
    %p63 = scmp.eq.s32.totalorder %s9, 0
    %p64 = por %p62, %p63
    %p65 = scmp.ne.s32.totalorder %s57, %s59
    %p66 = scmp.eq.s32.totalorder %s14, 3
    %p67 = por %p65, %p66
    %p68 = scmp.ne.s32.totalorder %s59, %s60
    %p69 = scmp.eq.s32.totalorder %s14, 0
    %p70 = por %p68, %p69
    %p71 = scmp.ne.s32.totalorder %s59, %s60
    %p72 = scmp.eq.s32.totalorder %s15, 3
    %p73 = por %p71, %p72
    %p75 = scmp.ne.s32.totalorder %s60, %s74
    %p76 = scmp.eq.s32.totalorder %s15, 0
    %p77 = por %p75, %p76
    %s79 = sadd.s32 %s78, 1
    %p82 = scmp.eq.s32.totalorder %s9, 3
    %p83 = scmp.ne.s32.totalorder %s78, %s80
    %p84 = scmp.eq.s32.totalorder %s9, 0
    %p85 = por %p83, %p84
    %p86 = scmp.ne.s32.totalorder %s78, %s80
    %p87 = scmp.eq.s32.totalorder %s14, 3
    %p88 = por %p86, %p87
    %p89 = scmp.ne.s32.totalorder %s80, %s81
    %p90 = scmp.eq.s32.totalorder %s14, 0
    %p91 = por %p89, %p90
    %p92 = scmp.ne.s32.totalorder %s80, %s81
    %p93 = scmp.eq.s32.totalorder %s15, 3
    %p94 = por %p92, %p93
    %p96 = scmp.ne.s32.totalorder %s81, %s95
    %p97 = scmp.eq.s32.totalorder %s15, 0
    %p98 = por %p96, %p97
    %s99 = ssub.s32 %s16, %s28
    %s100 = ssub.s32 %s17, %s24
    %s101 = sor.u32 %s99, %s100
    %p102 = scmp.eq.s32.totalorder %s101, 0
    %s104 = sadd.s32 %s103, 1
    %s105 = scalar_select %p102, %s103, %s104
    %p108 = pneg %p102
    %p109 = scmp.eq.s32.totalorder %s9, 3
    %p110 = por %p108, %p109
    %p111 = scmp.ne.s32.totalorder %s103, %s106
    %p112 = scmp.eq.s32.totalorder %s9, 0
    %p113 = por %p111, %p112
    %p114 = scmp.ne.s32.totalorder %s103, %s106
    %p115 = scmp.eq.s32.totalorder %s14, 3
    %p116 = por %p114, %p115
    %p117 = scmp.ne.s32.totalorder %s106, %s107
    %p118 = scmp.eq.s32.totalorder %s14, 0
    %p119 = por %p117, %p118
    %p120 = scmp.ne.s32.totalorder %s106, %s107
    %p121 = scmp.eq.s32.totalorder %s15, 3
    %p122 = por %p120, %p121
    %p124 = scmp.ne.s32.totalorder %s107, %s123
    %p125 = scmp.eq.s32.totalorder %s15, 0
    %p126 = por %p124, %p125
    %p127 = scmp.le.s32.totalorder 1, %s9
    %p128 = scmp.lt.s32.totalorder %s9, 5
    %p129 = pnand %p127, %p128
    %p130 = pneg %p129
    // Predicated region
    $region9: #{tpu_custom_call.1} parent=5 // pred_check
      _
    $region10: #{tpu_custom_call.1} parent=5 // pred_check_branch
      %132 = sbr.rel (%p129) target = $region12
    $region11: #{tpu_custom_call.1} parent=5 // pred_region
      %s133 = ssub.s32 %s9, 1
      // Predicated region
      $region13: #{tpu_custom_call.1} parent=11 // pred_check
        %p134 = pneg %p70
      $region14: #{tpu_custom_call.1} parent=11 // pred_check_branch
        %136 = sbr.rel (%p134) target = $region16
      $region15: #{tpu_custom_call.1} parent=11 // pred_region
        _
      $region16: #{tpu_custom_call.1} parent=11 // pred_fallthru
        _
      // Predicated region
      $region17: #{tpu_custom_call.1} parent=11 // pred_check
        %p137 = pneg %p91
      $region18: #{tpu_custom_call.1} parent=11 // pred_check_branch
        %139 = sbr.rel (%p137) target = $region20
      $region19: #{tpu_custom_call.1} parent=11 // pred_region
        _
      $region20: #{tpu_custom_call.1} parent=11 // pred_fallthru
        _
    $region12: #{tpu_custom_call.1} parent=5 // pred_fallthru
      _
    %p140 = scmp.lt.s32.totalorder %s9, 4
    // Predicated region
    $region21: #{tpu_custom_call.1} parent=5 // pred_check
      %p141 = pneg %p140
    $region22: #{tpu_custom_call.1} parent=5 // pred_check_branch
      %143 = sbr.rel (%p141) target = $region24
    $region23: #{tpu_custom_call.1} parent=5 // pred_region
      // Predicated region
      $region25: #{tpu_custom_call.1} parent=23 // pred_check
        %p144 = pneg %p43
      $region26: #{tpu_custom_call.1} parent=23 // pred_check_branch
        %146 = sbr.rel (%p144) target = $region28
      $region27: #{tpu_custom_call.1} parent=23 // pred_region
        %p147 = scmp.lt.s32.totalorder %s16, 1
        %s148 = scalar_select %p147, %s16, 1
        %p149 = scmp.lt.s32.totalorder %s17, 1
        %s150 = scalar_select %p149, %s17, 1
        %s151 = smul.addr %s150, 30
        %s152 = smul.addr %s148, 60
        %s153 = sadd.s32 %s151, %s152
        %s154 = smul.addr %s153, 8
        %s155 = scalar_lea.vmem %s0, %s154
      $region28: #{tpu_custom_call.1} parent=23 // pred_fallthru
        _
    $region24: #{tpu_custom_call.1} parent=5 // pred_fallthru
      _
    %p156 = scmp.le.s32.totalorder 1, %s9
    %p157 = scmp.lt.s32.totalorder %s9, 5
    %p158 = pnand %p156, %p157
    %p159 = pneg %p158
    // Predicated region
    $region29: #{tpu_custom_call.1} parent=5 // pred_check
      _
    $region30: #{tpu_custom_call.1} parent=5 // pred_check_branch
      %161 = sbr.rel (%p158) target = $region32
    $region31: #{tpu_custom_call.1} parent=5 // pred_region
      %s162 = ssub.s32 %s9, 1
      %p163 = scmp.lt.s32.totalorder %s18, 1
      %s164 = scalar_select %p163, %s18, 1
      %p165 = scmp.lt.s32.totalorder %s19, 1
      %s166 = scalar_select %p165, %s19, 1
      %s167 = smul.addr %s166, 30
      %s168 = smul.addr %s164, 60
      %s169 = sadd.s32 %s167, %s168
      %s170 = smul.addr %s169, 8
      %s171 = scalar_lea.vmem %s0, %s170
      %p172 = pneg %p49
      %p173 = pneg %p46
      %p174 = pneg %p70
      %p175 = pneg %p67
      %p176 = pneg %p91
      %p177 = pneg %p88
      %p178 = pneg %p119
      %p179 = pneg %p116
      %s180 = smul.u32 8, %s19
      %p181 = scmp.lt.s32.totalorder %s18, 1
      %s182 = scalar_select %p181, %s18, 1
      %p183 = scmp.lt.s32.totalorder %s180, 15
      %s184 = scalar_select %p183, %s180, 15
      %s185 = smul.addr %s184, 32
      %s186 = smul.addr %s182, 512
      %s187 = sadd.s32 %s185, %s186
      %s188 = smul.addr %s187, 2
      %s189 = scalar_lea.vmem %s3, %s188
      %p190 = scmp.lt.s32.totalorder %s18, 1
      %s191 = scalar_select %p190, %s18, 1
      %p192 = scmp.lt.s32.totalorder %s19, 1
      %s193 = scalar_select %p192, %s19, 1
      %s194 = smul.addr %s193, 30
      %s195 = smul.addr %s191, 60
      %s196 = sadd.s32 %s194, %s195
      %s197 = smul.addr %s196, 8
      %s198 = scalar_lea.vmem %s0, %s197
      %s199 = smul.u32 8, %s19
      %p200 = scmp.lt.s32.totalorder %s18, 1
      %s201 = scalar_select %p200, %s18, 1
      %p202 = scmp.lt.s32.totalorder %s199, 15
      %s203 = scalar_select %p202, %s199, 15
      %s204 = smul.addr %s203, 32
      %s205 = smul.addr %s201, 512
      %s206 = sadd.s32 %s204, %s205
      %s207 = smul.addr %s206, 2
      %s208 = scalar_lea.vmem %s3, %s207
      %s209 = smul.u32 8, %s19
      %v210 = vld [vmem:[%s2] sm:$0x1]
      %v211 = vld [vmem:[%s198] sm:$0xff]
      %v212 = vld [vmem:[%s198 + $0x8] sm:$0xff]
      %v213 = vld [vmem:[%s198 + $0x10] sm:$0x3]
      %s214 = scalar_lea.vmem %s198, 24
      %v215 = vld [vmem:[%s214] sm:$0xff]
      %v216 = vld [vmem:[%s214 + $0x8] sm:$0xff]
      %v217 = vld [vmem:[%s214 + $0x10] sm:$0x3]
      %s218 = scalar_lea.vmem %s198, 48
      %v219 = vld [vmem:[%s218] sm:$0xff]
      %v220 = vld [vmem:[%s218 + $0x8] sm:$0xff]
      %v221 = vld [vmem:[%s218 + $0x10] sm:$0x3]
      %s222 = scalar_lea.vmem %s198, 72
      %v223 = vld [vmem:[%s222] sm:$0xff]
      %v224 = vld [vmem:[%s222 + $0x8] sm:$0xff]
      %v225 = vld [vmem:[%s222 + $0x10] sm:$0x3]
      %s226 = scalar_lea.vmem %s198, 96
      %v227 = vld [vmem:[%s226] sm:$0xff]
      %v228 = vld [vmem:[%s226 + $0x8] sm:$0xff]
      %v229 = vld [vmem:[%s226 + $0x10] sm:$0x3]
      %s230 = scalar_lea.vmem %s198, 120
      %v231 = vld [vmem:[%s230] sm:$0xff]
      %v232 = vld [vmem:[%s230 + $0x8] sm:$0xff]
      %v233 = vld [vmem:[%s230 + $0x10] sm:$0x3]
      %s234 = scalar_lea.vmem %s198, 144
      %v235 = vld [vmem:[%s234] sm:$0xff]
      %v236 = vld [vmem:[%s234 + $0x8] sm:$0xff]
      %v237 = vld [vmem:[%s234 + $0x10] sm:$0x3]
      %s238 = scalar_lea.vmem %s198, 168
      %v239 = vld [vmem:[%s238] sm:$0xff]
      %v240 = vld [vmem:[%s238 + $0x8] sm:$0xff]
      %v241 = vld [vmem:[%s238 + $0x10] sm:$0x3]
      %s242 = scalar_lea.vmem %s198, 192
      %v243 = vld [vmem:[%s242] sm:$0xff]
      %v244 = vld [vmem:[%s242 + $0x8] sm:$0xff]
      %v245 = vld [vmem:[%s242 + $0x10] sm:$0x3]
      %s246 = scalar_lea.vmem %s198, 216
      %v247 = vld [vmem:[%s246] sm:$0xff]
      %v248 = vld [vmem:[%s246 + $0x8] sm:$0xff]
      %v249 = vld [vmem:[%s246 + $0x10] sm:$0x3]
      %vm253 = vcmask 1046528
      %v254 = vrot.slane %v211, 1
      %v255 = vrot.slane %v212, 1
      %v256 = vsel %vm253, %v254, %v255
      %v257 = vrot.slane %v213, 1
      %v258 = vsel %vm253, %v255, %v257
      %259 = vrot.lane.b32.xlu0 %v256, 4
      %v260 = vpop.permute.xlu0 %259
      %261 = vrot.lane.b32.xlu0 %v258, 4
      %v262 = vpop.permute.xlu0 %261
      %267 = vrot.lane.b32.xlu0 %v215, 8
      %v268 = vpop.permute.xlu0 %267
      %269 = vrot.lane.b32.xlu0 %v216, 8
      %v270 = vpop.permute.xlu0 %269
      %v274 = vrot.slane %v215, 1
      %v275 = vrot.slane %v216, 1
      %v276 = vsel %vm253, %v274, %v275
      %v277 = vrot.slane %v217, 1
      %v278 = vsel %vm253, %v275, %v277
      %279 = vrot.lane.b32.xlu0 %v276, 12
      %v280 = vpop.permute.xlu0 %279
      %281 = vrot.lane.b32.xlu0 %v278, 12
      %v282 = vpop.permute.xlu0 %281
      %vm285 = vcmask 31744
      %v286 = vsel %vm285, %v211, %v260
      %v287 = vsel %vm285, %v212, %v262
      %vm288 = vcmask 64512
      %v289 = vsel %vm288, %v286, %v268
      %v290 = vsel %vm288, %v287, %v270
      %vm291 = vcmask 97280
      %v292 = vsel %vm291, %v289, %v280
      %v293 = vsel %vm291, %v290, %v282
      %294 = vrot.lane.b32.xlu0 %v276, 4
      %v295 = vpop.permute.xlu0 %294
      %296 = vrot.lane.b32.xlu0 %v278, 4
      %v297 = vpop.permute.xlu0 %296
      %302 = vrot.lane.b32.xlu0 %v219, 8
      %v303 = vpop.permute.xlu0 %302
      %304 = vrot.lane.b32.xlu0 %v220, 8
      %v305 = vpop.permute.xlu0 %304
      %v309 = vrot.slane %v219, 1
      %v310 = vrot.slane %v220, 1
      %v311 = vsel %vm253, %v309, %v310
      %v312 = vrot.slane %v221, 1
      %v313 = vsel %vm253, %v310, %v312
      %314 = vrot.lane.b32.xlu0 %v311, 12
      %v315 = vpop.permute.xlu0 %314
      %316 = vrot.lane.b32.xlu0 %v313, 12
      %v317 = vpop.permute.xlu0 %316
      %v320 = vsel %vm285, %v215, %v295
      %v321 = vsel %vm285, %v216, %v297
      %v322 = vsel %vm288, %v320, %v303
      %v323 = vsel %vm288, %v321, %v305
      %v324 = vsel %vm291, %v322, %v315
      %v325 = vsel %vm291, %v323, %v317
      %326 = vrot.lane.b32.xlu0 %v311, 4
      %v327 = vpop.permute.xlu0 %326
      %328 = vrot.lane.b32.xlu0 %v313, 4
      %v329 = vpop.permute.xlu0 %328
      %334 = vrot.lane.b32.xlu0 %v223, 8
      %v335 = vpop.permute.xlu0 %334
      %336 = vrot.lane.b32.xlu0 %v224, 8
      %v337 = vpop.permute.xlu0 %336
      %v341 = vrot.slane %v223, 1
      %v342 = vrot.slane %v224, 1
      %v343 = vsel %vm253, %v341, %v342
      %v344 = vrot.slane %v225, 1
      %v345 = vsel %vm253, %v342, %v344
      %346 = vrot.lane.b32.xlu0 %v343, 12
      %v347 = vpop.permute.xlu0 %346
      %348 = vrot.lane.b32.xlu0 %v345, 12
      %v349 = vpop.permute.xlu0 %348
      %v352 = vsel %vm285, %v219, %v327
      %v353 = vsel %vm285, %v220, %v329
      %v354 = vsel %vm288, %v352, %v335
      %v355 = vsel %vm288, %v353, %v337
      %v356 = vsel %vm291, %v354, %v347
      %v357 = vsel %vm291, %v355, %v349
      %358 = vrot.lane.b32.xlu0 %v343, 4
      %v359 = vpop.permute.xlu0 %358
      %360 = vrot.lane.b32.xlu0 %v345, 4
      %v361 = vpop.permute.xlu0 %360
      %366 = vrot.lane.b32.xlu0 %v227, 8
      %v367 = vpop.permute.xlu0 %366
      %368 = vrot.lane.b32.xlu0 %v228, 8
      %v369 = vpop.permute.xlu0 %368
      %v373 = vrot.slane %v227, 1
      %v374 = vrot.slane %v228, 1
      %v375 = vsel %vm253, %v373, %v374
      %v376 = vrot.slane %v229, 1
      %v377 = vsel %vm253, %v374, %v376
      %378 = vrot.lane.b32.xlu0 %v375, 12
      %v379 = vpop.permute.xlu0 %378
      %380 = vrot.lane.b32.xlu0 %v377, 12
      %v381 = vpop.permute.xlu0 %380
      %v384 = vsel %vm285, %v223, %v359
      %v385 = vsel %vm285, %v224, %v361
      %v386 = vsel %vm288, %v384, %v367
      %v387 = vsel %vm288, %v385, %v369
      %v388 = vsel %vm291, %v386, %v379
      %v389 = vsel %vm291, %v387, %v381
      %390 = vrot.lane.b32.xlu0 %v375, 4
      %v391 = vpop.permute.xlu0 %390
      %392 = vrot.lane.b32.xlu0 %v377, 4
      %v393 = vpop.permute.xlu0 %392
      %398 = vrot.lane.b32.xlu0 %v231, 8
      %v399 = vpop.permute.xlu0 %398
      %400 = vrot.lane.b32.xlu0 %v232, 8
      %v401 = vpop.permute.xlu0 %400
      %v405 = vrot.slane %v231, 1
      %v406 = vrot.slane %v232, 1
      %v407 = vsel %vm253, %v405, %v406
      %v408 = vrot.slane %v233, 1
      %v409 = vsel %vm253, %v406, %v408
      %410 = vrot.lane.b32.xlu0 %v407, 12
      %v411 = vpop.permute.xlu0 %410
      %412 = vrot.lane.b32.xlu0 %v409, 12
      %v413 = vpop.permute.xlu0 %412
      %v416 = vsel %vm285, %v227, %v391
      %v417 = vsel %vm285, %v228, %v393
      %v418 = vsel %vm288, %v416, %v399
      %v419 = vsel %vm288, %v417, %v401
      %v420 = vsel %vm291, %v418, %v411
      %v421 = vsel %vm291, %v419, %v413
      %422 = vrot.lane.b32.xlu0 %v407, 4
      %v423 = vpop.permute.xlu0 %422
      %424 = vrot.lane.b32.xlu0 %v409, 4
      %v425 = vpop.permute.xlu0 %424
      %430 = vrot.lane.b32.xlu0 %v235, 8
      %v431 = vpop.permute.xlu0 %430
      %432 = vrot.lane.b32.xlu0 %v236, 8
      %v433 = vpop.permute.xlu0 %432
      %v437 = vrot.slane %v235, 1
      %v438 = vrot.slane %v236, 1
      %v439 = vsel %vm253, %v437, %v438
      %v440 = vrot.slane %v237, 1
      %v441 = vsel %vm253, %v438, %v440
      %442 = vrot.lane.b32.xlu0 %v439, 12
      %v443 = vpop.permute.xlu0 %442
      %444 = vrot.lane.b32.xlu0 %v441, 12
      %v445 = vpop.permute.xlu0 %444
      %v448 = vsel %vm285, %v231, %v423
      %v449 = vsel %vm285, %v232, %v425
      %v450 = vsel %vm288, %v448, %v431
      %v451 = vsel %vm288, %v449, %v433
      %v452 = vsel %vm291, %v450, %v443
      %v453 = vsel %vm291, %v451, %v445
      %454 = vrot.lane.b32.xlu0 %v439, 4
      %v455 = vpop.permute.xlu0 %454
      %456 = vrot.lane.b32.xlu0 %v441, 4
      %v457 = vpop.permute.xlu0 %456
      %462 = vrot.lane.b32.xlu0 %v239, 8
      %v463 = vpop.permute.xlu0 %462
      %464 = vrot.lane.b32.xlu0 %v240, 8
      %v465 = vpop.permute.xlu0 %464
      %v469 = vrot.slane %v239, 1
      %v470 = vrot.slane %v240, 1
      %v471 = vsel %vm253, %v469, %v470
      %v472 = vrot.slane %v241, 1
      %v473 = vsel %vm253, %v470, %v472
      %474 = vrot.lane.b32.xlu0 %v471, 12
      %v475 = vpop.permute.xlu0 %474
      %476 = vrot.lane.b32.xlu0 %v473, 12
      %v477 = vpop.permute.xlu0 %476
      %v480 = vsel %vm285, %v235, %v455
      %v481 = vsel %vm285, %v236, %v457
      %v482 = vsel %vm288, %v480, %v463
      %v483 = vsel %vm288, %v481, %v465
      %v484 = vsel %vm291, %v482, %v475
      %v485 = vsel %vm291, %v483, %v477
      %486 = vrot.lane.b32.xlu0 %v471, 4
      %v487 = vpop.permute.xlu0 %486
      %488 = vrot.lane.b32.xlu0 %v473, 4
      %v489 = vpop.permute.xlu0 %488
      %494 = vrot.lane.b32.xlu0 %v243, 8
      %v495 = vpop.permute.xlu0 %494
      %496 = vrot.lane.b32.xlu0 %v244, 8
      %v497 = vpop.permute.xlu0 %496
      %v501 = vrot.slane %v243, 1
      %v502 = vrot.slane %v244, 1
      %v503 = vsel %vm253, %v501, %v502
      %v504 = vrot.slane %v245, 1
      %v505 = vsel %vm253, %v502, %v504
      %506 = vrot.lane.b32.xlu0 %v503, 12
      %v507 = vpop.permute.xlu0 %506
      %508 = vrot.lane.b32.xlu0 %v505, 12
      %v509 = vpop.permute.xlu0 %508
      %v512 = vsel %vm285, %v239, %v487
      %v513 = vsel %vm285, %v240, %v489
      %v514 = vsel %vm288, %v512, %v495
      %v515 = vsel %vm288, %v513, %v497
      %v516 = vsel %vm291, %v514, %v507
      %v517 = vsel %vm291, %v515, %v509
      %v518 = vld [vmem:[%s1] sm:$0xff]
      %v519 = vld [vmem:[%s1 + $0x8] sm:$0xff]
      %v521 = vlaneseq
      %v522 = vshrl.u32 %v521, 7
      %v523 = vsub.s32 0, %v522
      %v524 = vrot.slane %v210, %v523
      %vm526 = vcmask 130048
      %v528 = vsel %vm526, %v292, 0
      %v531 = vsel %vm526, %v293, 0
      %v534 = vsel %vm526, %v324, 0
      %v537 = vsel %vm526, %v325, 0
      %v540 = vsel %vm526, %v356, 0
      %v543 = vsel %vm526, %v357, 0
      %v546 = vsel %vm526, %v388, 0
      %v549 = vsel %vm526, %v389, 0
      %v552 = vsel %vm526, %v420, 0
      %v555 = vsel %vm526, %v421, 0
      %v558 = vsel %vm526, %v452, 0
      %v561 = vsel %vm526, %v453, 0
      %v564 = vsel %vm526, %v484, 0
      %v567 = vsel %vm526, %v485, 0
      %v570 = vsel %vm526, %v516, 0
      %v573 = vsel %vm526, %v517, 0
      %575 = vmatprep.subr.mxu0 0.0
      %576 = vmatpush1.msra.mxu0 %v518
      %577 = vmatprep.subr.mxu0 0.0
      %578 = vmatpush1.msra.mxu0 %v519
      %579 = vmatprep.subr.mxu0 0.0
      %580 = vmatpush1.msra.mxu0 0.0
      %581 = vmatprep.subr.mxu0 0.0
      %582 = vmatpush1.msra.mxu0 0.0
      %583 = vmatprep.subr.mxu0 0.0
      %584 = vmatpush1.msra.mxu0 0.0
      %585 = vmatprep.subr.mxu0 0.0
      %586 = vmatpush1.msra.mxu0 0.0
      %587 = vmatprep.subr.mxu0 0.0
      %588 = vmatpush1.msra.mxu0 0.0
      %589 = vmatprep.subr.mxu0 0.0
      %590 = vmatpush1.msra.mxu0 0.0
      %591 = vmatprep.subr.mxu0 0.0
      %592 = vmatpush1.msra.mxu0 0.0
      %593 = vmatprep.subr.mxu0 0.0
      %594 = vmatpush1.msra.mxu0 0.0
      %595 = vmatprep.subr.mxu0 0.0
      %596 = vmatpush1.msra.mxu0 0.0
      %597 = vmatprep.subr.mxu0 0.0
      %598 = vmatpush1.msra.mxu0 0.0
      %599 = vmatprep.subr.mxu0 0.0
      %600 = vmatpush1.msra.mxu0 0.0
      %601 = vmatprep.subr.mxu0 0.0
      %602 = vmatpush1.msra.mxu0 0.0
      %603 = vmatprep.subr.mxu0 0.0
      %604 = vmatpush1.msra.mxu0 0.0
      %605 = vmatprep.subr.mxu0 0.0
      %606 = vmatpush1.msra.mxu0 0.0
      %607 = vmatprep.subr.mxu0 0.0
      %608 = vmatpush1.msra.mxu0 0.0
      %609 = vmatprep.subr.mxu0 0.0
      %610 = vmatpush1.msra.mxu0 0.0
      %611 = vmatprep.subr.mxu0 0.0
      %612 = vmatpush1.msra.mxu0 0.0
      %613 = vmatprep.subr.mxu0 0.0
      %614 = vmatpush1.msra.mxu0 0.0
      %615 = vmatprep.subr.mxu0 0.0
      %616 = vmatpush1.msra.mxu0 0.0
      %617 = vmatprep.subr.mxu0 0.0
      %618 = vmatpush1.msra.mxu0 0.0
      %619 = vmatprep.subr.mxu0 0.0
      %620 = vmatpush1.msra.mxu0 0.0
      %621 = vmatprep.subr.mxu0 0.0
      %622 = vmatpush1.msra.mxu0 0.0
      %623 = vmatprep.subr.mxu0 0.0
      %624 = vmatpush1.msra.mxu0 0.0
      %625 = vmatprep.subr.mxu0 0.0
      %626 = vmatpush1.msra.mxu0 0.0
      %627 = vmatprep.subr.mxu0 0.0
      %628 = vmatpush1.msra.mxu0 0.0
      %629 = vmatprep.subr.mxu0 0.0
      %630 = vmatpush1.msra.mxu0 0.0
      %631 = vmatprep.subr.mxu0 0.0
      %632 = vmatpush1.msra.mxu0 0.0
      %633 = vmatprep.subr.mxu0 0.0
      %634 = vmatpush1.msra.mxu0 0.0
      %635 = vmatprep.subr.mxu0 0.0
      %636 = vmatpush1.msra.mxu0 0.0
      %637 = vmatprep.subr.mxu0 0.0
      %638 = vmatpush1.msra.mxu0 0.0
      %639 = vmatprep.mubr.f32.mxu0 0.0
      %640 = vmatmul.mubr.f32.gmra.mrb[0].mxu0 %v528
      %v641 = vpop.f32.mrb[0].mxu0
      %v642 = vadd.f32 %v524, %v641
      %v643 = vpop.f32.mrb[0].mxu0
      %644 = vmatprep.mubr.f32.mxu0 0.0
      %645 = vmatmul.mubr.f32.gmra.mrb[0].mxu0 %v531
      %v646 = vpop.f32.mrb[0].mxu0
      %v647 = vadd.f32 %v524, %v646
      %v648 = vpop.f32.mrb[0].mxu0
      %649 = vmatprep.mubr.f32.mxu0 0.0
      %650 = vmatmul.mubr.f32.gmra.mrb[0].mxu0 %v534
      %v651 = vpop.f32.mrb[0].mxu0
      %v652 = vadd.f32 %v524, %v651
      %v653 = vpop.f32.mrb[0].mxu0
      %654 = vmatprep.mubr.f32.mxu0 0.0
      %655 = vmatmul.mubr.f32.gmra.mrb[0].mxu0 %v537
      %v656 = vpop.f32.mrb[0].mxu0
      %v657 = vadd.f32 %v524, %v656
      %v658 = vpop.f32.mrb[0].mxu0
      %659 = vmatprep.mubr.f32.mxu0 0.0
      %660 = vmatmul.mubr.f32.gmra.mrb[0].mxu0 %v540
      %v661 = vpop.f32.mrb[0].mxu0
      %v662 = vadd.f32 %v524, %v661
      %v663 = vpop.f32.mrb[0].mxu0
      %664 = vmatprep.mubr.f32.mxu0 0.0
      %665 = vmatmul.mubr.f32.gmra.mrb[0].mxu0 %v543
      %v666 = vpop.f32.mrb[0].mxu0
      %v667 = vadd.f32 %v524, %v666
      %v668 = vpop.f32.mrb[0].mxu0
      %669 = vmatprep.mubr.f32.mxu0 0.0
      %670 = vmatmul.mubr.f32.gmra.mrb[0].mxu0 %v546
      %v671 = vpop.f32.mrb[0].mxu0
      %v672 = vadd.f32 %v524, %v671
      %v673 = vpop.f32.mrb[0].mxu0
      %674 = vmatprep.mubr.f32.mxu0 0.0
      %675 = vmatmul.mubr.f32.gmra.mrb[0].mxu0 %v549
      %v676 = vpop.f32.mrb[0].mxu0
      %v677 = vadd.f32 %v524, %v676
      %v678 = vpop.f32.mrb[0].mxu0
      %679 = vmatprep.mubr.f32.mxu0 0.0
      %680 = vmatmul.mubr.f32.gmra.mrb[0].mxu0 %v552
      %v681 = vpop.f32.mrb[0].mxu0
      %v682 = vadd.f32 %v524, %v681
      %v683 = vpop.f32.mrb[0].mxu0
      %684 = vmatprep.mubr.f32.mxu0 0.0
      %685 = vmatmul.mubr.f32.gmra.mrb[0].mxu0 %v555
      %v686 = vpop.f32.mrb[0].mxu0
      %v687 = vadd.f32 %v524, %v686
      %v688 = vpop.f32.mrb[0].mxu0
      %689 = vmatprep.mubr.f32.mxu0 0.0
      %690 = vmatmul.mubr.f32.gmra.mrb[0].mxu0 %v558
      %v691 = vpop.f32.mrb[0].mxu0
      %v692 = vadd.f32 %v524, %v691
      %v693 = vpop.f32.mrb[0].mxu0
      %694 = vmatprep.mubr.f32.mxu0 0.0
      %695 = vmatmul.mubr.f32.gmra.mrb[0].mxu0 %v561
      %v696 = vpop.f32.mrb[0].mxu0
      %v697 = vadd.f32 %v524, %v696
      %v698 = vpop.f32.mrb[0].mxu0
      %699 = vmatprep.mubr.f32.mxu0 0.0
      %700 = vmatmul.mubr.f32.gmra.mrb[0].mxu0 %v564
      %v701 = vpop.f32.mrb[0].mxu0
      %v702 = vadd.f32 %v524, %v701
      %v703 = vpop.f32.mrb[0].mxu0
      %704 = vmatprep.mubr.f32.mxu0 0.0
      %705 = vmatmul.mubr.f32.gmra.mrb[0].mxu0 %v567
      %v706 = vpop.f32.mrb[0].mxu0
      %v707 = vadd.f32 %v524, %v706
      %v708 = vpop.f32.mrb[0].mxu0
      %709 = vmatprep.mubr.f32.mxu0 0.0
      %710 = vmatmul.mubr.f32.gmra.mrb[0].mxu0 %v570
      %v711 = vpop.f32.mrb[0].mxu0
      %v712 = vadd.f32 %v524, %v711
      %v713 = vpop.f32.mrb[0].mxu0
      %714 = vmatprep.mubr.f32.mxu0 0.0
      %715 = vmatmul.mubr.f32.gmra.mrb[0].mxu0 %v573
      %v716 = vpop.f32.mrb[0].mxu0
      %v717 = vadd.f32 %v524, %v716
      %v718 = vpop.f32.mrb[0].mxu0
      %719 = vdwg.mxu0
      %720 = vrot.lane.b32.xlu0 %v257, 4
      %v721 = vpop.permute.xlu0 %720
      %723 = vrot.lane.b32.xlu0 %v217, 8
      %v724 = vpop.permute.xlu0 %723
      %726 = vrot.lane.b32.xlu0 %v277, 12
      %v727 = vpop.permute.xlu0 %726
      %v729 = vsel %vm285, %v213, %v721
      %v730 = vsel %vm288, %v729, %v724
      %v731 = vsel %vm291, %v730, %v727
      %732 = vrot.lane.b32.xlu0 %v277, 4
      %v733 = vpop.permute.xlu0 %732
      %735 = vrot.lane.b32.xlu0 %v221, 8
      %v736 = vpop.permute.xlu0 %735
      %738 = vrot.lane.b32.xlu0 %v312, 12
      %v739 = vpop.permute.xlu0 %738
      %v741 = vsel %vm285, %v217, %v733
      %v742 = vsel %vm288, %v741, %v736
      %v743 = vsel %vm291, %v742, %v739
      %744 = vrot.lane.b32.xlu0 %v312, 4
      %v745 = vpop.permute.xlu0 %744
      %747 = vrot.lane.b32.xlu0 %v225, 8
      %v748 = vpop.permute.xlu0 %747
      %750 = vrot.lane.b32.xlu0 %v344, 12
      %v751 = vpop.permute.xlu0 %750
      %v753 = vsel %vm285, %v221, %v745
      %v754 = vsel %vm288, %v753, %v748
      %v755 = vsel %vm291, %v754, %v751
      %756 = vrot.lane.b32.xlu0 %v344, 4
      %v757 = vpop.permute.xlu0 %756
      %759 = vrot.lane.b32.xlu0 %v229, 8
      %v760 = vpop.permute.xlu0 %759
      %762 = vrot.lane.b32.xlu0 %v376, 12
      %v763 = vpop.permute.xlu0 %762
      %v765 = vsel %vm285, %v225, %v757
      %v766 = vsel %vm288, %v765, %v760
      %v767 = vsel %vm291, %v766, %v763
      %768 = vrot.lane.b32.xlu0 %v376, 4
      %v769 = vpop.permute.xlu0 %768
      %771 = vrot.lane.b32.xlu0 %v233, 8
      %v772 = vpop.permute.xlu0 %771
      %774 = vrot.lane.b32.xlu0 %v408, 12
      %v775 = vpop.permute.xlu0 %774
      %v777 = vsel %vm285, %v229, %v769
      %v778 = vsel %vm288, %v777, %v772
      %v779 = vsel %vm291, %v778, %v775
      %780 = vrot.lane.b32.xlu0 %v408, 4
      %v781 = vpop.permute.xlu0 %780
      %783 = vrot.lane.b32.xlu0 %v237, 8
      %v784 = vpop.permute.xlu0 %783
      %786 = vrot.lane.b32.xlu0 %v440, 12
      %v787 = vpop.permute.xlu0 %786
      %v789 = vsel %vm285, %v233, %v781
      %v790 = vsel %vm288, %v789, %v784
      %v791 = vsel %vm291, %v790, %v787
      %792 = vrot.lane.b32.xlu0 %v440, 4
      %v793 = vpop.permute.xlu0 %792
      %795 = vrot.lane.b32.xlu0 %v241, 8
      %v796 = vpop.permute.xlu0 %795
      %798 = vrot.lane.b32.xlu0 %v472, 12
      %v799 = vpop.permute.xlu0 %798
      %v801 = vsel %vm285, %v237, %v793
      %v802 = vsel %vm288, %v801, %v796
      %v803 = vsel %vm291, %v802, %v799
      %804 = vrot.lane.b32.xlu0 %v472, 4
      %v805 = vpop.permute.xlu0 %804
      %807 = vrot.lane.b32.xlu0 %v245, 8
      %v808 = vpop.permute.xlu0 %807
      %810 = vrot.lane.b32.xlu0 %v504, 12
      %v811 = vpop.permute.xlu0 %810
      %v813 = vsel %vm285, %v241, %v805
      %v814 = vsel %vm288, %v813, %v808
      %v815 = vsel %vm291, %v814, %v811
      %v817 = vrot.slane %v292, 1
      %v818 = vrot.slane %v293, 1
      %v819 = vsel %vm253, %v817, %v818
      %v820 = vrot.slane %v731, 1
      %v821 = vsel %vm253, %v818, %v820
      %v823 = vrot.slane %v324, 1
      %v824 = vrot.slane %v325, 1
      %v825 = vsel %vm253, %v823, %v824
      %v826 = vrot.slane %v743, 1
      %v827 = vsel %vm253, %v824, %v826
      %v829 = vrot.slane %v356, 1
      %v830 = vrot.slane %v357, 1
      %v831 = vsel %vm253, %v829, %v830
      %v832 = vrot.slane %v755, 1
      %v833 = vsel %vm253, %v830, %v832
      %v835 = vrot.slane %v388, 1
      %v836 = vrot.slane %v389, 1
      %v837 = vsel %vm253, %v835, %v836
      %v838 = vrot.slane %v767, 1
      %v839 = vsel %vm253, %v836, %v838
      %v841 = vrot.slane %v420, 1
      %v842 = vrot.slane %v421, 1
      %v843 = vsel %vm253, %v841, %v842
      %v844 = vrot.slane %v779, 1
      %v845 = vsel %vm253, %v842, %v844
      %v847 = vrot.slane %v452, 1
      %v848 = vrot.slane %v453, 1
      %v849 = vsel %vm253, %v847, %v848
      %v850 = vrot.slane %v791, 1
      %v851 = vsel %vm253, %v848, %v850
      %v853 = vrot.slane %v484, 1
      %v854 = vrot.slane %v485, 1
      %v855 = vsel %vm253, %v853, %v854
      %v856 = vrot.slane %v803, 1
      %v857 = vsel %vm253, %v854, %v856
      %v859 = vrot.slane %v516, 1
      %v860 = vrot.slane %v517, 1
      %v861 = vsel %vm253, %v859, %v860
      %v862 = vrot.slane %v815, 1
      %v863 = vsel %vm253, %v860, %v862
      %s864 = scalar_lea.vmem %s1, 16
      %v865 = vld [vmem:[%s864] sm:$0xff]
      %v866 = vld [vmem:[%s864 + $0x8] sm:$0xff]
      %v867 = vsel %vm526, %v819, 0
      %v869 = vsel %vm526, %v821, 0
      %v871 = vsel %vm526, %v825, 0
      %v873 = vsel %vm526, %v827, 0
      %v875 = vsel %vm526, %v831, 0
      %v877 = vsel %vm526, %v833, 0
      %v879 = vsel %vm526, %v837, 0
      %v881 = vsel %vm526, %v839, 0
      %v883 = vsel %vm526, %v843, 0
      %v885 = vsel %vm526, %v845, 0
      %v887 = vsel %vm526, %v849, 0
      %v889 = vsel %vm526, %v851, 0
      %v891 = vsel %vm526, %v855, 0
      %v893 = vsel %vm526, %v857, 0
      %v895 = vsel %vm526, %v861, 0
      %v897 = vsel %vm526, %v863, 0
      %899 = vmatprep.subr.mxu0 0.0
      %900 = vmatpush1.msra.mxu0 %v865
      %901 = vmatprep.subr.mxu0 0.0
      %902 = vmatpush1.msra.mxu0 %v866
      %903 = vmatprep.subr.mxu0 0.0
      %904 = vmatpush1.msra.mxu0 0.0
      %905 = vmatprep.subr.mxu0 0.0
      %906 = vmatpush1.msra.mxu0 0.0
      %907 = vmatprep.subr.mxu0 0.0
      %908 = vmatpush1.msra.mxu0 0.0
      %909 = vmatprep.subr.mxu0 0.0
      %910 = vmatpush1.msra.mxu0 0.0
      %911 = vmatprep.subr.mxu0 0.0
      %912 = vmatpush1.msra.mxu0 0.0
      %913 = vmatprep.subr.mxu0 0.0
      %914 = vmatpush1.msra.mxu0 0.0
      %915 = vmatprep.subr.mxu0 0.0
      %916 = vmatpush1.msra.mxu0 0.0
      %917 = vmatprep.subr.mxu0 0.0
      %918 = vmatpush1.msra.mxu0 0.0
      %919 = vmatprep.subr.mxu0 0.0
      %920 = vmatpush1.msra.mxu0 0.0
      %921 = vmatprep.subr.mxu0 0.0
      %922 = vmatpush1.msra.mxu0 0.0
      %923 = vmatprep.subr.mxu0 0.0
      %924 = vmatpush1.msra.mxu0 0.0
      %925 = vmatprep.subr.mxu0 0.0
      %926 = vmatpush1.msra.mxu0 0.0
      %927 = vmatprep.subr.mxu0 0.0
      %928 = vmatpush1.msra.mxu0 0.0
      %929 = vmatprep.subr.mxu0 0.0
      %930 = vmatpush1.msra.mxu0 0.0
      %931 = vmatprep.subr.mxu0 0.0
      %932 = vmatpush1.msra.mxu0 0.0
      %933 = vmatprep.subr.mxu0 0.0
      %934 = vmatpush1.msra.mxu0 0.0
      %935 = vmatprep.subr.mxu0 0.0
      %936 = vmatpush1.msra.mxu0 0.0
      %937 = vmatprep.subr.mxu0 0.0
      %938 = vmatpush1.msra.mxu0 0.0
      %939 = vmatprep.subr.mxu0 0.0
      %940 = vmatpush1.msra.mxu0 0.0
      %941 = vmatprep.subr.mxu0 0.0
      %942 = vmatpush1.msra.mxu0 0.0
      %943 = vmatprep.subr.mxu0 0.0
      %944 = vmatpush1.msra.mxu0 0.0
      %945 = vmatprep.subr.mxu0 0.0
      %946 = vmatpush1.msra.mxu0 0.0
      %947 = vmatprep.subr.mxu0 0.0
      %948 = vmatpush1.msra.mxu0 0.0
      %949 = vmatprep.subr.mxu0 0.0
      %950 = vmatpush1.msra.mxu0 0.0
      %951 = vmatprep.subr.mxu0 0.0
      %952 = vmatpush1.msra.mxu0 0.0
      %953 = vmatprep.subr.mxu0 0.0
      %954 = vmatpush1.msra.mxu0 0.0
      %955 = vmatprep.subr.mxu0 0.0
      %956 = vmatpush1.msra.mxu0 0.0
      %957 = vmatprep.subr.mxu0 0.0
      %958 = vmatpush1.msra.mxu0 0.0
      %959 = vmatprep.subr.mxu0 0.0
      %960 = vmatpush1.msra.mxu0 0.0
      %961 = vmatprep.subr.mxu0 0.0
      %962 = vmatpush1.msra.mxu0 0.0
      %963 = vmatprep.mubr.f32.mxu0 0.0
      %964 = vmatmul.mubr.f32.gmra.mrb[0].mxu0 %v867
      %v965 = vpop.f32.mrb[0].mxu0
      %v966 = vadd.f32 %v524, %v965
      %v967 = vpop.f32.mrb[0].mxu0
      %968 = vmatprep.mubr.f32.mxu0 0.0
      %969 = vmatmul.mubr.f32.gmra.mrb[0].mxu0 %v869
      %v970 = vpop.f32.mrb[0].mxu0
      %v971 = vadd.f32 %v524, %v970
      %v972 = vpop.f32.mrb[0].mxu0
      %973 = vmatprep.mubr.f32.mxu0 0.0
      %974 = vmatmul.mubr.f32.gmra.mrb[0].mxu0 %v871
      %v975 = vpop.f32.mrb[0].mxu0
      %v976 = vadd.f32 %v524, %v975
      %v977 = vpop.f32.mrb[0].mxu0
      %978 = vmatprep.mubr.f32.mxu0 0.0
      %979 = vmatmul.mubr.f32.gmra.mrb[0].mxu0 %v873
      %v980 = vpop.f32.mrb[0].mxu0
      %v981 = vadd.f32 %v524, %v980
      %v982 = vpop.f32.mrb[0].mxu0
      %983 = vmatprep.mubr.f32.mxu0 0.0
      %984 = vmatmul.mubr.f32.gmra.mrb[0].mxu0 %v875
      %v985 = vpop.f32.mrb[0].mxu0
      %v986 = vadd.f32 %v524, %v985
      %v987 = vpop.f32.mrb[0].mxu0
      %988 = vmatprep.mubr.f32.mxu0 0.0
      %989 = vmatmul.mubr.f32.gmra.mrb[0].mxu0 %v877
      %v990 = vpop.f32.mrb[0].mxu0
      %v991 = vadd.f32 %v524, %v990
      %v992 = vpop.f32.mrb[0].mxu0
      %993 = vmatprep.mubr.f32.mxu0 0.0
      %994 = vmatmul.mubr.f32.gmra.mrb[0].mxu0 %v879
      %v995 = vpop.f32.mrb[0].mxu0
      %v996 = vadd.f32 %v524, %v995
      %v997 = vpop.f32.mrb[0].mxu0
      %998 = vmatprep.mubr.f32.mxu0 0.0
      %999 = vmatmul.mubr.f32.gmra.mrb[0].mxu0 %v881
      %v1000 = vpop.f32.mrb[0].mxu0
      %v1001 = vadd.f32 %v524, %v1000
      %v1002 = vpop.f32.mrb[0].mxu0
      %1003 = vmatprep.mubr.f32.mxu0 0.0
      %1004 = vmatmul.mubr.f32.gmra.mrb[0].mxu0 %v883
      %v1005 = vpop.f32.mrb[0].mxu0
      %v1006 = vadd.f32 %v524, %v1005
      %v1007 = vpop.f32.mrb[0].mxu0
      %1008 = vmatprep.mubr.f32.mxu0 0.0
      %1009 = vmatmul.mubr.f32.gmra.mrb[0].mxu0 %v885
      %v1010 = vpop.f32.mrb[0].mxu0
      %v1011 = vadd.f32 %v524, %v1010
      %v1012 = vpop.f32.mrb[0].mxu0
      %1013 = vmatprep.mubr.f32.mxu0 0.0
      %1014 = vmatmul.mubr.f32.gmra.mrb[0].mxu0 %v887
      %v1015 = vpop.f32.mrb[0].mxu0
      %v1016 = vadd.f32 %v524, %v1015
      %v1017 = vpop.f32.mrb[0].mxu0
      %1018 = vmatprep.mubr.f32.mxu0 0.0
      %1019 = vmatmul.mubr.f32.gmra.mrb[0].mxu0 %v889
      %v1020 = vpop.f32.mrb[0].mxu0
      %v1021 = vadd.f32 %v524, %v1020
      %v1022 = vpop.f32.mrb[0].mxu0
      %1023 = vmatprep.mubr.f32.mxu0 0.0
      %1024 = vmatmul.mubr.f32.gmra.mrb[0].mxu0 %v891
      %v1025 = vpop.f32.mrb[0].mxu0
      %v1026 = vadd.f32 %v524, %v1025
      %v1027 = vpop.f32.mrb[0].mxu0
      %1028 = vmatprep.mubr.f32.mxu0 0.0
      %1029 = vmatmul.mubr.f32.gmra.mrb[0].mxu0 %v893
      %v1030 = vpop.f32.mrb[0].mxu0
      %v1031 = vadd.f32 %v524, %v1030
      %v1032 = vpop.f32.mrb[0].mxu0
      %1033 = vmatprep.mubr.f32.mxu0 0.0
      %1034 = vmatmul.mubr.f32.gmra.mrb[0].mxu0 %v895
      %v1035 = vpop.f32.mrb[0].mxu0
      %v1036 = vadd.f32 %v524, %v1035
      %v1037 = vpop.f32.mrb[0].mxu0
      %1038 = vmatprep.mubr.f32.mxu0 0.0
      %1039 = vmatmul.mubr.f32.gmra.mrb[0].mxu0 %v897
      %v1040 = vpop.f32.mrb[0].mxu0
      %v1041 = vadd.f32 %v524, %v1040
      %v1042 = vpop.f32.mrb[0].mxu0
      %1043 = vdwg.mxu0
      %v1060 = vcombine.high %v642, %v642
      %v1062 = vunpack.c.l.s4 1966171168
      %v1063 = vunpack.c.0.s8 %v1062
      %v1064 = vlaneseq
      %v1065 = vshrl.u32 %v1064, 7
      %v1066 = vsub.s32 %v1063, %v1065
      %v1067 = vrot.slane %v642, %v1066
      %v1069 = vunpack.c.l.s4 1966171168
      %v1070 = vunpack.c.0.s8 %v1069
      %v1071 = vlaneseq
      %v1072 = vshrl.u32 %v1071, 7
      %v1073 = vsub.s32 %v1070, %v1072
      %v1074 = vrot.slane %v1060, %v1073
      %v1075 = vcombine.high %v1067, %v1067
      %v1076 = vcombine.high %v1074, %v1074
      %v1078 = vunpack.c.l.s4 1966171168
      %v1079 = vunpack.c.0.s8 %v1078
      %v1080 = vlaneseq
      %v1081 = vshrl.u32 %v1080, 7
      %v1082 = vsub.s32 %v1079, %v1081
      %v1083 = vrot.slane %v1067, %v1082
      %v1085 = vunpack.c.l.s4 1966171168
      %v1086 = vunpack.c.0.s8 %v1085
      %v1087 = vlaneseq
      %v1088 = vshrl.u32 %v1087, 7
      %v1089 = vsub.s32 %v1086, %v1088
      %v1090 = vrot.slane %v1074, %v1089
      %v1092 = vunpack.c.l.s4 1966171168
      %v1093 = vunpack.c.0.s8 %v1092
      %v1094 = vlaneseq
      %v1095 = vshrl.u32 %v1094, 7
      %v1096 = vsub.s32 %v1093, %v1095
      %v1097 = vrot.slane %v1075, %v1096
      %v1099 = vunpack.c.l.s4 1966171168
      %v1100 = vunpack.c.0.s8 %v1099
      %v1101 = vlaneseq
      %v1102 = vshrl.u32 %v1101, 7
      %v1103 = vsub.s32 %v1100, %v1102
      %v1104 = vrot.slane %v1076, %v1103
      %v1105 = vcombine.high %v1083, %v1083
      %v1106 = vcombine.high %v1090, %v1090
      %v1107 = vcombine.high %v1097, %v1097
      %v1108 = vcombine.high %v1104, %v1104
      %v1109 = vcombine.high %v647, %v647
      %v1111 = vunpack.c.l.s4 1966171168
      %v1112 = vunpack.c.0.s8 %v1111
      %v1113 = vlaneseq
      %v1114 = vshrl.u32 %v1113, 7
      %v1115 = vsub.s32 %v1112, %v1114
      %v1116 = vrot.slane %v647, %v1115
      %v1118 = vunpack.c.l.s4 1966171168
      %v1119 = vunpack.c.0.s8 %v1118
      %v1120 = vlaneseq
      %v1121 = vshrl.u32 %v1120, 7
      %v1122 = vsub.s32 %v1119, %v1121
      %v1123 = vrot.slane %v1109, %v1122
      %v1124 = vcombine.high %v1116, %v1116
      %v1125 = vcombine.high %v1123, %v1123
      %v1127 = vunpack.c.l.s4 1966171168
      %v1128 = vunpack.c.0.s8 %v1127
      %v1129 = vlaneseq
      %v1130 = vshrl.u32 %v1129, 7
      %v1131 = vsub.s32 %v1128, %v1130
      %v1132 = vrot.slane %v1116, %v1131
      %v1134 = vunpack.c.l.s4 1966171168
      %v1135 = vunpack.c.0.s8 %v1134
      %v1136 = vlaneseq
      %v1137 = vshrl.u32 %v1136, 7
      %v1138 = vsub.s32 %v1135, %v1137
      %v1139 = vrot.slane %v1123, %v1138
      %v1141 = vunpack.c.l.s4 1966171168
      %v1142 = vunpack.c.0.s8 %v1141
      %v1143 = vlaneseq
      %v1144 = vshrl.u32 %v1143, 7
      %v1145 = vsub.s32 %v1142, %v1144
      %v1146 = vrot.slane %v1124, %v1145
      %v1148 = vunpack.c.l.s4 1966171168
      %v1149 = vunpack.c.0.s8 %v1148
      %v1150 = vlaneseq
      %v1151 = vshrl.u32 %v1150, 7
      %v1152 = vsub.s32 %v1149, %v1151
      %v1153 = vrot.slane %v1125, %v1152
      %v1154 = vcombine.high %v1132, %v1132
      %v1155 = vcombine.high %v1139, %v1139
      %v1156 = vcombine.high %v1146, %v1146
      %v1157 = vcombine.high %v1153, %v1153
      %v1158 = vcombine.high %v652, %v652
      %v1160 = vunpack.c.l.s4 1966171168
      %v1161 = vunpack.c.0.s8 %v1160
      %v1162 = vlaneseq
      %v1163 = vshrl.u32 %v1162, 7
      %v1164 = vsub.s32 %v1161, %v1163
      %v1165 = vrot.slane %v652, %v1164
      %v1167 = vunpack.c.l.s4 1966171168
      %v1168 = vunpack.c.0.s8 %v1167
      %v1169 = vlaneseq
      %v1170 = vshrl.u32 %v1169, 7
      %v1171 = vsub.s32 %v1168, %v1170
      %v1172 = vrot.slane %v1158, %v1171
      %v1173 = vcombine.high %v1165, %v1165
      %v1174 = vcombine.high %v1172, %v1172
      %v1176 = vunpack.c.l.s4 1966171168
      %v1177 = vunpack.c.0.s8 %v1176
      %v1178 = vlaneseq
      %v1179 = vshrl.u32 %v1178, 7
      %v1180 = vsub.s32 %v1177, %v1179
      %v1181 = vrot.slane %v1165, %v1180
      %v1183 = vunpack.c.l.s4 1966171168
      %v1184 = vunpack.c.0.s8 %v1183
      %v1185 = vlaneseq
      %v1186 = vshrl.u32 %v1185, 7
      %v1187 = vsub.s32 %v1184, %v1186
      %v1188 = vrot.slane %v1172, %v1187
      %v1190 = vunpack.c.l.s4 1966171168
      %v1191 = vunpack.c.0.s8 %v1190
      %v1192 = vlaneseq
      %v1193 = vshrl.u32 %v1192, 7
      %v1194 = vsub.s32 %v1191, %v1193
      %v1195 = vrot.slane %v1173, %v1194
      %v1197 = vunpack.c.l.s4 1966171168
      %v1198 = vunpack.c.0.s8 %v1197
      %v1199 = vlaneseq
      %v1200 = vshrl.u32 %v1199, 7
      %v1201 = vsub.s32 %v1198, %v1200
      %v1202 = vrot.slane %v1174, %v1201
      %v1203 = vcombine.high %v1181, %v1181
      %v1204 = vcombine.high %v1188, %v1188
      %v1205 = vcombine.high %v1195, %v1195
      %v1206 = vcombine.high %v1202, %v1202
      %v1207 = vcombine.high %v657, %v657
      %v1209 = vunpack.c.l.s4 1966171168
      %v1210 = vunpack.c.0.s8 %v1209
      %v1211 = vlaneseq
      %v1212 = vshrl.u32 %v1211, 7
      %v1213 = vsub.s32 %v1210, %v1212
      %v1214 = vrot.slane %v657, %v1213
      %v1216 = vunpack.c.l.s4 1966171168
      %v1217 = vunpack.c.0.s8 %v1216
      %v1218 = vlaneseq
      %v1219 = vshrl.u32 %v1218, 7
      %v1220 = vsub.s32 %v1217, %v1219
      %v1221 = vrot.slane %v1207, %v1220
      %v1222 = vcombine.high %v1214, %v1214
      %v1223 = vcombine.high %v1221, %v1221
      %v1225 = vunpack.c.l.s4 1966171168
      %v1226 = vunpack.c.0.s8 %v1225
      %v1227 = vlaneseq
      %v1228 = vshrl.u32 %v1227, 7
      %v1229 = vsub.s32 %v1226, %v1228
      %v1230 = vrot.slane %v1214, %v1229
      %v1232 = vunpack.c.l.s4 1966171168
      %v1233 = vunpack.c.0.s8 %v1232
      %v1234 = vlaneseq
      %v1235 = vshrl.u32 %v1234, 7
      %v1236 = vsub.s32 %v1233, %v1235
      %v1237 = vrot.slane %v1221, %v1236
      %v1239 = vunpack.c.l.s4 1966171168
      %v1240 = vunpack.c.0.s8 %v1239
      %v1241 = vlaneseq
      %v1242 = vshrl.u32 %v1241, 7
      %v1243 = vsub.s32 %v1240, %v1242
      %v1244 = vrot.slane %v1222, %v1243
      %v1246 = vunpack.c.l.s4 1966171168
      %v1247 = vunpack.c.0.s8 %v1246
      %v1248 = vlaneseq
      %v1249 = vshrl.u32 %v1248, 7
      %v1250 = vsub.s32 %v1247, %v1249
      %v1251 = vrot.slane %v1223, %v1250
      %v1252 = vcombine.high %v1230, %v1230
      %v1253 = vcombine.high %v1237, %v1237
      %v1254 = vcombine.high %v1244, %v1244
      %v1255 = vcombine.high %v1251, %v1251
      %v1256 = vcombine.high %v662, %v662
      %v1258 = vunpack.c.l.s4 1966171168
      %v1259 = vunpack.c.0.s8 %v1258
      %v1260 = vlaneseq
      %v1261 = vshrl.u32 %v1260, 7
      %v1262 = vsub.s32 %v1259, %v1261
      %v1263 = vrot.slane %v662, %v1262
      %v1265 = vunpack.c.l.s4 1966171168
      %v1266 = vunpack.c.0.s8 %v1265
      %v1267 = vlaneseq
      %v1268 = vshrl.u32 %v1267, 7
      %v1269 = vsub.s32 %v1266, %v1268
      %v1270 = vrot.slane %v1256, %v1269
      %v1271 = vcombine.high %v1263, %v1263
      %v1272 = vcombine.high %v1270, %v1270
      %v1274 = vunpack.c.l.s4 1966171168
      %v1275 = vunpack.c.0.s8 %v1274
      %v1276 = vlaneseq
      %v1277 = vshrl.u32 %v1276, 7
      %v1278 = vsub.s32 %v1275, %v1277
      %v1279 = vrot.slane %v1263, %v1278
      %v1281 = vunpack.c.l.s4 1966171168
      %v1282 = vunpack.c.0.s8 %v1281
      %v1283 = vlaneseq
      %v1284 = vshrl.u32 %v1283, 7
      %v1285 = vsub.s32 %v1282, %v1284
      %v1286 = vrot.slane %v1270, %v1285
      %v1288 = vunpack.c.l.s4 1966171168
      %v1289 = vunpack.c.0.s8 %v1288
      %v1290 = vlaneseq
      %v1291 = vshrl.u32 %v1290, 7
      %v1292 = vsub.s32 %v1289, %v1291
      %v1293 = vrot.slane %v1271, %v1292
      %v1295 = vunpack.c.l.s4 1966171168
      %v1296 = vunpack.c.0.s8 %v1295
      %v1297 = vlaneseq
      %v1298 = vshrl.u32 %v1297, 7
      %v1299 = vsub.s32 %v1296, %v1298
      %v1300 = vrot.slane %v1272, %v1299
      %v1301 = vcombine.high %v1279, %v1279
      %v1302 = vcombine.high %v1286, %v1286
      %v1303 = vcombine.high %v1293, %v1293
      %v1304 = vcombine.high %v1300, %v1300
      %v1305 = vcombine.high %v667, %v667
      %v1307 = vunpack.c.l.s4 1966171168
      %v1308 = vunpack.c.0.s8 %v1307
      %v1309 = vlaneseq
      %v1310 = vshrl.u32 %v1309, 7
      %v1311 = vsub.s32 %v1308, %v1310
      %v1312 = vrot.slane %v667, %v1311
      %v1314 = vunpack.c.l.s4 1966171168
      %v1315 = vunpack.c.0.s8 %v1314
      %v1316 = vlaneseq
      %v1317 = vshrl.u32 %v1316, 7
      %v1318 = vsub.s32 %v1315, %v1317
      %v1319 = vrot.slane %v1305, %v1318
      %v1320 = vcombine.high %v1312, %v1312
      %v1321 = vcombine.high %v1319, %v1319
      %v1323 = vunpack.c.l.s4 1966171168
      %v1324 = vunpack.c.0.s8 %v1323
      %v1325 = vlaneseq
      %v1326 = vshrl.u32 %v1325, 7
      %v1327 = vsub.s32 %v1324, %v1326
      %v1328 = vrot.slane %v1312, %v1327
      %v1330 = vunpack.c.l.s4 1966171168
      %v1331 = vunpack.c.0.s8 %v1330
      %v1332 = vlaneseq
      %v1333 = vshrl.u32 %v1332, 7
      %v1334 = vsub.s32 %v1331, %v1333
      %v1335 = vrot.slane %v1319, %v1334
      %v1337 = vunpack.c.l.s4 1966171168
      %v1338 = vunpack.c.0.s8 %v1337
      %v1339 = vlaneseq
      %v1340 = vshrl.u32 %v1339, 7
      %v1341 = vsub.s32 %v1338, %v1340
      %v1342 = vrot.slane %v1320, %v1341
      %v1344 = vunpack.c.l.s4 1966171168
      %v1345 = vunpack.c.0.s8 %v1344
      %v1346 = vlaneseq
      %v1347 = vshrl.u32 %v1346, 7
      %v1348 = vsub.s32 %v1345, %v1347
      %v1349 = vrot.slane %v1321, %v1348
      %v1350 = vcombine.high %v1328, %v1328
      %v1351 = vcombine.high %v1335, %v1335
      %v1352 = vcombine.high %v1342, %v1342
      %v1353 = vcombine.high %v1349, %v1349
      %v1354 = vcombine.high %v672, %v672
      %v1356 = vunpack.c.l.s4 1966171168
      %v1357 = vunpack.c.0.s8 %v1356
      %v1358 = vlaneseq
      %v1359 = vshrl.u32 %v1358, 7
      %v1360 = vsub.s32 %v1357, %v1359
      %v1361 = vrot.slane %v672, %v1360
      %v1363 = vunpack.c.l.s4 1966171168
      %v1364 = vunpack.c.0.s8 %v1363
      %v1365 = vlaneseq
      %v1366 = vshrl.u32 %v1365, 7
      %v1367 = vsub.s32 %v1364, %v1366
      %v1368 = vrot.slane %v1354, %v1367
      %v1369 = vcombine.high %v1361, %v1361
      %v1370 = vcombine.high %v1368, %v1368
      %v1372 = vunpack.c.l.s4 1966171168
      %v1373 = vunpack.c.0.s8 %v1372
      %v1374 = vlaneseq
      %v1375 = vshrl.u32 %v1374, 7
      %v1376 = vsub.s32 %v1373, %v1375
      %v1377 = vrot.slane %v1361, %v1376
      %v1379 = vunpack.c.l.s4 1966171168
      %v1380 = vunpack.c.0.s8 %v1379
      %v1381 = vlaneseq
      %v1382 = vshrl.u32 %v1381, 7
      %v1383 = vsub.s32 %v1380, %v1382
      %v1384 = vrot.slane %v1368, %v1383
      %v1386 = vunpack.c.l.s4 1966171168
      %v1387 = vunpack.c.0.s8 %v1386
      %v1388 = vlaneseq
      %v1389 = vshrl.u32 %v1388, 7
      %v1390 = vsub.s32 %v1387, %v1389
      %v1391 = vrot.slane %v1369, %v1390
      %v1393 = vunpack.c.l.s4 1966171168
      %v1394 = vunpack.c.0.s8 %v1393
      %v1395 = vlaneseq
      %v1396 = vshrl.u32 %v1395, 7
      %v1397 = vsub.s32 %v1394, %v1396
      %v1398 = vrot.slane %v1370, %v1397
      %v1399 = vcombine.high %v1377, %v1377
      %v1400 = vcombine.high %v1384, %v1384
      %v1401 = vcombine.high %v1391, %v1391
      %v1402 = vcombine.high %v1398, %v1398
      %v1403 = vcombine.high %v677, %v677
      %v1405 = vunpack.c.l.s4 1966171168
      %v1406 = vunpack.c.0.s8 %v1405
      %v1407 = vlaneseq
      %v1408 = vshrl.u32 %v1407, 7
      %v1409 = vsub.s32 %v1406, %v1408
      %v1410 = vrot.slane %v677, %v1409
      %v1412 = vunpack.c.l.s4 1966171168
      %v1413 = vunpack.c.0.s8 %v1412
      %v1414 = vlaneseq
      %v1415 = vshrl.u32 %v1414, 7
      %v1416 = vsub.s32 %v1413, %v1415
      %v1417 = vrot.slane %v1403, %v1416
      %v1418 = vcombine.high %v1410, %v1410
      %v1419 = vcombine.high %v1417, %v1417
      %v1421 = vunpack.c.l.s4 1966171168
      %v1422 = vunpack.c.0.s8 %v1421
      %v1423 = vlaneseq
      %v1424 = vshrl.u32 %v1423, 7
      %v1425 = vsub.s32 %v1422, %v1424
      %v1426 = vrot.slane %v1410, %v1425
      %v1428 = vunpack.c.l.s4 1966171168
      %v1429 = vunpack.c.0.s8 %v1428
      %v1430 = vlaneseq
      %v1431 = vshrl.u32 %v1430, 7
      %v1432 = vsub.s32 %v1429, %v1431
      %v1433 = vrot.slane %v1417, %v1432
      %v1435 = vunpack.c.l.s4 1966171168
      %v1436 = vunpack.c.0.s8 %v1435
      %v1437 = vlaneseq
      %v1438 = vshrl.u32 %v1437, 7
      %v1439 = vsub.s32 %v1436, %v1438
      %v1440 = vrot.slane %v1418, %v1439
      %v1442 = vunpack.c.l.s4 1966171168
      %v1443 = vunpack.c.0.s8 %v1442
      %v1444 = vlaneseq
      %v1445 = vshrl.u32 %v1444, 7
      %v1446 = vsub.s32 %v1443, %v1445
      %v1447 = vrot.slane %v1419, %v1446
      %v1448 = vcombine.high %v1426, %v1426
      %v1449 = vcombine.high %v1433, %v1433
      %v1450 = vcombine.high %v1440, %v1440
      %v1451 = vcombine.high %v1447, %v1447
      %v1452 = vcombine.high %v682, %v682
      %v1454 = vunpack.c.l.s4 1966171168
      %v1455 = vunpack.c.0.s8 %v1454
      %v1456 = vlaneseq
      %v1457 = vshrl.u32 %v1456, 7
      %v1458 = vsub.s32 %v1455, %v1457
      %v1459 = vrot.slane %v682, %v1458
      %v1461 = vunpack.c.l.s4 1966171168
      %v1462 = vunpack.c.0.s8 %v1461
      %v1463 = vlaneseq
      %v1464 = vshrl.u32 %v1463, 7
      %v1465 = vsub.s32 %v1462, %v1464
      %v1466 = vrot.slane %v1452, %v1465
      %v1467 = vcombine.high %v1459, %v1459
      %v1468 = vcombine.high %v1466, %v1466
      %v1470 = vunpack.c.l.s4 1966171168
      %v1471 = vunpack.c.0.s8 %v1470
      %v1472 = vlaneseq
      %v1473 = vshrl.u32 %v1472, 7
      %v1474 = vsub.s32 %v1471, %v1473
      %v1475 = vrot.slane %v1459, %v1474
      %v1477 = vunpack.c.l.s4 1966171168
      %v1478 = vunpack.c.0.s8 %v1477
      %v1479 = vlaneseq
      %v1480 = vshrl.u32 %v1479, 7
      %v1481 = vsub.s32 %v1478, %v1480
      %v1482 = vrot.slane %v1466, %v1481
      %v1484 = vunpack.c.l.s4 1966171168
      %v1485 = vunpack.c.0.s8 %v1484
      %v1486 = vlaneseq
      %v1487 = vshrl.u32 %v1486, 7
      %v1488 = vsub.s32 %v1485, %v1487
      %v1489 = vrot.slane %v1467, %v1488
      %v1491 = vunpack.c.l.s4 1966171168
      %v1492 = vunpack.c.0.s8 %v1491
      %v1493 = vlaneseq
      %v1494 = vshrl.u32 %v1493, 7
      %v1495 = vsub.s32 %v1492, %v1494
      %v1496 = vrot.slane %v1468, %v1495
      %v1497 = vcombine.high %v1475, %v1475
      %v1498 = vcombine.high %v1482, %v1482
      %v1499 = vcombine.high %v1489, %v1489
      %v1500 = vcombine.high %v1496, %v1496
      %v1501 = vcombine.high %v687, %v687
      %v1503 = vunpack.c.l.s4 1966171168
      %v1504 = vunpack.c.0.s8 %v1503
      %v1505 = vlaneseq
      %v1506 = vshrl.u32 %v1505, 7
      %v1507 = vsub.s32 %v1504, %v1506
      %v1508 = vrot.slane %v687, %v1507
      %v1510 = vunpack.c.l.s4 1966171168
      %v1511 = vunpack.c.0.s8 %v1510
      %v1512 = vlaneseq
      %v1513 = vshrl.u32 %v1512, 7
      %v1514 = vsub.s32 %v1511, %v1513
      %v1515 = vrot.slane %v1501, %v1514
      %v1516 = vcombine.high %v1508, %v1508
      %v1517 = vcombine.high %v1515, %v1515
      %v1519 = vunpack.c.l.s4 1966171168
      %v1520 = vunpack.c.0.s8 %v1519
      %v1521 = vlaneseq
      %v1522 = vshrl.u32 %v1521, 7
      %v1523 = vsub.s32 %v1520, %v1522
      %v1524 = vrot.slane %v1508, %v1523
      %v1526 = vunpack.c.l.s4 1966171168
      %v1527 = vunpack.c.0.s8 %v1526
      %v1528 = vlaneseq
      %v1529 = vshrl.u32 %v1528, 7
      %v1530 = vsub.s32 %v1527, %v1529
      %v1531 = vrot.slane %v1515, %v1530
      %v1533 = vunpack.c.l.s4 1966171168
      %v1534 = vunpack.c.0.s8 %v1533
      %v1535 = vlaneseq
      %v1536 = vshrl.u32 %v1535, 7
      %v1537 = vsub.s32 %v1534, %v1536
      %v1538 = vrot.slane %v1516, %v1537
      %v1540 = vunpack.c.l.s4 1966171168
      %v1541 = vunpack.c.0.s8 %v1540
      %v1542 = vlaneseq
      %v1543 = vshrl.u32 %v1542, 7
      %v1544 = vsub.s32 %v1541, %v1543
      %v1545 = vrot.slane %v1517, %v1544
      %v1546 = vcombine.high %v1524, %v1524
      %v1547 = vcombine.high %v1531, %v1531
      %v1548 = vcombine.high %v1538, %v1538
      %v1549 = vcombine.high %v1545, %v1545
      %v1550 = vcombine.high %v692, %v692
      %v1552 = vunpack.c.l.s4 1966171168
      %v1553 = vunpack.c.0.s8 %v1552
      %v1554 = vlaneseq
      %v1555 = vshrl.u32 %v1554, 7
      %v1556 = vsub.s32 %v1553, %v1555
      %v1557 = vrot.slane %v692, %v1556
      %v1559 = vunpack.c.l.s4 1966171168
      %v1560 = vunpack.c.0.s8 %v1559
      %v1561 = vlaneseq
      %v1562 = vshrl.u32 %v1561, 7
      %v1563 = vsub.s32 %v1560, %v1562
      %v1564 = vrot.slane %v1550, %v1563
      %v1565 = vcombine.high %v1557, %v1557
      %v1566 = vcombine.high %v1564, %v1564
      %v1568 = vunpack.c.l.s4 1966171168
      %v1569 = vunpack.c.0.s8 %v1568
      %v1570 = vlaneseq
      %v1571 = vshrl.u32 %v1570, 7
      %v1572 = vsub.s32 %v1569, %v1571
      %v1573 = vrot.slane %v1557, %v1572
      %v1575 = vunpack.c.l.s4 1966171168
      %v1576 = vunpack.c.0.s8 %v1575
      %v1577 = vlaneseq
      %v1578 = vshrl.u32 %v1577, 7
      %v1579 = vsub.s32 %v1576, %v1578
      %v1580 = vrot.slane %v1564, %v1579
      %v1582 = vunpack.c.l.s4 1966171168
      %v1583 = vunpack.c.0.s8 %v1582
      %v1584 = vlaneseq
      %v1585 = vshrl.u32 %v1584, 7
      %v1586 = vsub.s32 %v1583, %v1585
      %v1587 = vrot.slane %v1565, %v1586
      %v1589 = vunpack.c.l.s4 1966171168
      %v1590 = vunpack.c.0.s8 %v1589
      %v1591 = vlaneseq
      %v1592 = vshrl.u32 %v1591, 7
      %v1593 = vsub.s32 %v1590, %v1592
      %v1594 = vrot.slane %v1566, %v1593
      %v1595 = vcombine.high %v1573, %v1573
      %v1596 = vcombine.high %v1580, %v1580
      %v1597 = vcombine.high %v1587, %v1587
      %v1598 = vcombine.high %v1594, %v1594
      %v1599 = vcombine.high %v697, %v697
      %v1601 = vunpack.c.l.s4 1966171168
      %v1602 = vunpack.c.0.s8 %v1601
      %v1603 = vlaneseq
      %v1604 = vshrl.u32 %v1603, 7
      %v1605 = vsub.s32 %v1602, %v1604
      %v1606 = vrot.slane %v697, %v1605
      %v1608 = vunpack.c.l.s4 1966171168
      %v1609 = vunpack.c.0.s8 %v1608
      %v1610 = vlaneseq
      %v1611 = vshrl.u32 %v1610, 7
      %v1612 = vsub.s32 %v1609, %v1611
      %v1613 = vrot.slane %v1599, %v1612
      %v1614 = vcombine.high %v1606, %v1606
      %v1615 = vcombine.high %v1613, %v1613
      %v1617 = vunpack.c.l.s4 1966171168
      %v1618 = vunpack.c.0.s8 %v1617
      %v1619 = vlaneseq
      %v1620 = vshrl.u32 %v1619, 7
      %v1621 = vsub.s32 %v1618, %v1620
      %v1622 = vrot.slane %v1606, %v1621
      %v1624 = vunpack.c.l.s4 1966171168
      %v1625 = vunpack.c.0.s8 %v1624
      %v1626 = vlaneseq
      %v1627 = vshrl.u32 %v1626, 7
      %v1628 = vsub.s32 %v1625, %v1627
      %v1629 = vrot.slane %v1613, %v1628
      %v1631 = vunpack.c.l.s4 1966171168
      %v1632 = vunpack.c.0.s8 %v1631
      %v1633 = vlaneseq
      %v1634 = vshrl.u32 %v1633, 7
      %v1635 = vsub.s32 %v1632, %v1634
      %v1636 = vrot.slane %v1614, %v1635
      %v1638 = vunpack.c.l.s4 1966171168
      %v1639 = vunpack.c.0.s8 %v1638
      %v1640 = vlaneseq
      %v1641 = vshrl.u32 %v1640, 7
      %v1642 = vsub.s32 %v1639, %v1641
      %v1643 = vrot.slane %v1615, %v1642
      %v1644 = vcombine.high %v1622, %v1622
      %v1645 = vcombine.high %v1629, %v1629
      %v1646 = vcombine.high %v1636, %v1636
      %v1647 = vcombine.high %v1643, %v1643
      %v1648 = vcombine.high %v702, %v702
      %v1650 = vunpack.c.l.s4 1966171168
      %v1651 = vunpack.c.0.s8 %v1650
      %v1652 = vlaneseq
      %v1653 = vshrl.u32 %v1652, 7
      %v1654 = vsub.s32 %v1651, %v1653
      %v1655 = vrot.slane %v702, %v1654
      %v1657 = vunpack.c.l.s4 1966171168
      %v1658 = vunpack.c.0.s8 %v1657
      %v1659 = vlaneseq
      %v1660 = vshrl.u32 %v1659, 7
      %v1661 = vsub.s32 %v1658, %v1660
      %v1662 = vrot.slane %v1648, %v1661
      %v1663 = vcombine.high %v1655, %v1655
      %v1664 = vcombine.high %v1662, %v1662
      %v1666 = vunpack.c.l.s4 1966171168
      %v1667 = vunpack.c.0.s8 %v1666
      %v1668 = vlaneseq
      %v1669 = vshrl.u32 %v1668, 7
      %v1670 = vsub.s32 %v1667, %v1669
      %v1671 = vrot.slane %v1655, %v1670
      %v1673 = vunpack.c.l.s4 1966171168
      %v1674 = vunpack.c.0.s8 %v1673
      %v1675 = vlaneseq
      %v1676 = vshrl.u32 %v1675, 7
      %v1677 = vsub.s32 %v1674, %v1676
      %v1678 = vrot.slane %v1662, %v1677
      %v1680 = vunpack.c.l.s4 1966171168
      %v1681 = vunpack.c.0.s8 %v1680
      %v1682 = vlaneseq
      %v1683 = vshrl.u32 %v1682, 7
      %v1684 = vsub.s32 %v1681, %v1683
      %v1685 = vrot.slane %v1663, %v1684
      %v1687 = vunpack.c.l.s4 1966171168
      %v1688 = vunpack.c.0.s8 %v1687
      %v1689 = vlaneseq
      %v1690 = vshrl.u32 %v1689, 7
      %v1691 = vsub.s32 %v1688, %v1690
      %v1692 = vrot.slane %v1664, %v1691
      %v1693 = vcombine.high %v1671, %v1671
      %v1694 = vcombine.high %v1678, %v1678
      %v1695 = vcombine.high %v1685, %v1685
      %v1696 = vcombine.high %v1692, %v1692
      %v1697 = vcombine.high %v707, %v707
      %v1699 = vunpack.c.l.s4 1966171168
      %v1700 = vunpack.c.0.s8 %v1699
      %v1701 = vlaneseq
      %v1702 = vshrl.u32 %v1701, 7
      %v1703 = vsub.s32 %v1700, %v1702
      %v1704 = vrot.slane %v707, %v1703
      %v1706 = vunpack.c.l.s4 1966171168
      %v1707 = vunpack.c.0.s8 %v1706
      %v1708 = vlaneseq
      %v1709 = vshrl.u32 %v1708, 7
      %v1710 = vsub.s32 %v1707, %v1709
      %v1711 = vrot.slane %v1697, %v1710
      %v1712 = vcombine.high %v1704, %v1704
      %v1713 = vcombine.high %v1711, %v1711
      %v1715 = vunpack.c.l.s4 1966171168
      %v1716 = vunpack.c.0.s8 %v1715
      %v1717 = vlaneseq
      %v1718 = vshrl.u32 %v1717, 7
      %v1719 = vsub.s32 %v1716, %v1718
      %v1720 = vrot.slane %v1704, %v1719
      %v1722 = vunpack.c.l.s4 1966171168
      %v1723 = vunpack.c.0.s8 %v1722
      %v1724 = vlaneseq
      %v1725 = vshrl.u32 %v1724, 7
      %v1726 = vsub.s32 %v1723, %v1725
      %v1727 = vrot.slane %v1711, %v1726
      %v1729 = vunpack.c.l.s4 1966171168
      %v1730 = vunpack.c.0.s8 %v1729
      %v1731 = vlaneseq
      %v1732 = vshrl.u32 %v1731, 7
      %v1733 = vsub.s32 %v1730, %v1732
      %v1734 = vrot.slane %v1712, %v1733
      %v1736 = vunpack.c.l.s4 1966171168
      %v1737 = vunpack.c.0.s8 %v1736
      %v1738 = vlaneseq
      %v1739 = vshrl.u32 %v1738, 7
      %v1740 = vsub.s32 %v1737, %v1739
      %v1741 = vrot.slane %v1713, %v1740
      %v1742 = vcombine.high %v1720, %v1720
      %v1743 = vcombine.high %v1727, %v1727
      %v1744 = vcombine.high %v1734, %v1734
      %v1745 = vcombine.high %v1741, %v1741
      %v1746 = vcombine.high %v712, %v712
      %v1748 = vunpack.c.l.s4 1966171168
      %v1749 = vunpack.c.0.s8 %v1748
      %v1750 = vlaneseq
      %v1751 = vshrl.u32 %v1750, 7
      %v1752 = vsub.s32 %v1749, %v1751
      %v1753 = vrot.slane %v712, %v1752
      %v1755 = vunpack.c.l.s4 1966171168
      %v1756 = vunpack.c.0.s8 %v1755
      %v1757 = vlaneseq
      %v1758 = vshrl.u32 %v1757, 7
      %v1759 = vsub.s32 %v1756, %v1758
      %v1760 = vrot.slane %v1746, %v1759
      %v1761 = vcombine.high %v1753, %v1753
      %v1762 = vcombine.high %v1760, %v1760
      %v1764 = vunpack.c.l.s4 1966171168
      %v1765 = vunpack.c.0.s8 %v1764
      %v1766 = vlaneseq
      %v1767 = vshrl.u32 %v1766, 7
      %v1768 = vsub.s32 %v1765, %v1767
      %v1769 = vrot.slane %v1753, %v1768
      %v1771 = vunpack.c.l.s4 1966171168
      %v1772 = vunpack.c.0.s8 %v1771
      %v1773 = vlaneseq
      %v1774 = vshrl.u32 %v1773, 7
      %v1775 = vsub.s32 %v1772, %v1774
      %v1776 = vrot.slane %v1760, %v1775
      %v1778 = vunpack.c.l.s4 1966171168
      %v1779 = vunpack.c.0.s8 %v1778
      %v1780 = vlaneseq
      %v1781 = vshrl.u32 %v1780, 7
      %v1782 = vsub.s32 %v1779, %v1781
      %v1783 = vrot.slane %v1761, %v1782
      %v1785 = vunpack.c.l.s4 1966171168
      %v1786 = vunpack.c.0.s8 %v1785
      %v1787 = vlaneseq
      %v1788 = vshrl.u32 %v1787, 7
      %v1789 = vsub.s32 %v1786, %v1788
      %v1790 = vrot.slane %v1762, %v1789
      %v1791 = vcombine.high %v1769, %v1769
      %v1792 = vcombine.high %v1776, %v1776
      %v1793 = vcombine.high %v1783, %v1783
      %v1794 = vcombine.high %v1790, %v1790
      %v1795 = vcombine.high %v717, %v717
      %v1797 = vunpack.c.l.s4 1966171168
      %v1798 = vunpack.c.0.s8 %v1797
      %v1799 = vlaneseq
      %v1800 = vshrl.u32 %v1799, 7
      %v1801 = vsub.s32 %v1798, %v1800
      %v1802 = vrot.slane %v717, %v1801
      %v1804 = vunpack.c.l.s4 1966171168
      %v1805 = vunpack.c.0.s8 %v1804
      %v1806 = vlaneseq
      %v1807 = vshrl.u32 %v1806, 7
      %v1808 = vsub.s32 %v1805, %v1807
      %v1809 = vrot.slane %v1795, %v1808
      %v1810 = vcombine.high %v1802, %v1802
      %v1811 = vcombine.high %v1809, %v1809
      %v1813 = vunpack.c.l.s4 1966171168
      %v1814 = vunpack.c.0.s8 %v1813
      %v1815 = vlaneseq
      %v1816 = vshrl.u32 %v1815, 7
      %v1817 = vsub.s32 %v1814, %v1816
      %v1818 = vrot.slane %v1802, %v1817
      %v1820 = vunpack.c.l.s4 1966171168
      %v1821 = vunpack.c.0.s8 %v1820
      %v1822 = vlaneseq
      %v1823 = vshrl.u32 %v1822, 7
      %v1824 = vsub.s32 %v1821, %v1823
      %v1825 = vrot.slane %v1809, %v1824
      %v1827 = vunpack.c.l.s4 1966171168
      %v1828 = vunpack.c.0.s8 %v1827
      %v1829 = vlaneseq
      %v1830 = vshrl.u32 %v1829, 7
      %v1831 = vsub.s32 %v1828, %v1830
      %v1832 = vrot.slane %v1810, %v1831
      %v1834 = vunpack.c.l.s4 1966171168
      %v1835 = vunpack.c.0.s8 %v1834
      %v1836 = vlaneseq
      %v1837 = vshrl.u32 %v1836, 7
      %v1838 = vsub.s32 %v1835, %v1837
      %v1839 = vrot.slane %v1811, %v1838
      %v1840 = vcombine.high %v1818, %v1818
      %v1841 = vcombine.high %v1825, %v1825
      %v1842 = vcombine.high %v1832, %v1832
      %v1843 = vcombine.high %v1839, %v1839
      %v1988 = vcombine.high %v966, %v966
      %v1990 = vunpack.c.l.s4 1966171168
      %v1991 = vunpack.c.0.s8 %v1990
      %v1992 = vlaneseq
      %v1993 = vshrl.u32 %v1992, 7
      %v1994 = vsub.s32 %v1991, %v1993
      %v1995 = vrot.slane %v966, %v1994
      %v1997 = vunpack.c.l.s4 1966171168
      %v1998 = vunpack.c.0.s8 %v1997
      %v1999 = vlaneseq
      %v2000 = vshrl.u32 %v1999, 7
      %v2001 = vsub.s32 %v1998, %v2000
      %v2002 = vrot.slane %v1988, %v2001
      %v2003 = vcombine.high %v1995, %v1995
      %v2004 = vcombine.high %v2002, %v2002
      %v2006 = vunpack.c.l.s4 1966171168
      %v2007 = vunpack.c.0.s8 %v2006
      %v2008 = vlaneseq
      %v2009 = vshrl.u32 %v2008, 7
      %v2010 = vsub.s32 %v2007, %v2009
      %v2011 = vrot.slane %v1995, %v2010
      %v2013 = vunpack.c.l.s4 1966171168
      %v2014 = vunpack.c.0.s8 %v2013
      %v2015 = vlaneseq
      %v2016 = vshrl.u32 %v2015, 7
      %v2017 = vsub.s32 %v2014, %v2016
      %v2018 = vrot.slane %v2002, %v2017
      %v2020 = vunpack.c.l.s4 1966171168
      %v2021 = vunpack.c.0.s8 %v2020
      %v2022 = vlaneseq
      %v2023 = vshrl.u32 %v2022, 7
      %v2024 = vsub.s32 %v2021, %v2023
      %v2025 = vrot.slane %v2003, %v2024
      %v2027 = vunpack.c.l.s4 1966171168
      %v2028 = vunpack.c.0.s8 %v2027
      %v2029 = vlaneseq
      %v2030 = vshrl.u32 %v2029, 7
      %v2031 = vsub.s32 %v2028, %v2030
      %v2032 = vrot.slane %v2004, %v2031
      %v2033 = vcombine.high %v2011, %v2011
      %v2034 = vcombine.high %v2018, %v2018
      %v2035 = vcombine.high %v2025, %v2025
      %v2036 = vcombine.high %v2032, %v2032
      %v2037 = vcombine.high %v971, %v971
      %v2039 = vunpack.c.l.s4 1966171168
      %v2040 = vunpack.c.0.s8 %v2039
      %v2041 = vlaneseq
      %v2042 = vshrl.u32 %v2041, 7
      %v2043 = vsub.s32 %v2040, %v2042
      %v2044 = vrot.slane %v971, %v2043
      %v2046 = vunpack.c.l.s4 1966171168
      %v2047 = vunpack.c.0.s8 %v2046
      %v2048 = vlaneseq
      %v2049 = vshrl.u32 %v2048, 7
      %v2050 = vsub.s32 %v2047, %v2049
      %v2051 = vrot.slane %v2037, %v2050
      %v2052 = vcombine.high %v2044, %v2044
      %v2053 = vcombine.high %v2051, %v2051
      %v2055 = vunpack.c.l.s4 1966171168
      %v2056 = vunpack.c.0.s8 %v2055
      %v2057 = vlaneseq
      %v2058 = vshrl.u32 %v2057, 7
      %v2059 = vsub.s32 %v2056, %v2058
      %v2060 = vrot.slane %v2044, %v2059
      %v2062 = vunpack.c.l.s4 1966171168
      %v2063 = vunpack.c.0.s8 %v2062
      %v2064 = vlaneseq
      %v2065 = vshrl.u32 %v2064, 7
      %v2066 = vsub.s32 %v2063, %v2065
      %v2067 = vrot.slane %v2051, %v2066
      %v2069 = vunpack.c.l.s4 1966171168
      %v2070 = vunpack.c.0.s8 %v2069
      %v2071 = vlaneseq
      %v2072 = vshrl.u32 %v2071, 7
      %v2073 = vsub.s32 %v2070, %v2072
      %v2074 = vrot.slane %v2052, %v2073
      %v2076 = vunpack.c.l.s4 1966171168
      %v2077 = vunpack.c.0.s8 %v2076
      %v2078 = vlaneseq
      %v2079 = vshrl.u32 %v2078, 7
      %v2080 = vsub.s32 %v2077, %v2079
      %v2081 = vrot.slane %v2053, %v2080
      %v2082 = vcombine.high %v2060, %v2060
      %v2083 = vcombine.high %v2067, %v2067
      %v2084 = vcombine.high %v2074, %v2074
      %v2085 = vcombine.high %v2081, %v2081
      %v2086 = vcombine.high %v976, %v976
      %v2088 = vunpack.c.l.s4 1966171168
      %v2089 = vunpack.c.0.s8 %v2088
      %v2090 = vlaneseq
      %v2091 = vshrl.u32 %v2090, 7
      %v2092 = vsub.s32 %v2089, %v2091
      %v2093 = vrot.slane %v976, %v2092
      %v2095 = vunpack.c.l.s4 1966171168
      %v2096 = vunpack.c.0.s8 %v2095
      %v2097 = vlaneseq
      %v2098 = vshrl.u32 %v2097, 7
      %v2099 = vsub.s32 %v2096, %v2098
      %v2100 = vrot.slane %v2086, %v2099
      %v2101 = vcombine.high %v2093, %v2093
      %v2102 = vcombine.high %v2100, %v2100
      %v2104 = vunpack.c.l.s4 1966171168
      %v2105 = vunpack.c.0.s8 %v2104
      %v2106 = vlaneseq
      %v2107 = vshrl.u32 %v2106, 7
      %v2108 = vsub.s32 %v2105, %v2107
      %v2109 = vrot.slane %v2093, %v2108
      %v2111 = vunpack.c.l.s4 1966171168
      %v2112 = vunpack.c.0.s8 %v2111
      %v2113 = vlaneseq
      %v2114 = vshrl.u32 %v2113, 7
      %v2115 = vsub.s32 %v2112, %v2114
      %v2116 = vrot.slane %v2100, %v2115
      %v2118 = vunpack.c.l.s4 1966171168
      %v2119 = vunpack.c.0.s8 %v2118
      %v2120 = vlaneseq
      %v2121 = vshrl.u32 %v2120, 7
      %v2122 = vsub.s32 %v2119, %v2121
      %v2123 = vrot.slane %v2101, %v2122
      %v2125 = vunpack.c.l.s4 1966171168
      %v2126 = vunpack.c.0.s8 %v2125
      %v2127 = vlaneseq
      %v2128 = vshrl.u32 %v2127, 7
      %v2129 = vsub.s32 %v2126, %v2128
      %v2130 = vrot.slane %v2102, %v2129
      %v2131 = vcombine.high %v2109, %v2109
      %v2132 = vcombine.high %v2116, %v2116
      %v2133 = vcombine.high %v2123, %v2123
      %v2134 = vcombine.high %v2130, %v2130
      %v2135 = vcombine.high %v981, %v981
      %v2137 = vunpack.c.l.s4 1966171168
      %v2138 = vunpack.c.0.s8 %v2137
      %v2139 = vlaneseq
      %v2140 = vshrl.u32 %v2139, 7
      %v2141 = vsub.s32 %v2138, %v2140
      %v2142 = vrot.slane %v981, %v2141
      %v2144 = vunpack.c.l.s4 1966171168
      %v2145 = vunpack.c.0.s8 %v2144
      %v2146 = vlaneseq
      %v2147 = vshrl.u32 %v2146, 7
      %v2148 = vsub.s32 %v2145, %v2147
      %v2149 = vrot.slane %v2135, %v2148
      %v2150 = vcombine.high %v2142, %v2142
      %v2151 = vcombine.high %v2149, %v2149
      %v2153 = vunpack.c.l.s4 1966171168
      %v2154 = vunpack.c.0.s8 %v2153
      %v2155 = vlaneseq
      %v2156 = vshrl.u32 %v2155, 7
      %v2157 = vsub.s32 %v2154, %v2156
      %v2158 = vrot.slane %v2142, %v2157
      %v2160 = vunpack.c.l.s4 1966171168
      %v2161 = vunpack.c.0.s8 %v2160
      %v2162 = vlaneseq
      %v2163 = vshrl.u32 %v2162, 7
      %v2164 = vsub.s32 %v2161, %v2163
      %v2165 = vrot.slane %v2149, %v2164
      %v2167 = vunpack.c.l.s4 1966171168
      %v2168 = vunpack.c.0.s8 %v2167
      %v2169 = vlaneseq
      %v2170 = vshrl.u32 %v2169, 7
      %v2171 = vsub.s32 %v2168, %v2170
      %v2172 = vrot.slane %v2150, %v2171
      %v2174 = vunpack.c.l.s4 1966171168
      %v2175 = vunpack.c.0.s8 %v2174
      %v2176 = vlaneseq
      %v2177 = vshrl.u32 %v2176, 7
      %v2178 = vsub.s32 %v2175, %v2177
      %v2179 = vrot.slane %v2151, %v2178
      %v2180 = vcombine.high %v2158, %v2158
      %v2181 = vcombine.high %v2165, %v2165
      %v2182 = vcombine.high %v2172, %v2172
      %v2183 = vcombine.high %v2179, %v2179
      %v2184 = vcombine.high %v986, %v986
      %v2186 = vunpack.c.l.s4 1966171168
      %v2187 = vunpack.c.0.s8 %v2186
      %v2188 = vlaneseq
      %v2189 = vshrl.u32 %v2188, 7
      %v2190 = vsub.s32 %v2187, %v2189
      %v2191 = vrot.slane %v986, %v2190
      %v2193 = vunpack.c.l.s4 1966171168
      %v2194 = vunpack.c.0.s8 %v2193
      %v2195 = vlaneseq
      %v2196 = vshrl.u32 %v2195, 7
      %v2197 = vsub.s32 %v2194, %v2196
      %v2198 = vrot.slane %v2184, %v2197
      %v2199 = vcombine.high %v2191, %v2191
      %v2200 = vcombine.high %v2198, %v2198
      %v2202 = vunpack.c.l.s4 1966171168
      %v2203 = vunpack.c.0.s8 %v2202
      %v2204 = vlaneseq
      %v2205 = vshrl.u32 %v2204, 7
      %v2206 = vsub.s32 %v2203, %v2205
      %v2207 = vrot.slane %v2191, %v2206
      %v2209 = vunpack.c.l.s4 1966171168
      %v2210 = vunpack.c.0.s8 %v2209
      %v2211 = vlaneseq
      %v2212 = vshrl.u32 %v2211, 7
      %v2213 = vsub.s32 %v2210, %v2212
      %v2214 = vrot.slane %v2198, %v2213
      %v2216 = vunpack.c.l.s4 1966171168
      %v2217 = vunpack.c.0.s8 %v2216
      %v2218 = vlaneseq
      %v2219 = vshrl.u32 %v2218, 7
      %v2220 = vsub.s32 %v2217, %v2219
      %v2221 = vrot.slane %v2199, %v2220
      %v2223 = vunpack.c.l.s4 1966171168
      %v2224 = vunpack.c.0.s8 %v2223
      %v2225 = vlaneseq
      %v2226 = vshrl.u32 %v2225, 7
      %v2227 = vsub.s32 %v2224, %v2226
      %v2228 = vrot.slane %v2200, %v2227
      %v2229 = vcombine.high %v2207, %v2207
      %v2230 = vcombine.high %v2214, %v2214
      %v2231 = vcombine.high %v2221, %v2221
      %v2232 = vcombine.high %v2228, %v2228
      %v2233 = vcombine.high %v991, %v991
      %v2235 = vunpack.c.l.s4 1966171168
      %v2236 = vunpack.c.0.s8 %v2235
      %v2237 = vlaneseq
      %v2238 = vshrl.u32 %v2237, 7
      %v2239 = vsub.s32 %v2236, %v2238
      %v2240 = vrot.slane %v991, %v2239
      %v2242 = vunpack.c.l.s4 1966171168
      %v2243 = vunpack.c.0.s8 %v2242
      %v2244 = vlaneseq
      %v2245 = vshrl.u32 %v2244, 7
      %v2246 = vsub.s32 %v2243, %v2245
      %v2247 = vrot.slane %v2233, %v2246
      %v2248 = vcombine.high %v2240, %v2240
      %v2249 = vcombine.high %v2247, %v2247
      %v2251 = vunpack.c.l.s4 1966171168
      %v2252 = vunpack.c.0.s8 %v2251
      %v2253 = vlaneseq
      %v2254 = vshrl.u32 %v2253, 7
      %v2255 = vsub.s32 %v2252, %v2254
      %v2256 = vrot.slane %v2240, %v2255
      %v2258 = vunpack.c.l.s4 1966171168
      %v2259 = vunpack.c.0.s8 %v2258
      %v2260 = vlaneseq
      %v2261 = vshrl.u32 %v2260, 7
      %v2262 = vsub.s32 %v2259, %v2261
      %v2263 = vrot.slane %v2247, %v2262
      %v2265 = vunpack.c.l.s4 1966171168
      %v2266 = vunpack.c.0.s8 %v2265
      %v2267 = vlaneseq
      %v2268 = vshrl.u32 %v2267, 7
      %v2269 = vsub.s32 %v2266, %v2268
      %v2270 = vrot.slane %v2248, %v2269
      %v2272 = vunpack.c.l.s4 1966171168
      %v2273 = vunpack.c.0.s8 %v2272
      %v2274 = vlaneseq
      %v2275 = vshrl.u32 %v2274, 7
      %v2276 = vsub.s32 %v2273, %v2275
      %v2277 = vrot.slane %v2249, %v2276
      %v2278 = vcombine.high %v2256, %v2256
      %v2279 = vcombine.high %v2263, %v2263
      %v2280 = vcombine.high %v2270, %v2270
      %v2281 = vcombine.high %v2277, %v2277
      %v2282 = vcombine.high %v996, %v996
      %v2284 = vunpack.c.l.s4 1966171168
      %v2285 = vunpack.c.0.s8 %v2284
      %v2286 = vlaneseq
      %v2287 = vshrl.u32 %v2286, 7
      %v2288 = vsub.s32 %v2285, %v2287
      %v2289 = vrot.slane %v996, %v2288
      %v2291 = vunpack.c.l.s4 1966171168
      %v2292 = vunpack.c.0.s8 %v2291
      %v2293 = vlaneseq
      %v2294 = vshrl.u32 %v2293, 7
      %v2295 = vsub.s32 %v2292, %v2294
      %v2296 = vrot.slane %v2282, %v2295
      %v2297 = vcombine.high %v2289, %v2289
      %v2298 = vcombine.high %v2296, %v2296
      %v2300 = vunpack.c.l.s4 1966171168
      %v2301 = vunpack.c.0.s8 %v2300
      %v2302 = vlaneseq
      %v2303 = vshrl.u32 %v2302, 7
      %v2304 = vsub.s32 %v2301, %v2303
      %v2305 = vrot.slane %v2289, %v2304
      %v2307 = vunpack.c.l.s4 1966171168
      %v2308 = vunpack.c.0.s8 %v2307
      %v2309 = vlaneseq
      %v2310 = vshrl.u32 %v2309, 7
      %v2311 = vsub.s32 %v2308, %v2310
      %v2312 = vrot.slane %v2296, %v2311
      %v2314 = vunpack.c.l.s4 1966171168
      %v2315 = vunpack.c.0.s8 %v2314
      %v2316 = vlaneseq
      %v2317 = vshrl.u32 %v2316, 7
      %v2318 = vsub.s32 %v2315, %v2317
      %v2319 = vrot.slane %v2297, %v2318
      %v2321 = vunpack.c.l.s4 1966171168
      %v2322 = vunpack.c.0.s8 %v2321
      %v2323 = vlaneseq
      %v2324 = vshrl.u32 %v2323, 7
      %v2325 = vsub.s32 %v2322, %v2324
      %v2326 = vrot.slane %v2298, %v2325
      %v2327 = vcombine.high %v2305, %v2305
      %v2328 = vcombine.high %v2312, %v2312
      %v2329 = vcombine.high %v2319, %v2319
      %v2330 = vcombine.high %v2326, %v2326
      %v2331 = vcombine.high %v1001, %v1001
      %v2333 = vunpack.c.l.s4 1966171168
      %v2334 = vunpack.c.0.s8 %v2333
      %v2335 = vlaneseq
      %v2336 = vshrl.u32 %v2335, 7
      %v2337 = vsub.s32 %v2334, %v2336
      %v2338 = vrot.slane %v1001, %v2337
      %v2340 = vunpack.c.l.s4 1966171168
      %v2341 = vunpack.c.0.s8 %v2340
      %v2342 = vlaneseq
      %v2343 = vshrl.u32 %v2342, 7
      %v2344 = vsub.s32 %v2341, %v2343
      %v2345 = vrot.slane %v2331, %v2344
      %v2346 = vcombine.high %v2338, %v2338
      %v2347 = vcombine.high %v2345, %v2345
      %v2349 = vunpack.c.l.s4 1966171168
      %v2350 = vunpack.c.0.s8 %v2349
      %v2351 = vlaneseq
      %v2352 = vshrl.u32 %v2351, 7
      %v2353 = vsub.s32 %v2350, %v2352
      %v2354 = vrot.slane %v2338, %v2353
      %v2356 = vunpack.c.l.s4 1966171168
      %v2357 = vunpack.c.0.s8 %v2356
      %v2358 = vlaneseq
      %v2359 = vshrl.u32 %v2358, 7
      %v2360 = vsub.s32 %v2357, %v2359
      %v2361 = vrot.slane %v2345, %v2360
      %v2363 = vunpack.c.l.s4 1966171168
      %v2364 = vunpack.c.0.s8 %v2363
      %v2365 = vlaneseq
      %v2366 = vshrl.u32 %v2365, 7
      %v2367 = vsub.s32 %v2364, %v2366
      %v2368 = vrot.slane %v2346, %v2367
      %v2370 = vunpack.c.l.s4 1966171168
      %v2371 = vunpack.c.0.s8 %v2370
      %v2372 = vlaneseq
      %v2373 = vshrl.u32 %v2372, 7
      %v2374 = vsub.s32 %v2371, %v2373
      %v2375 = vrot.slane %v2347, %v2374
      %v2376 = vcombine.high %v2354, %v2354
      %v2377 = vcombine.high %v2361, %v2361
      %v2378 = vcombine.high %v2368, %v2368
      %v2379 = vcombine.high %v2375, %v2375
      %v2380 = vcombine.high %v1006, %v1006
      %v2382 = vunpack.c.l.s4 1966171168
      %v2383 = vunpack.c.0.s8 %v2382
      %v2384 = vlaneseq
      %v2385 = vshrl.u32 %v2384, 7
      %v2386 = vsub.s32 %v2383, %v2385
      %v2387 = vrot.slane %v1006, %v2386
      %v2389 = vunpack.c.l.s4 1966171168
      %v2390 = vunpack.c.0.s8 %v2389
      %v2391 = vlaneseq
      %v2392 = vshrl.u32 %v2391, 7
      %v2393 = vsub.s32 %v2390, %v2392
      %v2394 = vrot.slane %v2380, %v2393
      %v2395 = vcombine.high %v2387, %v2387
      %v2396 = vcombine.high %v2394, %v2394
      %v2398 = vunpack.c.l.s4 1966171168
      %v2399 = vunpack.c.0.s8 %v2398
      %v2400 = vlaneseq
      %v2401 = vshrl.u32 %v2400, 7
      %v2402 = vsub.s32 %v2399, %v2401
      %v2403 = vrot.slane %v2387, %v2402
      %v2405 = vunpack.c.l.s4 1966171168
      %v2406 = vunpack.c.0.s8 %v2405
      %v2407 = vlaneseq
      %v2408 = vshrl.u32 %v2407, 7
      %v2409 = vsub.s32 %v2406, %v2408
      %v2410 = vrot.slane %v2394, %v2409
      %v2412 = vunpack.c.l.s4 1966171168
      %v2413 = vunpack.c.0.s8 %v2412
      %v2414 = vlaneseq
      %v2415 = vshrl.u32 %v2414, 7
      %v2416 = vsub.s32 %v2413, %v2415
      %v2417 = vrot.slane %v2395, %v2416
      %v2419 = vunpack.c.l.s4 1966171168
      %v2420 = vunpack.c.0.s8 %v2419
      %v2421 = vlaneseq
      %v2422 = vshrl.u32 %v2421, 7
      %v2423 = vsub.s32 %v2420, %v2422
      %v2424 = vrot.slane %v2396, %v2423
      %v2425 = vcombine.high %v2403, %v2403
      %v2426 = vcombine.high %v2410, %v2410
      %v2427 = vcombine.high %v2417, %v2417
      %v2428 = vcombine.high %v2424, %v2424
      %v2429 = vcombine.high %v1011, %v1011
      %v2431 = vunpack.c.l.s4 1966171168
      %v2432 = vunpack.c.0.s8 %v2431
      %v2433 = vlaneseq
      %v2434 = vshrl.u32 %v2433, 7
      %v2435 = vsub.s32 %v2432, %v2434
      %v2436 = vrot.slane %v1011, %v2435
      %v2438 = vunpack.c.l.s4 1966171168
      %v2439 = vunpack.c.0.s8 %v2438
      %v2440 = vlaneseq
      %v2441 = vshrl.u32 %v2440, 7
      %v2442 = vsub.s32 %v2439, %v2441
      %v2443 = vrot.slane %v2429, %v2442
      %v2444 = vcombine.high %v2436, %v2436
      %v2445 = vcombine.high %v2443, %v2443
      %v2447 = vunpack.c.l.s4 1966171168
      %v2448 = vunpack.c.0.s8 %v2447
      %v2449 = vlaneseq
      %v2450 = vshrl.u32 %v2449, 7
      %v2451 = vsub.s32 %v2448, %v2450
      %v2452 = vrot.slane %v2436, %v2451
      %v2454 = vunpack.c.l.s4 1966171168
      %v2455 = vunpack.c.0.s8 %v2454
      %v2456 = vlaneseq
      %v2457 = vshrl.u32 %v2456, 7
      %v2458 = vsub.s32 %v2455, %v2457
      %v2459 = vrot.slane %v2443, %v2458
      %v2461 = vunpack.c.l.s4 1966171168
      %v2462 = vunpack.c.0.s8 %v2461
      %v2463 = vlaneseq
      %v2464 = vshrl.u32 %v2463, 7
      %v2465 = vsub.s32 %v2462, %v2464
      %v2466 = vrot.slane %v2444, %v2465
      %v2468 = vunpack.c.l.s4 1966171168
      %v2469 = vunpack.c.0.s8 %v2468
      %v2470 = vlaneseq
      %v2471 = vshrl.u32 %v2470, 7
      %v2472 = vsub.s32 %v2469, %v2471
      %v2473 = vrot.slane %v2445, %v2472
      %v2474 = vcombine.high %v2452, %v2452
      %v2475 = vcombine.high %v2459, %v2459
      %v2476 = vcombine.high %v2466, %v2466
      %v2477 = vcombine.high %v2473, %v2473
      %v2478 = vcombine.high %v1016, %v1016
      %v2480 = vunpack.c.l.s4 1966171168
      %v2481 = vunpack.c.0.s8 %v2480
      %v2482 = vlaneseq
      %v2483 = vshrl.u32 %v2482, 7
      %v2484 = vsub.s32 %v2481, %v2483
      %v2485 = vrot.slane %v1016, %v2484
      %v2487 = vunpack.c.l.s4 1966171168
      %v2488 = vunpack.c.0.s8 %v2487
      %v2489 = vlaneseq
      %v2490 = vshrl.u32 %v2489, 7
      %v2491 = vsub.s32 %v2488, %v2490
      %v2492 = vrot.slane %v2478, %v2491
      %v2493 = vcombine.high %v2485, %v2485
      %v2494 = vcombine.high %v2492, %v2492
      %v2496 = vunpack.c.l.s4 1966171168
      %v2497 = vunpack.c.0.s8 %v2496
      %v2498 = vlaneseq
      %v2499 = vshrl.u32 %v2498, 7
      %v2500 = vsub.s32 %v2497, %v2499
      %v2501 = vrot.slane %v2485, %v2500
      %v2503 = vunpack.c.l.s4 1966171168
      %v2504 = vunpack.c.0.s8 %v2503
      %v2505 = vlaneseq
      %v2506 = vshrl.u32 %v2505, 7
      %v2507 = vsub.s32 %v2504, %v2506
      %v2508 = vrot.slane %v2492, %v2507
      %v2510 = vunpack.c.l.s4 1966171168
      %v2511 = vunpack.c.0.s8 %v2510
      %v2512 = vlaneseq
      %v2513 = vshrl.u32 %v2512, 7
      %v2514 = vsub.s32 %v2511, %v2513
      %v2515 = vrot.slane %v2493, %v2514
      %v2517 = vunpack.c.l.s4 1966171168
      %v2518 = vunpack.c.0.s8 %v2517
      %v2519 = vlaneseq
      %v2520 = vshrl.u32 %v2519, 7
      %v2521 = vsub.s32 %v2518, %v2520
      %v2522 = vrot.slane %v2494, %v2521
      %v2523 = vcombine.high %v2501, %v2501
      %v2524 = vcombine.high %v2508, %v2508
      %v2525 = vcombine.high %v2515, %v2515
      %v2526 = vcombine.high %v2522, %v2522
      %v2527 = vcombine.high %v1021, %v1021
      %v2529 = vunpack.c.l.s4 1966171168
      %v2530 = vunpack.c.0.s8 %v2529
      %v2531 = vlaneseq
      %v2532 = vshrl.u32 %v2531, 7
      %v2533 = vsub.s32 %v2530, %v2532
      %v2534 = vrot.slane %v1021, %v2533
      %v2536 = vunpack.c.l.s4 1966171168
      %v2537 = vunpack.c.0.s8 %v2536
      %v2538 = vlaneseq
      %v2539 = vshrl.u32 %v2538, 7
      %v2540 = vsub.s32 %v2537, %v2539
      %v2541 = vrot.slane %v2527, %v2540
      %v2542 = vcombine.high %v2534, %v2534
      %v2543 = vcombine.high %v2541, %v2541
      %v2545 = vunpack.c.l.s4 1966171168
      %v2546 = vunpack.c.0.s8 %v2545
      %v2547 = vlaneseq
      %v2548 = vshrl.u32 %v2547, 7
      %v2549 = vsub.s32 %v2546, %v2548
      %v2550 = vrot.slane %v2534, %v2549
      %v2552 = vunpack.c.l.s4 1966171168
      %v2553 = vunpack.c.0.s8 %v2552
      %v2554 = vlaneseq
      %v2555 = vshrl.u32 %v2554, 7
      %v2556 = vsub.s32 %v2553, %v2555
      %v2557 = vrot.slane %v2541, %v2556
      %v2559 = vunpack.c.l.s4 1966171168
      %v2560 = vunpack.c.0.s8 %v2559
      %v2561 = vlaneseq
      %v2562 = vshrl.u32 %v2561, 7
      %v2563 = vsub.s32 %v2560, %v2562
      %v2564 = vrot.slane %v2542, %v2563
      %v2566 = vunpack.c.l.s4 1966171168
      %v2567 = vunpack.c.0.s8 %v2566
      %v2568 = vlaneseq
      %v2569 = vshrl.u32 %v2568, 7
      %v2570 = vsub.s32 %v2567, %v2569
      %v2571 = vrot.slane %v2543, %v2570
      %v2572 = vcombine.high %v2550, %v2550
      %v2573 = vcombine.high %v2557, %v2557
      %v2574 = vcombine.high %v2564, %v2564
      %v2575 = vcombine.high %v2571, %v2571
      %v2576 = vcombine.high %v1026, %v1026
      %v2578 = vunpack.c.l.s4 1966171168
      %v2579 = vunpack.c.0.s8 %v2578
      %v2580 = vlaneseq
      %v2581 = vshrl.u32 %v2580, 7
      %v2582 = vsub.s32 %v2579, %v2581
      %v2583 = vrot.slane %v1026, %v2582
      %v2585 = vunpack.c.l.s4 1966171168
      %v2586 = vunpack.c.0.s8 %v2585
      %v2587 = vlaneseq
      %v2588 = vshrl.u32 %v2587, 7
      %v2589 = vsub.s32 %v2586, %v2588
      %v2590 = vrot.slane %v2576, %v2589
      %v2591 = vcombine.high %v2583, %v2583
      %v2592 = vcombine.high %v2590, %v2590
      %v2594 = vunpack.c.l.s4 1966171168
      %v2595 = vunpack.c.0.s8 %v2594
      %v2596 = vlaneseq
      %v2597 = vshrl.u32 %v2596, 7
      %v2598 = vsub.s32 %v2595, %v2597
      %v2599 = vrot.slane %v2583, %v2598
      %v2601 = vunpack.c.l.s4 1966171168
      %v2602 = vunpack.c.0.s8 %v2601
      %v2603 = vlaneseq
      %v2604 = vshrl.u32 %v2603, 7
      %v2605 = vsub.s32 %v2602, %v2604
      %v2606 = vrot.slane %v2590, %v2605
      %v2608 = vunpack.c.l.s4 1966171168
      %v2609 = vunpack.c.0.s8 %v2608
      %v2610 = vlaneseq
      %v2611 = vshrl.u32 %v2610, 7
      %v2612 = vsub.s32 %v2609, %v2611
      %v2613 = vrot.slane %v2591, %v2612
      %v2615 = vunpack.c.l.s4 1966171168
      %v2616 = vunpack.c.0.s8 %v2615
      %v2617 = vlaneseq
      %v2618 = vshrl.u32 %v2617, 7
      %v2619 = vsub.s32 %v2616, %v2618
      %v2620 = vrot.slane %v2592, %v2619
      %v2621 = vcombine.high %v2599, %v2599
      %v2622 = vcombine.high %v2606, %v2606
      %v2623 = vcombine.high %v2613, %v2613
      %v2624 = vcombine.high %v2620, %v2620
      %v2625 = vcombine.high %v1031, %v1031
      %v2627 = vunpack.c.l.s4 1966171168
      %v2628 = vunpack.c.0.s8 %v2627
      %v2629 = vlaneseq
      %v2630 = vshrl.u32 %v2629, 7
      %v2631 = vsub.s32 %v2628, %v2630
      %v2632 = vrot.slane %v1031, %v2631
      %v2634 = vunpack.c.l.s4 1966171168
      %v2635 = vunpack.c.0.s8 %v2634
      %v2636 = vlaneseq
      %v2637 = vshrl.u32 %v2636, 7
      %v2638 = vsub.s32 %v2635, %v2637
      %v2639 = vrot.slane %v2625, %v2638
      %v2640 = vcombine.high %v2632, %v2632
      %v2641 = vcombine.high %v2639, %v2639
      %v2643 = vunpack.c.l.s4 1966171168
      %v2644 = vunpack.c.0.s8 %v2643
      %v2645 = vlaneseq
      %v2646 = vshrl.u32 %v2645, 7
      %v2647 = vsub.s32 %v2644, %v2646
      %v2648 = vrot.slane %v2632, %v2647
      %v2650 = vunpack.c.l.s4 1966171168
      %v2651 = vunpack.c.0.s8 %v2650
      %v2652 = vlaneseq
      %v2653 = vshrl.u32 %v2652, 7
      %v2654 = vsub.s32 %v2651, %v2653
      %v2655 = vrot.slane %v2639, %v2654
      %v2657 = vunpack.c.l.s4 1966171168
      %v2658 = vunpack.c.0.s8 %v2657
      %v2659 = vlaneseq
      %v2660 = vshrl.u32 %v2659, 7
      %v2661 = vsub.s32 %v2658, %v2660
      %v2662 = vrot.slane %v2640, %v2661
      %v2664 = vunpack.c.l.s4 1966171168
      %v2665 = vunpack.c.0.s8 %v2664
      %v2666 = vlaneseq
      %v2667 = vshrl.u32 %v2666, 7
      %v2668 = vsub.s32 %v2665, %v2667
      %v2669 = vrot.slane %v2641, %v2668
      %v2670 = vcombine.high %v2648, %v2648
      %v2671 = vcombine.high %v2655, %v2655
      %v2672 = vcombine.high %v2662, %v2662
      %v2673 = vcombine.high %v2669, %v2669
      %v2674 = vcombine.high %v1036, %v1036
      %v2676 = vunpack.c.l.s4 1966171168
      %v2677 = vunpack.c.0.s8 %v2676
      %v2678 = vlaneseq
      %v2679 = vshrl.u32 %v2678, 7
      %v2680 = vsub.s32 %v2677, %v2679
      %v2681 = vrot.slane %v1036, %v2680
      %v2683 = vunpack.c.l.s4 1966171168
      %v2684 = vunpack.c.0.s8 %v2683
      %v2685 = vlaneseq
      %v2686 = vshrl.u32 %v2685, 7
      %v2687 = vsub.s32 %v2684, %v2686
      %v2688 = vrot.slane %v2674, %v2687
      %v2689 = vcombine.high %v2681, %v2681
      %v2690 = vcombine.high %v2688, %v2688
      %v2692 = vunpack.c.l.s4 1966171168
      %v2693 = vunpack.c.0.s8 %v2692
      %v2694 = vlaneseq
      %v2695 = vshrl.u32 %v2694, 7
      %v2696 = vsub.s32 %v2693, %v2695
      %v2697 = vrot.slane %v2681, %v2696
      %v2699 = vunpack.c.l.s4 1966171168
      %v2700 = vunpack.c.0.s8 %v2699
      %v2701 = vlaneseq
      %v2702 = vshrl.u32 %v2701, 7
      %v2703 = vsub.s32 %v2700, %v2702
      %v2704 = vrot.slane %v2688, %v2703
      %v2706 = vunpack.c.l.s4 1966171168
      %v2707 = vunpack.c.0.s8 %v2706
      %v2708 = vlaneseq
      %v2709 = vshrl.u32 %v2708, 7
      %v2710 = vsub.s32 %v2707, %v2709
      %v2711 = vrot.slane %v2689, %v2710
      %v2713 = vunpack.c.l.s4 1966171168
      %v2714 = vunpack.c.0.s8 %v2713
      %v2715 = vlaneseq
      %v2716 = vshrl.u32 %v2715, 7
      %v2717 = vsub.s32 %v2714, %v2716
      %v2718 = vrot.slane %v2690, %v2717
      %v2719 = vcombine.high %v2697, %v2697
      %v2720 = vcombine.high %v2704, %v2704
      %v2721 = vcombine.high %v2711, %v2711
      %v2722 = vcombine.high %v2718, %v2718
      %v2723 = vcombine.high %v1041, %v1041
      %v2725 = vunpack.c.l.s4 1966171168
      %v2726 = vunpack.c.0.s8 %v2725
      %v2727 = vlaneseq
      %v2728 = vshrl.u32 %v2727, 7
      %v2729 = vsub.s32 %v2726, %v2728
      %v2730 = vrot.slane %v1041, %v2729
      %v2732 = vunpack.c.l.s4 1966171168
      %v2733 = vunpack.c.0.s8 %v2732
      %v2734 = vlaneseq
      %v2735 = vshrl.u32 %v2734, 7
      %v2736 = vsub.s32 %v2733, %v2735
      %v2737 = vrot.slane %v2723, %v2736
      %v2738 = vcombine.high %v2730, %v2730
      %v2739 = vcombine.high %v2737, %v2737
      %v2741 = vunpack.c.l.s4 1966171168
      %v2742 = vunpack.c.0.s8 %v2741
      %v2743 = vlaneseq
      %v2744 = vshrl.u32 %v2743, 7
      %v2745 = vsub.s32 %v2742, %v2744
      %v2746 = vrot.slane %v2730, %v2745
      %v2748 = vunpack.c.l.s4 1966171168
      %v2749 = vunpack.c.0.s8 %v2748
      %v2750 = vlaneseq
      %v2751 = vshrl.u32 %v2750, 7
      %v2752 = vsub.s32 %v2749, %v2751
      %v2753 = vrot.slane %v2737, %v2752
      %v2755 = vunpack.c.l.s4 1966171168
      %v2756 = vunpack.c.0.s8 %v2755
      %v2757 = vlaneseq
      %v2758 = vshrl.u32 %v2757, 7
      %v2759 = vsub.s32 %v2756, %v2758
      %v2760 = vrot.slane %v2738, %v2759
      %v2762 = vunpack.c.l.s4 1966171168
      %v2763 = vunpack.c.0.s8 %v2762
      %v2764 = vlaneseq
      %v2765 = vshrl.u32 %v2764, 7
      %v2766 = vsub.s32 %v2763, %v2765
      %v2767 = vrot.slane %v2739, %v2766
      %v2768 = vcombine.high %v2746, %v2746
      %v2769 = vcombine.high %v2753, %v2753
      %v2770 = vcombine.high %v2760, %v2760
      %v2771 = vcombine.high %v2767, %v2767
      %v2772 = vlaneseq
      %v2773 = vshrl.u32 %v2772, 7
      %v2774 = vsub.s32 0, %v2773
      %v2775 = vrot.slane %v2011, %v2774
      %v2776 = vlaneseq
      %v2777 = vshrl.u32 %v2776, 7
      %v2778 = vsub.s32 0, %v2777
      %v2779 = vrot.slane %v2025, %v2778
      %v2780 = vlaneseq
      %v2781 = vshrl.u32 %v2780, 7
      %v2782 = vsub.s32 0, %v2781
      %v2783 = vrot.slane %v2033, %v2782
      %v2784 = vlaneseq
      %v2785 = vshrl.u32 %v2784, 7
      %v2786 = vsub.s32 0, %v2785
      %v2787 = vrot.slane %v2035, %v2786
      %v2788 = vlaneseq
      %v2789 = vshrl.u32 %v2788, 7
      %v2790 = vsub.s32 0, %v2789
      %v2791 = vrot.slane %v2018, %v2790
      %v2792 = vlaneseq
      %v2793 = vshrl.u32 %v2792, 7
      %v2794 = vsub.s32 0, %v2793
      %v2795 = vrot.slane %v2032, %v2794
      %v2796 = vlaneseq
      %v2797 = vshrl.u32 %v2796, 7
      %v2798 = vsub.s32 0, %v2797
      %v2799 = vrot.slane %v2034, %v2798
      %v2800 = vlaneseq
      %v2801 = vshrl.u32 %v2800, 7
      %v2802 = vsub.s32 0, %v2801
      %v2803 = vrot.slane %v2036, %v2802
      %v2804 = vlaneseq
      %v2805 = vshrl.u32 %v2804, 7
      %v2806 = vsub.s32 0, %v2805
      %v2807 = vrot.slane %v2060, %v2806
      %v2808 = vlaneseq
      %v2809 = vshrl.u32 %v2808, 7
      %v2810 = vsub.s32 0, %v2809
      %v2811 = vrot.slane %v2074, %v2810
      %v2812 = vlaneseq
      %v2813 = vshrl.u32 %v2812, 7
      %v2814 = vsub.s32 0, %v2813
      %v2815 = vrot.slane %v2082, %v2814
      %v2816 = vlaneseq
      %v2817 = vshrl.u32 %v2816, 7
      %v2818 = vsub.s32 0, %v2817
      %v2819 = vrot.slane %v2084, %v2818
      %v2820 = vlaneseq
      %v2821 = vshrl.u32 %v2820, 7
      %v2822 = vsub.s32 0, %v2821
      %v2823 = vrot.slane %v2067, %v2822
      %v2824 = vlaneseq
      %v2825 = vshrl.u32 %v2824, 7
      %v2826 = vsub.s32 0, %v2825
      %v2827 = vrot.slane %v2081, %v2826
      %v2828 = vlaneseq
      %v2829 = vshrl.u32 %v2828, 7
      %v2830 = vsub.s32 0, %v2829
      %v2831 = vrot.slane %v2083, %v2830
      %v2832 = vlaneseq
      %v2833 = vshrl.u32 %v2832, 7
      %v2834 = vsub.s32 0, %v2833
      %v2835 = vrot.slane %v2085, %v2834
      %v2836 = vlaneseq
      %v2837 = vshrl.u32 %v2836, 7
      %v2838 = vsub.s32 0, %v2837
      %v2839 = vrot.slane %v2109, %v2838
      %v2840 = vlaneseq
      %v2841 = vshrl.u32 %v2840, 7
      %v2842 = vsub.s32 0, %v2841
      %v2843 = vrot.slane %v2123, %v2842
      %v2844 = vlaneseq
      %v2845 = vshrl.u32 %v2844, 7
      %v2846 = vsub.s32 0, %v2845
      %v2847 = vrot.slane %v2131, %v2846
      %v2848 = vlaneseq
      %v2849 = vshrl.u32 %v2848, 7
      %v2850 = vsub.s32 0, %v2849
      %v2851 = vrot.slane %v2133, %v2850
      %v2852 = vlaneseq
      %v2853 = vshrl.u32 %v2852, 7
      %v2854 = vsub.s32 0, %v2853
      %v2855 = vrot.slane %v2116, %v2854
      %v2856 = vlaneseq
      %v2857 = vshrl.u32 %v2856, 7
      %v2858 = vsub.s32 0, %v2857
      %v2859 = vrot.slane %v2130, %v2858
      %v2860 = vlaneseq
      %v2861 = vshrl.u32 %v2860, 7
      %v2862 = vsub.s32 0, %v2861
      %v2863 = vrot.slane %v2132, %v2862
      %v2864 = vlaneseq
      %v2865 = vshrl.u32 %v2864, 7
      %v2866 = vsub.s32 0, %v2865
      %v2867 = vrot.slane %v2134, %v2866
      %v2868 = vlaneseq
      %v2869 = vshrl.u32 %v2868, 7
      %v2870 = vsub.s32 0, %v2869
      %v2871 = vrot.slane %v2158, %v2870
      %v2872 = vlaneseq
      %v2873 = vshrl.u32 %v2872, 7
      %v2874 = vsub.s32 0, %v2873
      %v2875 = vrot.slane %v2172, %v2874
      %v2876 = vlaneseq
      %v2877 = vshrl.u32 %v2876, 7
      %v2878 = vsub.s32 0, %v2877
      %v2879 = vrot.slane %v2180, %v2878
      %v2880 = vlaneseq
      %v2881 = vshrl.u32 %v2880, 7
      %v2882 = vsub.s32 0, %v2881
      %v2883 = vrot.slane %v2182, %v2882
      %v2884 = vlaneseq
      %v2885 = vshrl.u32 %v2884, 7
      %v2886 = vsub.s32 0, %v2885
      %v2887 = vrot.slane %v2165, %v2886
      %v2888 = vlaneseq
      %v2889 = vshrl.u32 %v2888, 7
      %v2890 = vsub.s32 0, %v2889
      %v2891 = vrot.slane %v2179, %v2890
      %v2892 = vlaneseq
      %v2893 = vshrl.u32 %v2892, 7
      %v2894 = vsub.s32 0, %v2893
      %v2895 = vrot.slane %v2181, %v2894
      %v2896 = vlaneseq
      %v2897 = vshrl.u32 %v2896, 7
      %v2898 = vsub.s32 0, %v2897
      %v2899 = vrot.slane %v2183, %v2898
      %v2900 = vlaneseq
      %v2901 = vshrl.u32 %v2900, 7
      %v2902 = vsub.s32 0, %v2901
      %v2903 = vrot.slane %v2207, %v2902
      %v2904 = vlaneseq
      %v2905 = vshrl.u32 %v2904, 7
      %v2906 = vsub.s32 0, %v2905
      %v2907 = vrot.slane %v2221, %v2906
      %v2908 = vlaneseq
      %v2909 = vshrl.u32 %v2908, 7
      %v2910 = vsub.s32 0, %v2909
      %v2911 = vrot.slane %v2229, %v2910
      %v2912 = vlaneseq
      %v2913 = vshrl.u32 %v2912, 7
      %v2914 = vsub.s32 0, %v2913
      %v2915 = vrot.slane %v2231, %v2914
      %v2916 = vlaneseq
      %v2917 = vshrl.u32 %v2916, 7
      %v2918 = vsub.s32 0, %v2917
      %v2919 = vrot.slane %v2214, %v2918
      %v2920 = vlaneseq
      %v2921 = vshrl.u32 %v2920, 7
      %v2922 = vsub.s32 0, %v2921
      %v2923 = vrot.slane %v2228, %v2922
      %v2924 = vlaneseq
      %v2925 = vshrl.u32 %v2924, 7
      %v2926 = vsub.s32 0, %v2925
      %v2927 = vrot.slane %v2230, %v2926
      %v2928 = vlaneseq
      %v2929 = vshrl.u32 %v2928, 7
      %v2930 = vsub.s32 0, %v2929
      %v2931 = vrot.slane %v2232, %v2930
      %v2932 = vlaneseq
      %v2933 = vshrl.u32 %v2932, 7
      %v2934 = vsub.s32 0, %v2933
      %v2935 = vrot.slane %v2256, %v2934
      %v2936 = vlaneseq
      %v2937 = vshrl.u32 %v2936, 7
      %v2938 = vsub.s32 0, %v2937
      %v2939 = vrot.slane %v2270, %v2938
      %v2940 = vlaneseq
      %v2941 = vshrl.u32 %v2940, 7
      %v2942 = vsub.s32 0, %v2941
      %v2943 = vrot.slane %v2278, %v2942
      %v2944 = vlaneseq
      %v2945 = vshrl.u32 %v2944, 7
      %v2946 = vsub.s32 0, %v2945
      %v2947 = vrot.slane %v2280, %v2946
      %v2948 = vlaneseq
      %v2949 = vshrl.u32 %v2948, 7
      %v2950 = vsub.s32 0, %v2949
      %v2951 = vrot.slane %v2263, %v2950
      %v2952 = vlaneseq
      %v2953 = vshrl.u32 %v2952, 7
      %v2954 = vsub.s32 0, %v2953
      %v2955 = vrot.slane %v2277, %v2954
      %v2956 = vlaneseq
      %v2957 = vshrl.u32 %v2956, 7
      %v2958 = vsub.s32 0, %v2957
      %v2959 = vrot.slane %v2279, %v2958
      %v2960 = vlaneseq
      %v2961 = vshrl.u32 %v2960, 7
      %v2962 = vsub.s32 0, %v2961
      %v2963 = vrot.slane %v2281, %v2962
      %v2964 = vlaneseq
      %v2965 = vshrl.u32 %v2964, 7
      %v2966 = vsub.s32 0, %v2965
      %v2967 = vrot.slane %v2305, %v2966
      %v2968 = vlaneseq
      %v2969 = vshrl.u32 %v2968, 7
      %v2970 = vsub.s32 0, %v2969
      %v2971 = vrot.slane %v2319, %v2970
      %v2972 = vlaneseq
      %v2973 = vshrl.u32 %v2972, 7
      %v2974 = vsub.s32 0, %v2973
      %v2975 = vrot.slane %v2327, %v2974
      %v2976 = vlaneseq
      %v2977 = vshrl.u32 %v2976, 7
      %v2978 = vsub.s32 0, %v2977
      %v2979 = vrot.slane %v2329, %v2978
      %v2980 = vlaneseq
      %v2981 = vshrl.u32 %v2980, 7
      %v2982 = vsub.s32 0, %v2981
      %v2983 = vrot.slane %v2312, %v2982
      %v2984 = vlaneseq
      %v2985 = vshrl.u32 %v2984, 7
      %v2986 = vsub.s32 0, %v2985
      %v2987 = vrot.slane %v2326, %v2986
      %v2988 = vlaneseq
      %v2989 = vshrl.u32 %v2988, 7
      %v2990 = vsub.s32 0, %v2989
      %v2991 = vrot.slane %v2328, %v2990
      %v2992 = vlaneseq
      %v2993 = vshrl.u32 %v2992, 7
      %v2994 = vsub.s32 0, %v2993
      %v2995 = vrot.slane %v2330, %v2994
      %v2996 = vlaneseq
      %v2997 = vshrl.u32 %v2996, 7
      %v2998 = vsub.s32 0, %v2997
      %v2999 = vrot.slane %v2354, %v2998
      %v3000 = vlaneseq
      %v3001 = vshrl.u32 %v3000, 7
      %v3002 = vsub.s32 0, %v3001
      %v3003 = vrot.slane %v2368, %v3002
      %v3004 = vlaneseq
      %v3005 = vshrl.u32 %v3004, 7
      %v3006 = vsub.s32 0, %v3005
      %v3007 = vrot.slane %v2376, %v3006
      %v3008 = vlaneseq
      %v3009 = vshrl.u32 %v3008, 7
      %v3010 = vsub.s32 0, %v3009
      %v3011 = vrot.slane %v2378, %v3010
      %v3012 = vlaneseq
      %v3013 = vshrl.u32 %v3012, 7
      %v3014 = vsub.s32 0, %v3013
      %v3015 = vrot.slane %v2361, %v3014
      %v3016 = vlaneseq
      %v3017 = vshrl.u32 %v3016, 7
      %v3018 = vsub.s32 0, %v3017
      %v3019 = vrot.slane %v2375, %v3018
      %v3020 = vlaneseq
      %v3021 = vshrl.u32 %v3020, 7
      %v3022 = vsub.s32 0, %v3021
      %v3023 = vrot.slane %v2377, %v3022
      %v3024 = vlaneseq
      %v3025 = vshrl.u32 %v3024, 7
      %v3026 = vsub.s32 0, %v3025
      %v3027 = vrot.slane %v2379, %v3026
      %v3028 = vlaneseq
      %v3029 = vshrl.u32 %v3028, 7
      %v3030 = vsub.s32 0, %v3029
      %v3031 = vrot.slane %v2403, %v3030
      %v3032 = vlaneseq
      %v3033 = vshrl.u32 %v3032, 7
      %v3034 = vsub.s32 0, %v3033
      %v3035 = vrot.slane %v2417, %v3034
      %v3036 = vlaneseq
      %v3037 = vshrl.u32 %v3036, 7
      %v3038 = vsub.s32 0, %v3037
      %v3039 = vrot.slane %v2425, %v3038
      %v3040 = vlaneseq
      %v3041 = vshrl.u32 %v3040, 7
      %v3042 = vsub.s32 0, %v3041
      %v3043 = vrot.slane %v2427, %v3042
      %v3044 = vlaneseq
      %v3045 = vshrl.u32 %v3044, 7
      %v3046 = vsub.s32 0, %v3045
      %v3047 = vrot.slane %v2410, %v3046
      %v3048 = vlaneseq
      %v3049 = vshrl.u32 %v3048, 7
      %v3050 = vsub.s32 0, %v3049
      %v3051 = vrot.slane %v2424, %v3050
      %v3052 = vlaneseq
      %v3053 = vshrl.u32 %v3052, 7
      %v3054 = vsub.s32 0, %v3053
      %v3055 = vrot.slane %v2426, %v3054
      %v3056 = vlaneseq
      %v3057 = vshrl.u32 %v3056, 7
      %v3058 = vsub.s32 0, %v3057
      %v3059 = vrot.slane %v2428, %v3058
      %v3060 = vlaneseq
      %v3061 = vshrl.u32 %v3060, 7
      %v3062 = vsub.s32 0, %v3061
      %v3063 = vrot.slane %v2452, %v3062
      %v3064 = vlaneseq
      %v3065 = vshrl.u32 %v3064, 7
      %v3066 = vsub.s32 0, %v3065
      %v3067 = vrot.slane %v2466, %v3066
      %v3068 = vlaneseq
      %v3069 = vshrl.u32 %v3068, 7
      %v3070 = vsub.s32 0, %v3069
      %v3071 = vrot.slane %v2474, %v3070
      %v3072 = vlaneseq
      %v3073 = vshrl.u32 %v3072, 7
      %v3074 = vsub.s32 0, %v3073
      %v3075 = vrot.slane %v2476, %v3074
      %v3076 = vlaneseq
      %v3077 = vshrl.u32 %v3076, 7
      %v3078 = vsub.s32 0, %v3077
      %v3079 = vrot.slane %v2459, %v3078
      %v3080 = vlaneseq
      %v3081 = vshrl.u32 %v3080, 7
      %v3082 = vsub.s32 0, %v3081
      %v3083 = vrot.slane %v2473, %v3082
      %v3084 = vlaneseq
      %v3085 = vshrl.u32 %v3084, 7
      %v3086 = vsub.s32 0, %v3085
      %v3087 = vrot.slane %v2475, %v3086
      %v3088 = vlaneseq
      %v3089 = vshrl.u32 %v3088, 7
      %v3090 = vsub.s32 0, %v3089
      %v3091 = vrot.slane %v2477, %v3090
      %v3092 = vlaneseq
      %v3093 = vshrl.u32 %v3092, 7
      %v3094 = vsub.s32 0, %v3093
      %v3095 = vrot.slane %v2501, %v3094
      %v3096 = vlaneseq
      %v3097 = vshrl.u32 %v3096, 7
      %v3098 = vsub.s32 0, %v3097
      %v3099 = vrot.slane %v2515, %v3098
      %v3100 = vlaneseq
      %v3101 = vshrl.u32 %v3100, 7
      %v3102 = vsub.s32 0, %v3101
      %v3103 = vrot.slane %v2523, %v3102
      %v3104 = vlaneseq
      %v3105 = vshrl.u32 %v3104, 7
      %v3106 = vsub.s32 0, %v3105
      %v3107 = vrot.slane %v2525, %v3106
      %v3108 = vlaneseq
      %v3109 = vshrl.u32 %v3108, 7
      %v3110 = vsub.s32 0, %v3109
      %v3111 = vrot.slane %v2508, %v3110
      %v3112 = vlaneseq
      %v3113 = vshrl.u32 %v3112, 7
      %v3114 = vsub.s32 0, %v3113
      %v3115 = vrot.slane %v2522, %v3114
      %v3116 = vlaneseq
      %v3117 = vshrl.u32 %v3116, 7
      %v3118 = vsub.s32 0, %v3117
      %v3119 = vrot.slane %v2524, %v3118
      %v3120 = vlaneseq
      %v3121 = vshrl.u32 %v3120, 7
      %v3122 = vsub.s32 0, %v3121
      %v3123 = vrot.slane %v2526, %v3122
      %v3124 = vlaneseq
      %v3125 = vshrl.u32 %v3124, 7
      %v3126 = vsub.s32 0, %v3125
      %v3127 = vrot.slane %v2550, %v3126
      %v3128 = vlaneseq
      %v3129 = vshrl.u32 %v3128, 7
      %v3130 = vsub.s32 0, %v3129
      %v3131 = vrot.slane %v2564, %v3130
      %v3132 = vlaneseq
      %v3133 = vshrl.u32 %v3132, 7
      %v3134 = vsub.s32 0, %v3133
      %v3135 = vrot.slane %v2572, %v3134
      %v3136 = vlaneseq
      %v3137 = vshrl.u32 %v3136, 7
      %v3138 = vsub.s32 0, %v3137
      %v3139 = vrot.slane %v2574, %v3138
      %v3140 = vlaneseq
      %v3141 = vshrl.u32 %v3140, 7
      %v3142 = vsub.s32 0, %v3141
      %v3143 = vrot.slane %v2557, %v3142
      %v3144 = vlaneseq
      %v3145 = vshrl.u32 %v3144, 7
      %v3146 = vsub.s32 0, %v3145
      %v3147 = vrot.slane %v2571, %v3146
      %v3148 = vlaneseq
      %v3149 = vshrl.u32 %v3148, 7
      %v3150 = vsub.s32 0, %v3149
      %v3151 = vrot.slane %v2573, %v3150
      %v3152 = vlaneseq
      %v3153 = vshrl.u32 %v3152, 7
      %v3154 = vsub.s32 0, %v3153
      %v3155 = vrot.slane %v2575, %v3154
      %v3156 = vlaneseq
      %v3157 = vshrl.u32 %v3156, 7
      %v3158 = vsub.s32 0, %v3157
      %v3159 = vrot.slane %v2599, %v3158
      %v3160 = vlaneseq
      %v3161 = vshrl.u32 %v3160, 7
      %v3162 = vsub.s32 0, %v3161
      %v3163 = vrot.slane %v2613, %v3162
      %v3164 = vlaneseq
      %v3165 = vshrl.u32 %v3164, 7
      %v3166 = vsub.s32 0, %v3165
      %v3167 = vrot.slane %v2621, %v3166
      %v3168 = vlaneseq
      %v3169 = vshrl.u32 %v3168, 7
      %v3170 = vsub.s32 0, %v3169
      %v3171 = vrot.slane %v2623, %v3170
      %v3172 = vlaneseq
      %v3173 = vshrl.u32 %v3172, 7
      %v3174 = vsub.s32 0, %v3173
      %v3175 = vrot.slane %v2606, %v3174
      %v3176 = vlaneseq
      %v3177 = vshrl.u32 %v3176, 7
      %v3178 = vsub.s32 0, %v3177
      %v3179 = vrot.slane %v2620, %v3178
      %v3180 = vlaneseq
      %v3181 = vshrl.u32 %v3180, 7
      %v3182 = vsub.s32 0, %v3181
      %v3183 = vrot.slane %v2622, %v3182
      %v3184 = vlaneseq
      %v3185 = vshrl.u32 %v3184, 7
      %v3186 = vsub.s32 0, %v3185
      %v3187 = vrot.slane %v2624, %v3186
      %v3188 = vlaneseq
      %v3189 = vshrl.u32 %v3188, 7
      %v3190 = vsub.s32 0, %v3189
      %v3191 = vrot.slane %v2648, %v3190
      %v3192 = vlaneseq
      %v3193 = vshrl.u32 %v3192, 7
      %v3194 = vsub.s32 0, %v3193
      %v3195 = vrot.slane %v2662, %v3194
      %v3196 = vlaneseq
      %v3197 = vshrl.u32 %v3196, 7
      %v3198 = vsub.s32 0, %v3197
      %v3199 = vrot.slane %v2670, %v3198
      %v3200 = vlaneseq
      %v3201 = vshrl.u32 %v3200, 7
      %v3202 = vsub.s32 0, %v3201
      %v3203 = vrot.slane %v2672, %v3202
      %v3204 = vlaneseq
      %v3205 = vshrl.u32 %v3204, 7
      %v3206 = vsub.s32 0, %v3205
      %v3207 = vrot.slane %v2655, %v3206
      %v3208 = vlaneseq
      %v3209 = vshrl.u32 %v3208, 7
      %v3210 = vsub.s32 0, %v3209
      %v3211 = vrot.slane %v2669, %v3210
      %v3212 = vlaneseq
      %v3213 = vshrl.u32 %v3212, 7
      %v3214 = vsub.s32 0, %v3213
      %v3215 = vrot.slane %v2671, %v3214
      %v3216 = vlaneseq
      %v3217 = vshrl.u32 %v3216, 7
      %v3218 = vsub.s32 0, %v3217
      %v3219 = vrot.slane %v2673, %v3218
      %v3220 = vlaneseq
      %v3221 = vshrl.u32 %v3220, 7
      %v3222 = vsub.s32 0, %v3221
      %v3223 = vrot.slane %v2697, %v3222
      %v3224 = vlaneseq
      %v3225 = vshrl.u32 %v3224, 7
      %v3226 = vsub.s32 0, %v3225
      %v3227 = vrot.slane %v2711, %v3226
      %v3228 = vlaneseq
      %v3229 = vshrl.u32 %v3228, 7
      %v3230 = vsub.s32 0, %v3229
      %v3231 = vrot.slane %v2719, %v3230
      %v3232 = vlaneseq
      %v3233 = vshrl.u32 %v3232, 7
      %v3234 = vsub.s32 0, %v3233
      %v3235 = vrot.slane %v2721, %v3234
      %v3236 = vlaneseq
      %v3237 = vshrl.u32 %v3236, 7
      %v3238 = vsub.s32 0, %v3237
      %v3239 = vrot.slane %v2704, %v3238
      %v3240 = vlaneseq
      %v3241 = vshrl.u32 %v3240, 7
      %v3242 = vsub.s32 0, %v3241
      %v3243 = vrot.slane %v2718, %v3242
      %v3244 = vlaneseq
      %v3245 = vshrl.u32 %v3244, 7
      %v3246 = vsub.s32 0, %v3245
      %v3247 = vrot.slane %v2720, %v3246
      %v3248 = vlaneseq
      %v3249 = vshrl.u32 %v3248, 7
      %v3250 = vsub.s32 0, %v3249
      %v3251 = vrot.slane %v2722, %v3250
      %v3252 = vlaneseq
      %v3253 = vshrl.u32 %v3252, 7
      %v3254 = vsub.s32 0, %v3253
      %v3255 = vrot.slane %v2746, %v3254
      %v3256 = vlaneseq
      %v3257 = vshrl.u32 %v3256, 7
      %v3258 = vsub.s32 0, %v3257
      %v3259 = vrot.slane %v2760, %v3258
      %v3260 = vlaneseq
      %v3261 = vshrl.u32 %v3260, 7
      %v3262 = vsub.s32 0, %v3261
      %v3263 = vrot.slane %v2768, %v3262
      %v3264 = vlaneseq
      %v3265 = vshrl.u32 %v3264, 7
      %v3266 = vsub.s32 0, %v3265
      %v3267 = vrot.slane %v2770, %v3266
      %v3268 = vlaneseq
      %v3269 = vshrl.u32 %v3268, 7
      %v3270 = vsub.s32 0, %v3269
      %v3271 = vrot.slane %v2753, %v3270
      %v3272 = vlaneseq
      %v3273 = vshrl.u32 %v3272, 7
      %v3274 = vsub.s32 0, %v3273
      %v3275 = vrot.slane %v2767, %v3274
      %v3276 = vlaneseq
      %v3277 = vshrl.u32 %v3276, 7
      %v3278 = vsub.s32 0, %v3277
      %v3279 = vrot.slane %v2769, %v3278
      %v3280 = vlaneseq
      %v3281 = vshrl.u32 %v3280, 7
      %v3282 = vsub.s32 0, %v3281
      %v3283 = vrot.slane %v2771, %v3282
      %vm3412 = vcmask 1040384
      %v3413 = vsel %vm3412, %v1083, %v2775
      %v3414 = vsel %vm3412, %v1097, %v2779
      %v3415 = vsel %vm3412, %v1105, %v2783
      %v3416 = vsel %vm3412, %v1107, %v2787
      %v3417 = vsel %vm3412, %v1090, %v2791
      %v3418 = vsel %vm3412, %v1104, %v2795
      %v3419 = vsel %vm3412, %v1106, %v2799
      %v3420 = vsel %vm3412, %v1108, %v2803
      %v3421 = vsel %vm3412, %v1132, %v2807
      %v3422 = vsel %vm3412, %v1146, %v2811
      %v3423 = vsel %vm3412, %v1154, %v2815
      %v3424 = vsel %vm3412, %v1156, %v2819
      %v3425 = vsel %vm3412, %v1139, %v2823
      %v3426 = vsel %vm3412, %v1153, %v2827
      %v3427 = vsel %vm3412, %v1155, %v2831
      %v3428 = vsel %vm3412, %v1157, %v2835
      %v3429 = vsel %vm3412, %v1181, %v2839
      %v3430 = vsel %vm3412, %v1195, %v2843
      %v3431 = vsel %vm3412, %v1203, %v2847
      %v3432 = vsel %vm3412, %v1205, %v2851
      %v3433 = vsel %vm3412, %v1188, %v2855
      %v3434 = vsel %vm3412, %v1202, %v2859
      %v3435 = vsel %vm3412, %v1204, %v2863
      %v3436 = vsel %vm3412, %v1206, %v2867
      %v3437 = vsel %vm3412, %v1230, %v2871
      %v3438 = vsel %vm3412, %v1244, %v2875
      %v3439 = vsel %vm3412, %v1252, %v2879
      %v3440 = vsel %vm3412, %v1254, %v2883
      %v3441 = vsel %vm3412, %v1237, %v2887
      %v3442 = vsel %vm3412, %v1251, %v2891
      %v3443 = vsel %vm3412, %v1253, %v2895
      %v3444 = vsel %vm3412, %v1255, %v2899
      %v3445 = vsel %vm3412, %v1279, %v2903
      %v3446 = vsel %vm3412, %v1293, %v2907
      %v3447 = vsel %vm3412, %v1301, %v2911
      %v3448 = vsel %vm3412, %v1303, %v2915
      %v3449 = vsel %vm3412, %v1286, %v2919
      %v3450 = vsel %vm3412, %v1300, %v2923
      %v3451 = vsel %vm3412, %v1302, %v2927
      %v3452 = vsel %vm3412, %v1304, %v2931
      %v3453 = vsel %vm3412, %v1328, %v2935
      %v3454 = vsel %vm3412, %v1342, %v2939
      %v3455 = vsel %vm3412, %v1350, %v2943
      %v3456 = vsel %vm3412, %v1352, %v2947
      %v3457 = vsel %vm3412, %v1335, %v2951
      %v3458 = vsel %vm3412, %v1349, %v2955
      %v3459 = vsel %vm3412, %v1351, %v2959
      %v3460 = vsel %vm3412, %v1353, %v2963
      %v3461 = vsel %vm3412, %v1377, %v2967
      %v3462 = vsel %vm3412, %v1391, %v2971
      %v3463 = vsel %vm3412, %v1399, %v2975
      %v3464 = vsel %vm3412, %v1401, %v2979
      %v3465 = vsel %vm3412, %v1384, %v2983
      %v3466 = vsel %vm3412, %v1398, %v2987
      %v3467 = vsel %vm3412, %v1400, %v2991
      %v3468 = vsel %vm3412, %v1402, %v2995
      %v3469 = vsel %vm3412, %v1426, %v2999
      %v3470 = vsel %vm3412, %v1440, %v3003
      %v3471 = vsel %vm3412, %v1448, %v3007
      %v3472 = vsel %vm3412, %v1450, %v3011
      %v3473 = vsel %vm3412, %v1433, %v3015
      %v3474 = vsel %vm3412, %v1447, %v3019
      %v3475 = vsel %vm3412, %v1449, %v3023
      %v3476 = vsel %vm3412, %v1451, %v3027
      %v3477 = vsel %vm3412, %v1475, %v3031
      %v3478 = vsel %vm3412, %v1489, %v3035
      %v3479 = vsel %vm3412, %v1497, %v3039
      %v3480 = vsel %vm3412, %v1499, %v3043
      %v3481 = vsel %vm3412, %v1482, %v3047
      %v3482 = vsel %vm3412, %v1496, %v3051
      %v3483 = vsel %vm3412, %v1498, %v3055
      %v3484 = vsel %vm3412, %v1500, %v3059
      %v3485 = vsel %vm3412, %v1524, %v3063
      %v3486 = vsel %vm3412, %v1538, %v3067
      %v3487 = vsel %vm3412, %v1546, %v3071
      %v3488 = vsel %vm3412, %v1548, %v3075
      %v3489 = vsel %vm3412, %v1531, %v3079
      %v3490 = vsel %vm3412, %v1545, %v3083
      %v3491 = vsel %vm3412, %v1547, %v3087
      %v3492 = vsel %vm3412, %v1549, %v3091
      %v3493 = vsel %vm3412, %v1573, %v3095
      %v3494 = vsel %vm3412, %v1587, %v3099
      %v3495 = vsel %vm3412, %v1595, %v3103
      %v3496 = vsel %vm3412, %v1597, %v3107
      %v3497 = vsel %vm3412, %v1580, %v3111
      %v3498 = vsel %vm3412, %v1594, %v3115
      %v3499 = vsel %vm3412, %v1596, %v3119
      %v3500 = vsel %vm3412, %v1598, %v3123
      %v3501 = vsel %vm3412, %v1622, %v3127
      %v3502 = vsel %vm3412, %v1636, %v3131
      %v3503 = vsel %vm3412, %v1644, %v3135
      %v3504 = vsel %vm3412, %v1646, %v3139
      %v3505 = vsel %vm3412, %v1629, %v3143
      %v3506 = vsel %vm3412, %v1643, %v3147
      %v3507 = vsel %vm3412, %v1645, %v3151
      %v3508 = vsel %vm3412, %v1647, %v3155
      %v3509 = vsel %vm3412, %v1671, %v3159
      %v3510 = vsel %vm3412, %v1685, %v3163
      %v3511 = vsel %vm3412, %v1693, %v3167
      %v3512 = vsel %vm3412, %v1695, %v3171
      %v3513 = vsel %vm3412, %v1678, %v3175
      %v3514 = vsel %vm3412, %v1692, %v3179
      %v3515 = vsel %vm3412, %v1694, %v3183
      %v3516 = vsel %vm3412, %v1696, %v3187
      %v3517 = vsel %vm3412, %v1720, %v3191
      %v3518 = vsel %vm3412, %v1734, %v3195
      %v3519 = vsel %vm3412, %v1742, %v3199
      %v3520 = vsel %vm3412, %v1744, %v3203
      %v3521 = vsel %vm3412, %v1727, %v3207
      %v3522 = vsel %vm3412, %v1741, %v3211
      %v3523 = vsel %vm3412, %v1743, %v3215
      %v3524 = vsel %vm3412, %v1745, %v3219
      %v3525 = vsel %vm3412, %v1769, %v3223
      %v3526 = vsel %vm3412, %v1783, %v3227
      %v3527 = vsel %vm3412, %v1791, %v3231
      %v3528 = vsel %vm3412, %v1793, %v3235
      %v3529 = vsel %vm3412, %v1776, %v3239
      %v3530 = vsel %vm3412, %v1790, %v3243
      %v3531 = vsel %vm3412, %v1792, %v3247
      %v3532 = vsel %vm3412, %v1794, %v3251
      %v3533 = vsel %vm3412, %v1818, %v3255
      %v3534 = vsel %vm3412, %v1832, %v3259
      %v3535 = vsel %vm3412, %v1840, %v3263
      %v3536 = vsel %vm3412, %v1842, %v3267
      %v3537 = vsel %vm3412, %v1825, %v3271
      %v3538 = vsel %vm3412, %v1839, %v3275
      %v3539 = vsel %vm3412, %v1841, %v3279
      %v3540 = vsel %vm3412, %v1843, %v3283
      %vm3541 = vcmask 25600
      %3542 = vst.msk [vmem:[%s208] sm:$0x3] %vm3541, %v3413
      %3543 = vst.msk [vmem:[%s208 + $0x2] sm:$0x3] %vm3541, %v3414
      %3544 = vst.msk [vmem:[%s208 + $0x4] sm:$0x3] %vm3541, %v3415
      %3545 = vst.msk [vmem:[%s208 + $0x6] sm:$0x3] %vm3541, %v3416
      %3546 = vst.msk [vmem:[%s208 + $0x8] sm:$0x3] %vm3541, %v3417
      %3547 = vst.msk [vmem:[%s208 + $0xa] sm:$0x3] %vm3541, %v3418
      %3548 = vst.msk [vmem:[%s208 + $0xc] sm:$0x3] %vm3541, %v3419
      %3549 = vst.msk [vmem:[%s208 + $0xe] sm:$0x3] %vm3541, %v3420
      %3550 = vst.msk [vmem:[%s208 + $0x10] sm:$0x3] %vm3541, %v3421
      %3551 = vst.msk [vmem:[%s208 + $0x12] sm:$0x3] %vm3541, %v3422
      %3552 = vst.msk [vmem:[%s208 + $0x14] sm:$0x3] %vm3541, %v3423
      %3553 = vst.msk [vmem:[%s208 + $0x16] sm:$0x3] %vm3541, %v3424
      %3554 = vst.msk [vmem:[%s208 + $0x18] sm:$0x3] %vm3541, %v3425
      %3555 = vst.msk [vmem:[%s208 + $0x1a] sm:$0x3] %vm3541, %v3426
      %3556 = vst.msk [vmem:[%s208 + $0x1c] sm:$0x3] %vm3541, %v3427
      %3557 = vst.msk [vmem:[%s208 + $0x1e] sm:$0x3] %vm3541, %v3428
      %3558 = vst.msk [vmem:[%s208 + $0x40] sm:$0x3] %vm3541, %v3429
      %3559 = vst.msk [vmem:[%s208 + $0x42] sm:$0x3] %vm3541, %v3430
      %3560 = vst.msk [vmem:[%s208 + $0x44] sm:$0x3] %vm3541, %v3431
      %3561 = vst.msk [vmem:[%s208 + $0x46] sm:$0x3] %vm3541, %v3432
      %3562 = vst.msk [vmem:[%s208 + $0x48] sm:$0x3] %vm3541, %v3433
      %3563 = vst.msk [vmem:[%s208 + $0x4a] sm:$0x3] %vm3541, %v3434
      %3564 = vst.msk [vmem:[%s208 + $0x4c] sm:$0x3] %vm3541, %v3435
      %3565 = vst.msk [vmem:[%s208 + $0x4e] sm:$0x3] %vm3541, %v3436
      %3566 = vst.msk [vmem:[%s208 + $0x50] sm:$0x3] %vm3541, %v3437
      %3567 = vst.msk [vmem:[%s208 + $0x52] sm:$0x3] %vm3541, %v3438
      %3568 = vst.msk [vmem:[%s208 + $0x54] sm:$0x3] %vm3541, %v3439
      %3569 = vst.msk [vmem:[%s208 + $0x56] sm:$0x3] %vm3541, %v3440
      %3570 = vst.msk [vmem:[%s208 + $0x58] sm:$0x3] %vm3541, %v3441
      %3571 = vst.msk [vmem:[%s208 + $0x5a] sm:$0x3] %vm3541, %v3442
      %3572 = vst.msk [vmem:[%s208 + $0x5c] sm:$0x3] %vm3541, %v3443
      %3573 = vst.msk [vmem:[%s208 + $0x5e] sm:$0x3] %vm3541, %v3444
      %3574 = vst.msk [vmem:[%s208 + $0x80] sm:$0x3] %vm3541, %v3445
      %3575 = vst.msk [vmem:[%s208 + $0x82] sm:$0x3] %vm3541, %v3446
      %3576 = vst.msk [vmem:[%s208 + $0x84] sm:$0x3] %vm3541, %v3447
      %3577 = vst.msk [vmem:[%s208 + $0x86] sm:$0x3] %vm3541, %v3448
      %3578 = vst.msk [vmem:[%s208 + $0x88] sm:$0x3] %vm3541, %v3449
      %3579 = vst.msk [vmem:[%s208 + $0x8a] sm:$0x3] %vm3541, %v3450
      %3580 = vst.msk [vmem:[%s208 + $0x8c] sm:$0x3] %vm3541, %v3451
      %3581 = vst.msk [vmem:[%s208 + $0x8e] sm:$0x3] %vm3541, %v3452
      %3582 = vst.msk [vmem:[%s208 + $0x90] sm:$0x3] %vm3541, %v3453
      %3583 = vst.msk [vmem:[%s208 + $0x92] sm:$0x3] %vm3541, %v3454
      %3584 = vst.msk [vmem:[%s208 + $0x94] sm:$0x3] %vm3541, %v3455
      %3585 = vst.msk [vmem:[%s208 + $0x96] sm:$0x3] %vm3541, %v3456
      %3586 = vst.msk [vmem:[%s208 + $0x98] sm:$0x3] %vm3541, %v3457
      %3587 = vst.msk [vmem:[%s208 + $0x9a] sm:$0x3] %vm3541, %v3458
      %3588 = vst.msk [vmem:[%s208 + $0x9c] sm:$0x3] %vm3541, %v3459
      %3589 = vst.msk [vmem:[%s208 + $0x9e] sm:$0x3] %vm3541, %v3460
      %3590 = vst.msk [vmem:[%s208 + $0xc0] sm:$0x3] %vm3541, %v3461
      %3591 = vst.msk [vmem:[%s208 + $0xc2] sm:$0x3] %vm3541, %v3462
      %3592 = vst.msk [vmem:[%s208 + $0xc4] sm:$0x3] %vm3541, %v3463
      %3593 = vst.msk [vmem:[%s208 + $0xc6] sm:$0x3] %vm3541, %v3464
      %3594 = vst.msk [vmem:[%s208 + $0xc8] sm:$0x3] %vm3541, %v3465
      %3595 = vst.msk [vmem:[%s208 + $0xca] sm:$0x3] %vm3541, %v3466
      %3596 = vst.msk [vmem:[%s208 + $0xcc] sm:$0x3] %vm3541, %v3467
      %3597 = vst.msk [vmem:[%s208 + $0xce] sm:$0x3] %vm3541, %v3468
      %3598 = vst.msk [vmem:[%s208 + $0xd0] sm:$0x3] %vm3541, %v3469
      %3599 = vst.msk [vmem:[%s208 + $0xd2] sm:$0x3] %vm3541, %v3470
      %3600 = vst.msk [vmem:[%s208 + $0xd4] sm:$0x3] %vm3541, %v3471
      %3601 = vst.msk [vmem:[%s208 + $0xd6] sm:$0x3] %vm3541, %v3472
      %3602 = vst.msk [vmem:[%s208 + $0xd8] sm:$0x3] %vm3541, %v3473
      %3603 = vst.msk [vmem:[%s208 + $0xda] sm:$0x3] %vm3541, %v3474
      %3604 = vst.msk [vmem:[%s208 + $0xdc] sm:$0x3] %vm3541, %v3475
      %3605 = vst.msk [vmem:[%s208 + $0xde] sm:$0x3] %vm3541, %v3476
      %3606 = vst.msk [vmem:[%s208 + $0x100] sm:$0x3] %vm3541, %v3477
      %3607 = vst.msk [vmem:[%s208 + $0x102] sm:$0x3] %vm3541, %v3478
      %3608 = vst.msk [vmem:[%s208 + $0x104] sm:$0x3] %vm3541, %v3479
      %3609 = vst.msk [vmem:[%s208 + $0x106] sm:$0x3] %vm3541, %v3480
      %3610 = vst.msk [vmem:[%s208 + $0x108] sm:$0x3] %vm3541, %v3481
      %3611 = vst.msk [vmem:[%s208 + $0x10a] sm:$0x3] %vm3541, %v3482
      %3612 = vst.msk [vmem:[%s208 + $0x10c] sm:$0x3] %vm3541, %v3483
      %3613 = vst.msk [vmem:[%s208 + $0x10e] sm:$0x3] %vm3541, %v3484
      %3614 = vst.msk [vmem:[%s208 + $0x110] sm:$0x3] %vm3541, %v3485
      %3615 = vst.msk [vmem:[%s208 + $0x112] sm:$0x3] %vm3541, %v3486
      %3616 = vst.msk [vmem:[%s208 + $0x114] sm:$0x3] %vm3541, %v3487
      %3617 = vst.msk [vmem:[%s208 + $0x116] sm:$0x3] %vm3541, %v3488
      %3618 = vst.msk [vmem:[%s208 + $0x118] sm:$0x3] %vm3541, %v3489
      %3619 = vst.msk [vmem:[%s208 + $0x11a] sm:$0x3] %vm3541, %v3490
      %3620 = vst.msk [vmem:[%s208 + $0x11c] sm:$0x3] %vm3541, %v3491
      %3621 = vst.msk [vmem:[%s208 + $0x11e] sm:$0x3] %vm3541, %v3492
      %3622 = vst.msk [vmem:[%s208 + $0x140] sm:$0x3] %vm3541, %v3493
      %3623 = vst.msk [vmem:[%s208 + $0x142] sm:$0x3] %vm3541, %v3494
      %3624 = vst.msk [vmem:[%s208 + $0x144] sm:$0x3] %vm3541, %v3495
      %3625 = vst.msk [vmem:[%s208 + $0x146] sm:$0x3] %vm3541, %v3496
      %3626 = vst.msk [vmem:[%s208 + $0x148] sm:$0x3] %vm3541, %v3497
      %3627 = vst.msk [vmem:[%s208 + $0x14a] sm:$0x3] %vm3541, %v3498
      %3628 = vst.msk [vmem:[%s208 + $0x14c] sm:$0x3] %vm3541, %v3499
      %3629 = vst.msk [vmem:[%s208 + $0x14e] sm:$0x3] %vm3541, %v3500
      %3630 = vst.msk [vmem:[%s208 + $0x150] sm:$0x3] %vm3541, %v3501
      %3631 = vst.msk [vmem:[%s208 + $0x152] sm:$0x3] %vm3541, %v3502
      %3632 = vst.msk [vmem:[%s208 + $0x154] sm:$0x3] %vm3541, %v3503
      %3633 = vst.msk [vmem:[%s208 + $0x156] sm:$0x3] %vm3541, %v3504
      %3634 = vst.msk [vmem:[%s208 + $0x158] sm:$0x3] %vm3541, %v3505
      %3635 = vst.msk [vmem:[%s208 + $0x15a] sm:$0x3] %vm3541, %v3506
      %3636 = vst.msk [vmem:[%s208 + $0x15c] sm:$0x3] %vm3541, %v3507
      %3637 = vst.msk [vmem:[%s208 + $0x15e] sm:$0x3] %vm3541, %v3508
      %3638 = vst.msk [vmem:[%s208 + $0x180] sm:$0x3] %vm3541, %v3509
      %3639 = vst.msk [vmem:[%s208 + $0x182] sm:$0x3] %vm3541, %v3510
      %3640 = vst.msk [vmem:[%s208 + $0x184] sm:$0x3] %vm3541, %v3511
      %3641 = vst.msk [vmem:[%s208 + $0x186] sm:$0x3] %vm3541, %v3512
      %3642 = vst.msk [vmem:[%s208 + $0x188] sm:$0x3] %vm3541, %v3513
      %3643 = vst.msk [vmem:[%s208 + $0x18a] sm:$0x3] %vm3541, %v3514
      %3644 = vst.msk [vmem:[%s208 + $0x18c] sm:$0x3] %vm3541, %v3515
      %3645 = vst.msk [vmem:[%s208 + $0x18e] sm:$0x3] %vm3541, %v3516
      %3646 = vst.msk [vmem:[%s208 + $0x190] sm:$0x3] %vm3541, %v3517
      %3647 = vst.msk [vmem:[%s208 + $0x192] sm:$0x3] %vm3541, %v3518
      %3648 = vst.msk [vmem:[%s208 + $0x194] sm:$0x3] %vm3541, %v3519
      %3649 = vst.msk [vmem:[%s208 + $0x196] sm:$0x3] %vm3541, %v3520
      %3650 = vst.msk [vmem:[%s208 + $0x198] sm:$0x3] %vm3541, %v3521
      %3651 = vst.msk [vmem:[%s208 + $0x19a] sm:$0x3] %vm3541, %v3522
      %3652 = vst.msk [vmem:[%s208 + $0x19c] sm:$0x3] %vm3541, %v3523
      %3653 = vst.msk [vmem:[%s208 + $0x19e] sm:$0x3] %vm3541, %v3524
      %3654 = vst.msk [vmem:[%s208 + $0x1c0] sm:$0x3] %vm3541, %v3525
      %3655 = vst.msk [vmem:[%s208 + $0x1c2] sm:$0x3] %vm3541, %v3526
      %3656 = vst.msk [vmem:[%s208 + $0x1c4] sm:$0x3] %vm3541, %v3527
      %3657 = vst.msk [vmem:[%s208 + $0x1c6] sm:$0x3] %vm3541, %v3528
      %3658 = vst.msk [vmem:[%s208 + $0x1c8] sm:$0x3] %vm3541, %v3529
      %3659 = vst.msk [vmem:[%s208 + $0x1ca] sm:$0x3] %vm3541, %v3530
      %3660 = vst.msk [vmem:[%s208 + $0x1cc] sm:$0x3] %vm3541, %v3531
      %3661 = vst.msk [vmem:[%s208 + $0x1ce] sm:$0x3] %vm3541, %v3532
      %3662 = vst.msk [vmem:[%s208 + $0x1d0] sm:$0x3] %vm3541, %v3533
      %3663 = vst.msk [vmem:[%s208 + $0x1d2] sm:$0x3] %vm3541, %v3534
      %3664 = vst.msk [vmem:[%s208 + $0x1d4] sm:$0x3] %vm3541, %v3535
      %3665 = vst.msk [vmem:[%s208 + $0x1d6] sm:$0x3] %vm3541, %v3536
      %3666 = vst.msk [vmem:[%s208 + $0x1d8] sm:$0x3] %vm3541, %v3537
      %3667 = vst.msk [vmem:[%s208 + $0x1da] sm:$0x3] %vm3541, %v3538
      %3668 = vst.msk [vmem:[%s208 + $0x1dc] sm:$0x3] %vm3541, %v3539
      %3669 = vst.msk [vmem:[%s208 + $0x1de] sm:$0x3] %vm3541, %v3540
      %3670 = vrot.lane.b32.xlu0 %v503, 4
      %v3671 = vpop.permute.xlu0 %3670
      %3672 = vrot.lane.b32.xlu0 %v505, 4
      %v3673 = vpop.permute.xlu0 %3672
      %3678 = vrot.lane.b32.xlu0 %v247, 8
      %v3679 = vpop.permute.xlu0 %3678
      %3680 = vrot.lane.b32.xlu0 %v248, 8
      %v3681 = vpop.permute.xlu0 %3680
      %v3685 = vrot.slane %v247, 1
      %v3686 = vrot.slane %v248, 1
      %v3687 = vsel %vm253, %v3685, %v3686
      %v3688 = vrot.slane %v249, 1
      %v3689 = vsel %vm253, %v3686, %v3688
      %3690 = vrot.lane.b32.xlu0 %v3687, 12
      %v3691 = vpop.permute.xlu0 %3690
      %3692 = vrot.lane.b32.xlu0 %v3689, 12
      %v3693 = vpop.permute.xlu0 %3692
      %v3696 = vsel %vm285, %v243, %v3671
      %v3697 = vsel %vm285, %v244, %v3673
      %v3698 = vsel %vm288, %v3696, %v3679
      %v3699 = vsel %vm288, %v3697, %v3681
      %v3700 = vsel %vm291, %v3698, %v3691
      %v3701 = vsel %vm291, %v3699, %v3693
      %s3702 = scalar_lea.vmem %s1, 32
      %v3703 = vld [vmem:[%s3702] sm:$0xff]
      %v3704 = vld [vmem:[%s3702 + $0x8] sm:$0xff]
      %v3706 = vsel %vm526, %v3700, 0
      %v3709 = vsel %vm526, %v3701, 0
      %3711 = vmatprep.subr.mxu0 0.0
      %3712 = vmatpush1.msra.mxu0 %v3703
      %3713 = vmatprep.subr.mxu0 0.0
      %3714 = vmatpush1.msra.mxu0 %v3704
      %3715 = vmatprep.subr.mxu0 0.0
      %3716 = vmatpush1.msra.mxu0 0.0
      %3717 = vmatprep.subr.mxu0 0.0
      %3718 = vmatpush1.msra.mxu0 0.0
      %3719 = vmatprep.subr.mxu0 0.0
      %3720 = vmatpush1.msra.mxu0 0.0
      %3721 = vmatprep.subr.mxu0 0.0
      %3722 = vmatpush1.msra.mxu0 0.0
      %3723 = vmatprep.subr.mxu0 0.0
      %3724 = vmatpush1.msra.mxu0 0.0
      %3725 = vmatprep.subr.mxu0 0.0
      %3726 = vmatpush1.msra.mxu0 0.0
      %3727 = vmatprep.subr.mxu0 0.0
      %3728 = vmatpush1.msra.mxu0 0.0
      %3729 = vmatprep.subr.mxu0 0.0
      %3730 = vmatpush1.msra.mxu0 0.0
      %3731 = vmatprep.subr.mxu0 0.0
      %3732 = vmatpush1.msra.mxu0 0.0
      %3733 = vmatprep.subr.mxu0 0.0
      %3734 = vmatpush1.msra.mxu0 0.0
      %3735 = vmatprep.subr.mxu0 0.0
      %3736 = vmatpush1.msra.mxu0 0.0
      %3737 = vmatprep.subr.mxu0 0.0
      %3738 = vmatpush1.msra.mxu0 0.0
      %3739 = vmatprep.subr.mxu0 0.0
      %3740 = vmatpush1.msra.mxu0 0.0
      %3741 = vmatprep.subr.mxu0 0.0
      %3742 = vmatpush1.msra.mxu0 0.0
      %3743 = vmatprep.subr.mxu0 0.0
      %3744 = vmatpush1.msra.mxu0 0.0
      %3745 = vmatprep.subr.mxu0 0.0
      %3746 = vmatpush1.msra.mxu0 0.0
      %3747 = vmatprep.subr.mxu0 0.0
      %3748 = vmatpush1.msra.mxu0 0.0
      %3749 = vmatprep.subr.mxu0 0.0
      %3750 = vmatpush1.msra.mxu0 0.0
      %3751 = vmatprep.subr.mxu0 0.0
      %3752 = vmatpush1.msra.mxu0 0.0
      %3753 = vmatprep.subr.mxu0 0.0
      %3754 = vmatpush1.msra.mxu0 0.0
      %3755 = vmatprep.subr.mxu0 0.0
      %3756 = vmatpush1.msra.mxu0 0.0
      %3757 = vmatprep.subr.mxu0 0.0
      %3758 = vmatpush1.msra.mxu0 0.0
      %3759 = vmatprep.subr.mxu0 0.0
      %3760 = vmatpush1.msra.mxu0 0.0
      %3761 = vmatprep.subr.mxu0 0.0
      %3762 = vmatpush1.msra.mxu0 0.0
      %3763 = vmatprep.subr.mxu0 0.0
      %3764 = vmatpush1.msra.mxu0 0.0
      %3765 = vmatprep.subr.mxu0 0.0
      %3766 = vmatpush1.msra.mxu0 0.0
      %3767 = vmatprep.subr.mxu0 0.0
      %3768 = vmatpush1.msra.mxu0 0.0
      %3769 = vmatprep.subr.mxu0 0.0
      %3770 = vmatpush1.msra.mxu0 0.0
      %3771 = vmatprep.subr.mxu0 0.0
      %3772 = vmatpush1.msra.mxu0 0.0
      %3773 = vmatprep.subr.mxu0 0.0
      %3774 = vmatpush1.msra.mxu0 0.0
      %3775 = vmatprep.mubr.f32.mxu0 0.0
      %3776 = vmatmul.mubr.f32.gmra.mrb[0].mxu0 %v534
      %v3777 = vpop.f32.mrb[0].mxu0
      %v3778 = vadd.f32 %v524, %v3777
      %v3779 = vpop.f32.mrb[0].mxu0
      %3780 = vmatprep.mubr.f32.mxu0 0.0
      %3781 = vmatmul.mubr.f32.gmra.mrb[0].mxu0 %v537
      %v3782 = vpop.f32.mrb[0].mxu0
      %v3783 = vadd.f32 %v524, %v3782
      %v3784 = vpop.f32.mrb[0].mxu0
      %3785 = vmatprep.mubr.f32.mxu0 0.0
      %3786 = vmatmul.mubr.f32.gmra.mrb[0].mxu0 %v540
      %v3787 = vpop.f32.mrb[0].mxu0
      %v3788 = vadd.f32 %v524, %v3787
      %v3789 = vpop.f32.mrb[0].mxu0
      %3790 = vmatprep.mubr.f32.mxu0 0.0
      %3791 = vmatmul.mubr.f32.gmra.mrb[0].mxu0 %v543
      %v3792 = vpop.f32.mrb[0].mxu0
      %v3793 = vadd.f32 %v524, %v3792
      %v3794 = vpop.f32.mrb[0].mxu0
      %3795 = vmatprep.mubr.f32.mxu0 0.0
      %3796 = vmatmul.mubr.f32.gmra.mrb[0].mxu0 %v546
      %v3797 = vpop.f32.mrb[0].mxu0
      %v3798 = vadd.f32 %v524, %v3797
      %v3799 = vpop.f32.mrb[0].mxu0
      %3800 = vmatprep.mubr.f32.mxu0 0.0
      %3801 = vmatmul.mubr.f32.gmra.mrb[0].mxu0 %v549
      %v3802 = vpop.f32.mrb[0].mxu0
      %v3803 = vadd.f32 %v524, %v3802
      %v3804 = vpop.f32.mrb[0].mxu0
      %3805 = vmatprep.mubr.f32.mxu0 0.0
      %3806 = vmatmul.mubr.f32.gmra.mrb[0].mxu0 %v552
      %v3807 = vpop.f32.mrb[0].mxu0
      %v3808 = vadd.f32 %v524, %v3807
      %v3809 = vpop.f32.mrb[0].mxu0
      %3810 = vmatprep.mubr.f32.mxu0 0.0
      %3811 = vmatmul.mubr.f32.gmra.mrb[0].mxu0 %v555
      %v3812 = vpop.f32.mrb[0].mxu0
      %v3813 = vadd.f32 %v524, %v3812
      %v3814 = vpop.f32.mrb[0].mxu0
      %3815 = vmatprep.mubr.f32.mxu0 0.0
      %3816 = vmatmul.mubr.f32.gmra.mrb[0].mxu0 %v558
      %v3817 = vpop.f32.mrb[0].mxu0
      %v3818 = vadd.f32 %v524, %v3817
      %v3819 = vpop.f32.mrb[0].mxu0
      %3820 = vmatprep.mubr.f32.mxu0 0.0
      %3821 = vmatmul.mubr.f32.gmra.mrb[0].mxu0 %v561
      %v3822 = vpop.f32.mrb[0].mxu0
      %v3823 = vadd.f32 %v524, %v3822
      %v3824 = vpop.f32.mrb[0].mxu0
      %3825 = vmatprep.mubr.f32.mxu0 0.0
      %3826 = vmatmul.mubr.f32.gmra.mrb[0].mxu0 %v564
      %v3827 = vpop.f32.mrb[0].mxu0
      %v3828 = vadd.f32 %v524, %v3827
      %v3829 = vpop.f32.mrb[0].mxu0
      %3830 = vmatprep.mubr.f32.mxu0 0.0
      %3831 = vmatmul.mubr.f32.gmra.mrb[0].mxu0 %v567
      %v3832 = vpop.f32.mrb[0].mxu0
      %v3833 = vadd.f32 %v524, %v3832
      %v3834 = vpop.f32.mrb[0].mxu0
      %3835 = vmatprep.mubr.f32.mxu0 0.0
      %3836 = vmatmul.mubr.f32.gmra.mrb[0].mxu0 %v570
      %v3837 = vpop.f32.mrb[0].mxu0
      %v3838 = vadd.f32 %v524, %v3837
      %v3839 = vpop.f32.mrb[0].mxu0
      %3840 = vmatprep.mubr.f32.mxu0 0.0
      %3841 = vmatmul.mubr.f32.gmra.mrb[0].mxu0 %v573
      %v3842 = vpop.f32.mrb[0].mxu0
      %v3843 = vadd.f32 %v524, %v3842
      %v3844 = vpop.f32.mrb[0].mxu0
      %3845 = vmatprep.mubr.f32.mxu0 0.0
      %3846 = vmatmul.mubr.f32.gmra.mrb[0].mxu0 %v3706
      %v3847 = vpop.f32.mrb[0].mxu0
      %v3848 = vadd.f32 %v524, %v3847
      %v3849 = vpop.f32.mrb[0].mxu0
      %3850 = vmatprep.mubr.f32.mxu0 0.0
      %3851 = vmatmul.mubr.f32.gmra.mrb[0].mxu0 %v3709
      %v3852 = vpop.f32.mrb[0].mxu0
      %v3853 = vadd.f32 %v524, %v3852
      %v3854 = vpop.f32.mrb[0].mxu0
      %3855 = vdwg.mxu0
      %3856 = vrot.lane.b32.xlu0 %v504, 4
      %v3857 = vpop.permute.xlu0 %3856
      %3859 = vrot.lane.b32.xlu0 %v249, 8
      %v3860 = vpop.permute.xlu0 %3859
      %3862 = vrot.lane.b32.xlu0 %v3688, 12
      %v3863 = vpop.permute.xlu0 %3862
      %v3865 = vsel %vm285, %v245, %v3857
      %v3866 = vsel %vm288, %v3865, %v3860
      %v3867 = vsel %vm291, %v3866, %v3863
      %v3869 = vrot.slane %v3700, 1
      %v3870 = vrot.slane %v3701, 1
      %v3871 = vsel %vm253, %v3869, %v3870
      %v3872 = vrot.slane %v3867, 1
      %v3873 = vsel %vm253, %v3870, %v3872
      %s3874 = scalar_lea.vmem %s1, 48
      %v3875 = vld [vmem:[%s3874] sm:$0xff]
      %v3876 = vld [vmem:[%s3874 + $0x8] sm:$0xff]
      %v3877 = vsel %vm526, %v3871, 0
      %v3879 = vsel %vm526, %v3873, 0
      %3881 = vmatprep.subr.mxu0 0.0
      %3882 = vmatpush1.msra.mxu0 %v3875
      %3883 = vmatprep.subr.mxu0 0.0
      %3884 = vmatpush1.msra.mxu0 %v3876
      %3885 = vmatprep.subr.mxu0 0.0
      %3886 = vmatpush1.msra.mxu0 0.0
      %3887 = vmatprep.subr.mxu0 0.0
      %3888 = vmatpush1.msra.mxu0 0.0
      %3889 = vmatprep.subr.mxu0 0.0
      %3890 = vmatpush1.msra.mxu0 0.0
      %3891 = vmatprep.subr.mxu0 0.0
      %3892 = vmatpush1.msra.mxu0 0.0
      %3893 = vmatprep.subr.mxu0 0.0
      %3894 = vmatpush1.msra.mxu0 0.0
      %3895 = vmatprep.subr.mxu0 0.0
      %3896 = vmatpush1.msra.mxu0 0.0
      %3897 = vmatprep.subr.mxu0 0.0
      %3898 = vmatpush1.msra.mxu0 0.0
      %3899 = vmatprep.subr.mxu0 0.0
      %3900 = vmatpush1.msra.mxu0 0.0
      %3901 = vmatprep.subr.mxu0 0.0
      %3902 = vmatpush1.msra.mxu0 0.0
      %3903 = vmatprep.subr.mxu0 0.0
      %3904 = vmatpush1.msra.mxu0 0.0
      %3905 = vmatprep.subr.mxu0 0.0
      %3906 = vmatpush1.msra.mxu0 0.0
      %3907 = vmatprep.subr.mxu0 0.0
      %3908 = vmatpush1.msra.mxu0 0.0
      %3909 = vmatprep.subr.mxu0 0.0
      %3910 = vmatpush1.msra.mxu0 0.0
      %3911 = vmatprep.subr.mxu0 0.0
      %3912 = vmatpush1.msra.mxu0 0.0
      %3913 = vmatprep.subr.mxu0 0.0
      %3914 = vmatpush1.msra.mxu0 0.0
      %3915 = vmatprep.subr.mxu0 0.0
      %3916 = vmatpush1.msra.mxu0 0.0
      %3917 = vmatprep.subr.mxu0 0.0
      %3918 = vmatpush1.msra.mxu0 0.0
      %3919 = vmatprep.subr.mxu0 0.0
      %3920 = vmatpush1.msra.mxu0 0.0
      %3921 = vmatprep.subr.mxu0 0.0
      %3922 = vmatpush1.msra.mxu0 0.0
      %3923 = vmatprep.subr.mxu0 0.0
      %3924 = vmatpush1.msra.mxu0 0.0
      %3925 = vmatprep.subr.mxu0 0.0
      %3926 = vmatpush1.msra.mxu0 0.0
      %3927 = vmatprep.subr.mxu0 0.0
      %3928 = vmatpush1.msra.mxu0 0.0
      %3929 = vmatprep.subr.mxu0 0.0
      %3930 = vmatpush1.msra.mxu0 0.0
      %3931 = vmatprep.subr.mxu0 0.0
      %3932 = vmatpush1.msra.mxu0 0.0
      %3933 = vmatprep.subr.mxu0 0.0
      %3934 = vmatpush1.msra.mxu0 0.0
      %3935 = vmatprep.subr.mxu0 0.0
      %3936 = vmatpush1.msra.mxu0 0.0
      %3937 = vmatprep.subr.mxu0 0.0
      %3938 = vmatpush1.msra.mxu0 0.0
      %3939 = vmatprep.subr.mxu0 0.0
      %3940 = vmatpush1.msra.mxu0 0.0
      %3941 = vmatprep.subr.mxu0 0.0
      %3942 = vmatpush1.msra.mxu0 0.0
      %3943 = vmatprep.subr.mxu0 0.0
      %3944 = vmatpush1.msra.mxu0 0.0
      %3945 = vmatprep.mubr.f32.mxu0 0.0
      %3946 = vmatmul.mubr.f32.gmra.mrb[0].mxu0 %v871
      %v3947 = vpop.f32.mrb[0].mxu0
      %v3948 = vadd.f32 %v524, %v3947
      %v3949 = vpop.f32.mrb[0].mxu0
      %3950 = vmatprep.mubr.f32.mxu0 0.0
      %3951 = vmatmul.mubr.f32.gmra.mrb[0].mxu0 %v873
      %v3952 = vpop.f32.mrb[0].mxu0
      %v3953 = vadd.f32 %v524, %v3952
      %v3954 = vpop.f32.mrb[0].mxu0
      %3955 = vmatprep.mubr.f32.mxu0 0.0
      %3956 = vmatmul.mubr.f32.gmra.mrb[0].mxu0 %v875
      %v3957 = vpop.f32.mrb[0].mxu0
      %v3958 = vadd.f32 %v524, %v3957
      %v3959 = vpop.f32.mrb[0].mxu0
      %3960 = vmatprep.mubr.f32.mxu0 0.0
      %3961 = vmatmul.mubr.f32.gmra.mrb[0].mxu0 %v877
      %v3962 = vpop.f32.mrb[0].mxu0
      %v3963 = vadd.f32 %v524, %v3962
      %v3964 = vpop.f32.mrb[0].mxu0
      %3965 = vmatprep.mubr.f32.mxu0 0.0
      %3966 = vmatmul.mubr.f32.gmra.mrb[0].mxu0 %v879
      %v3967 = vpop.f32.mrb[0].mxu0
      %v3968 = vadd.f32 %v524, %v3967
      %v3969 = vpop.f32.mrb[0].mxu0
      %3970 = vmatprep.mubr.f32.mxu0 0.0
      %3971 = vmatmul.mubr.f32.gmra.mrb[0].mxu0 %v881
      %v3972 = vpop.f32.mrb[0].mxu0
      %v3973 = vadd.f32 %v524, %v3972
      %v3974 = vpop.f32.mrb[0].mxu0
      %3975 = vmatprep.mubr.f32.mxu0 0.0
      %3976 = vmatmul.mubr.f32.gmra.mrb[0].mxu0 %v883
      %v3977 = vpop.f32.mrb[0].mxu0
      %v3978 = vadd.f32 %v524, %v3977
      %v3979 = vpop.f32.mrb[0].mxu0
      %3980 = vmatprep.mubr.f32.mxu0 0.0
      %3981 = vmatmul.mubr.f32.gmra.mrb[0].mxu0 %v885
      %v3982 = vpop.f32.mrb[0].mxu0
      %v3983 = vadd.f32 %v524, %v3982
      %v3984 = vpop.f32.mrb[0].mxu0
      %3985 = vmatprep.mubr.f32.mxu0 0.0
      %3986 = vmatmul.mubr.f32.gmra.mrb[0].mxu0 %v887
      %v3987 = vpop.f32.mrb[0].mxu0
      %v3988 = vadd.f32 %v524, %v3987
      %v3989 = vpop.f32.mrb[0].mxu0
      %3990 = vmatprep.mubr.f32.mxu0 0.0
      %3991 = vmatmul.mubr.f32.gmra.mrb[0].mxu0 %v889
      %v3992 = vpop.f32.mrb[0].mxu0
      %v3993 = vadd.f32 %v524, %v3992
      %v3994 = vpop.f32.mrb[0].mxu0
      %3995 = vmatprep.mubr.f32.mxu0 0.0
      %3996 = vmatmul.mubr.f32.gmra.mrb[0].mxu0 %v891
      %v3997 = vpop.f32.mrb[0].mxu0
      %v3998 = vadd.f32 %v524, %v3997
      %v3999 = vpop.f32.mrb[0].mxu0
      %4000 = vmatprep.mubr.f32.mxu0 0.0
      %4001 = vmatmul.mubr.f32.gmra.mrb[0].mxu0 %v893
      %v4002 = vpop.f32.mrb[0].mxu0
      %v4003 = vadd.f32 %v524, %v4002
      %v4004 = vpop.f32.mrb[0].mxu0
      %4005 = vmatprep.mubr.f32.mxu0 0.0
      %4006 = vmatmul.mubr.f32.gmra.mrb[0].mxu0 %v895
      %v4007 = vpop.f32.mrb[0].mxu0
      %v4008 = vadd.f32 %v524, %v4007
      %v4009 = vpop.f32.mrb[0].mxu0
      %4010 = vmatprep.mubr.f32.mxu0 0.0
      %4011 = vmatmul.mubr.f32.gmra.mrb[0].mxu0 %v897
      %v4012 = vpop.f32.mrb[0].mxu0
      %v4013 = vadd.f32 %v524, %v4012
      %v4014 = vpop.f32.mrb[0].mxu0
      %4015 = vmatprep.mubr.f32.mxu0 0.0
      %4016 = vmatmul.mubr.f32.gmra.mrb[0].mxu0 %v3877
      %v4017 = vpop.f32.mrb[0].mxu0
      %v4018 = vadd.f32 %v524, %v4017
      %v4019 = vpop.f32.mrb[0].mxu0
      %4020 = vmatprep.mubr.f32.mxu0 0.0
      %4021 = vmatmul.mubr.f32.gmra.mrb[0].mxu0 %v3879
      %v4022 = vpop.f32.mrb[0].mxu0
      %v4023 = vadd.f32 %v524, %v4022
      %v4024 = vpop.f32.mrb[0].mxu0
      %4025 = vdwg.mxu0
      %v4042 = vcombine.high %v3778, %v3778
      %v4044 = vunpack.c.l.s4 1966171168
      %v4045 = vunpack.c.0.s8 %v4044
      %v4046 = vlaneseq
      %v4047 = vshrl.u32 %v4046, 7
      %v4048 = vsub.s32 %v4045, %v4047
      %v4049 = vrot.slane %v3778, %v4048
      %v4051 = vunpack.c.l.s4 1966171168
      %v4052 = vunpack.c.0.s8 %v4051
      %v4053 = vlaneseq
      %v4054 = vshrl.u32 %v4053, 7
      %v4055 = vsub.s32 %v4052, %v4054
      %v4056 = vrot.slane %v4042, %v4055
      %v4057 = vcombine.high %v4049, %v4049
      %v4058 = vcombine.high %v4056, %v4056
      %v4060 = vunpack.c.l.s4 1966171168
      %v4061 = vunpack.c.0.s8 %v4060
      %v4062 = vlaneseq
      %v4063 = vshrl.u32 %v4062, 7
      %v4064 = vsub.s32 %v4061, %v4063
      %v4065 = vrot.slane %v4049, %v4064
      %v4067 = vunpack.c.l.s4 1966171168
      %v4068 = vunpack.c.0.s8 %v4067
      %v4069 = vlaneseq
      %v4070 = vshrl.u32 %v4069, 7
      %v4071 = vsub.s32 %v4068, %v4070
      %v4072 = vrot.slane %v4056, %v4071
      %v4074 = vunpack.c.l.s4 1966171168
      %v4075 = vunpack.c.0.s8 %v4074
      %v4076 = vlaneseq
      %v4077 = vshrl.u32 %v4076, 7
      %v4078 = vsub.s32 %v4075, %v4077
      %v4079 = vrot.slane %v4057, %v4078
      %v4081 = vunpack.c.l.s4 1966171168
      %v4082 = vunpack.c.0.s8 %v4081
      %v4083 = vlaneseq
      %v4084 = vshrl.u32 %v4083, 7
      %v4085 = vsub.s32 %v4082, %v4084
      %v4086 = vrot.slane %v4058, %v4085
      %v4087 = vcombine.high %v4065, %v4065
      %v4088 = vcombine.high %v4072, %v4072
      %v4089 = vcombine.high %v4079, %v4079
      %v4090 = vcombine.high %v4086, %v4086
      %v4091 = vcombine.high %v3783, %v3783
      %v4093 = vunpack.c.l.s4 1966171168
      %v4094 = vunpack.c.0.s8 %v4093
      %v4095 = vlaneseq
      %v4096 = vshrl.u32 %v4095, 7
      %v4097 = vsub.s32 %v4094, %v4096
      %v4098 = vrot.slane %v3783, %v4097
      %v4100 = vunpack.c.l.s4 1966171168
      %v4101 = vunpack.c.0.s8 %v4100
      %v4102 = vlaneseq
      %v4103 = vshrl.u32 %v4102, 7
      %v4104 = vsub.s32 %v4101, %v4103
      %v4105 = vrot.slane %v4091, %v4104
      %v4106 = vcombine.high %v4098, %v4098
      %v4107 = vcombine.high %v4105, %v4105
      %v4109 = vunpack.c.l.s4 1966171168
      %v4110 = vunpack.c.0.s8 %v4109
      %v4111 = vlaneseq
      %v4112 = vshrl.u32 %v4111, 7
      %v4113 = vsub.s32 %v4110, %v4112
      %v4114 = vrot.slane %v4098, %v4113
      %v4116 = vunpack.c.l.s4 1966171168
      %v4117 = vunpack.c.0.s8 %v4116
      %v4118 = vlaneseq
      %v4119 = vshrl.u32 %v4118, 7
      %v4120 = vsub.s32 %v4117, %v4119
      %v4121 = vrot.slane %v4105, %v4120
      %v4123 = vunpack.c.l.s4 1966171168
      %v4124 = vunpack.c.0.s8 %v4123
      %v4125 = vlaneseq
      %v4126 = vshrl.u32 %v4125, 7
      %v4127 = vsub.s32 %v4124, %v4126
      %v4128 = vrot.slane %v4106, %v4127
      %v4130 = vunpack.c.l.s4 1966171168
      %v4131 = vunpack.c.0.s8 %v4130
      %v4132 = vlaneseq
      %v4133 = vshrl.u32 %v4132, 7
      %v4134 = vsub.s32 %v4131, %v4133
      %v4135 = vrot.slane %v4107, %v4134
      %v4136 = vcombine.high %v4114, %v4114
      %v4137 = vcombine.high %v4121, %v4121
      %v4138 = vcombine.high %v4128, %v4128
      %v4139 = vcombine.high %v4135, %v4135
      %v4140 = vcombine.high %v3788, %v3788
      %v4142 = vunpack.c.l.s4 1966171168
      %v4143 = vunpack.c.0.s8 %v4142
      %v4144 = vlaneseq
      %v4145 = vshrl.u32 %v4144, 7
      %v4146 = vsub.s32 %v4143, %v4145
      %v4147 = vrot.slane %v3788, %v4146
      %v4149 = vunpack.c.l.s4 1966171168
      %v4150 = vunpack.c.0.s8 %v4149
      %v4151 = vlaneseq
      %v4152 = vshrl.u32 %v4151, 7
      %v4153 = vsub.s32 %v4150, %v4152
      %v4154 = vrot.slane %v4140, %v4153
      %v4155 = vcombine.high %v4147, %v4147
      %v4156 = vcombine.high %v4154, %v4154
      %v4158 = vunpack.c.l.s4 1966171168
      %v4159 = vunpack.c.0.s8 %v4158
      %v4160 = vlaneseq
      %v4161 = vshrl.u32 %v4160, 7
      %v4162 = vsub.s32 %v4159, %v4161
      %v4163 = vrot.slane %v4147, %v4162
      %v4165 = vunpack.c.l.s4 1966171168
      %v4166 = vunpack.c.0.s8 %v4165
      %v4167 = vlaneseq
      %v4168 = vshrl.u32 %v4167, 7
      %v4169 = vsub.s32 %v4166, %v4168
      %v4170 = vrot.slane %v4154, %v4169
      %v4172 = vunpack.c.l.s4 1966171168
      %v4173 = vunpack.c.0.s8 %v4172
      %v4174 = vlaneseq
      %v4175 = vshrl.u32 %v4174, 7
      %v4176 = vsub.s32 %v4173, %v4175
      %v4177 = vrot.slane %v4155, %v4176
      %v4179 = vunpack.c.l.s4 1966171168
      %v4180 = vunpack.c.0.s8 %v4179
      %v4181 = vlaneseq
      %v4182 = vshrl.u32 %v4181, 7
      %v4183 = vsub.s32 %v4180, %v4182
      %v4184 = vrot.slane %v4156, %v4183
      %v4185 = vcombine.high %v4163, %v4163
      %v4186 = vcombine.high %v4170, %v4170
      %v4187 = vcombine.high %v4177, %v4177
      %v4188 = vcombine.high %v4184, %v4184
      %v4189 = vcombine.high %v3793, %v3793
      %v4191 = vunpack.c.l.s4 1966171168
      %v4192 = vunpack.c.0.s8 %v4191
      %v4193 = vlaneseq
      %v4194 = vshrl.u32 %v4193, 7
      %v4195 = vsub.s32 %v4192, %v4194
      %v4196 = vrot.slane %v3793, %v4195
      %v4198 = vunpack.c.l.s4 1966171168
      %v4199 = vunpack.c.0.s8 %v4198
      %v4200 = vlaneseq
      %v4201 = vshrl.u32 %v4200, 7
      %v4202 = vsub.s32 %v4199, %v4201
      %v4203 = vrot.slane %v4189, %v4202
      %v4204 = vcombine.high %v4196, %v4196
      %v4205 = vcombine.high %v4203, %v4203
      %v4207 = vunpack.c.l.s4 1966171168
      %v4208 = vunpack.c.0.s8 %v4207
      %v4209 = vlaneseq
      %v4210 = vshrl.u32 %v4209, 7
      %v4211 = vsub.s32 %v4208, %v4210
      %v4212 = vrot.slane %v4196, %v4211
      %v4214 = vunpack.c.l.s4 1966171168
      %v4215 = vunpack.c.0.s8 %v4214
      %v4216 = vlaneseq
      %v4217 = vshrl.u32 %v4216, 7
      %v4218 = vsub.s32 %v4215, %v4217
      %v4219 = vrot.slane %v4203, %v4218
      %v4221 = vunpack.c.l.s4 1966171168
      %v4222 = vunpack.c.0.s8 %v4221
      %v4223 = vlaneseq
      %v4224 = vshrl.u32 %v4223, 7
      %v4225 = vsub.s32 %v4222, %v4224
      %v4226 = vrot.slane %v4204, %v4225
      %v4228 = vunpack.c.l.s4 1966171168
      %v4229 = vunpack.c.0.s8 %v4228
      %v4230 = vlaneseq
      %v4231 = vshrl.u32 %v4230, 7
      %v4232 = vsub.s32 %v4229, %v4231
      %v4233 = vrot.slane %v4205, %v4232
      %v4234 = vcombine.high %v4212, %v4212
      %v4235 = vcombine.high %v4219, %v4219
      %v4236 = vcombine.high %v4226, %v4226
      %v4237 = vcombine.high %v4233, %v4233
      %v4238 = vcombine.high %v3798, %v3798
      %v4240 = vunpack.c.l.s4 1966171168
      %v4241 = vunpack.c.0.s8 %v4240
      %v4242 = vlaneseq
      %v4243 = vshrl.u32 %v4242, 7
      %v4244 = vsub.s32 %v4241, %v4243
      %v4245 = vrot.slane %v3798, %v4244
      %v4247 = vunpack.c.l.s4 1966171168
      %v4248 = vunpack.c.0.s8 %v4247
      %v4249 = vlaneseq
      %v4250 = vshrl.u32 %v4249, 7
      %v4251 = vsub.s32 %v4248, %v4250
      %v4252 = vrot.slane %v4238, %v4251
      %v4253 = vcombine.high %v4245, %v4245
      %v4254 = vcombine.high %v4252, %v4252
      %v4256 = vunpack.c.l.s4 1966171168
      %v4257 = vunpack.c.0.s8 %v4256
      %v4258 = vlaneseq
      %v4259 = vshrl.u32 %v4258, 7
      %v4260 = vsub.s32 %v4257, %v4259
      %v4261 = vrot.slane %v4245, %v4260
      %v4263 = vunpack.c.l.s4 1966171168
      %v4264 = vunpack.c.0.s8 %v4263
      %v4265 = vlaneseq
      %v4266 = vshrl.u32 %v4265, 7
      %v4267 = vsub.s32 %v4264, %v4266
      %v4268 = vrot.slane %v4252, %v4267
      %v4270 = vunpack.c.l.s4 1966171168
      %v4271 = vunpack.c.0.s8 %v4270
      %v4272 = vlaneseq
      %v4273 = vshrl.u32 %v4272, 7
      %v4274 = vsub.s32 %v4271, %v4273
      %v4275 = vrot.slane %v4253, %v4274
      %v4277 = vunpack.c.l.s4 1966171168
      %v4278 = vunpack.c.0.s8 %v4277
      %v4279 = vlaneseq
      %v4280 = vshrl.u32 %v4279, 7
      %v4281 = vsub.s32 %v4278, %v4280
      %v4282 = vrot.slane %v4254, %v4281
      %v4283 = vcombine.high %v4261, %v4261
      %v4284 = vcombine.high %v4268, %v4268
      %v4285 = vcombine.high %v4275, %v4275
      %v4286 = vcombine.high %v4282, %v4282
      %v4287 = vcombine.high %v3803, %v3803
      %v4289 = vunpack.c.l.s4 1966171168
      %v4290 = vunpack.c.0.s8 %v4289
      %v4291 = vlaneseq
      %v4292 = vshrl.u32 %v4291, 7
      %v4293 = vsub.s32 %v4290, %v4292
      %v4294 = vrot.slane %v3803, %v4293
      %v4296 = vunpack.c.l.s4 1966171168
      %v4297 = vunpack.c.0.s8 %v4296
      %v4298 = vlaneseq
      %v4299 = vshrl.u32 %v4298, 7
      %v4300 = vsub.s32 %v4297, %v4299
      %v4301 = vrot.slane %v4287, %v4300
      %v4302 = vcombine.high %v4294, %v4294
      %v4303 = vcombine.high %v4301, %v4301
      %v4305 = vunpack.c.l.s4 1966171168
      %v4306 = vunpack.c.0.s8 %v4305
      %v4307 = vlaneseq
      %v4308 = vshrl.u32 %v4307, 7
      %v4309 = vsub.s32 %v4306, %v4308
      %v4310 = vrot.slane %v4294, %v4309
      %v4312 = vunpack.c.l.s4 1966171168
      %v4313 = vunpack.c.0.s8 %v4312
      %v4314 = vlaneseq
      %v4315 = vshrl.u32 %v4314, 7
      %v4316 = vsub.s32 %v4313, %v4315
      %v4317 = vrot.slane %v4301, %v4316
      %v4319 = vunpack.c.l.s4 1966171168
      %v4320 = vunpack.c.0.s8 %v4319
      %v4321 = vlaneseq
      %v4322 = vshrl.u32 %v4321, 7
      %v4323 = vsub.s32 %v4320, %v4322
      %v4324 = vrot.slane %v4302, %v4323
      %v4326 = vunpack.c.l.s4 1966171168
      %v4327 = vunpack.c.0.s8 %v4326
      %v4328 = vlaneseq
      %v4329 = vshrl.u32 %v4328, 7
      %v4330 = vsub.s32 %v4327, %v4329
      %v4331 = vrot.slane %v4303, %v4330
      %v4332 = vcombine.high %v4310, %v4310
      %v4333 = vcombine.high %v4317, %v4317
      %v4334 = vcombine.high %v4324, %v4324
      %v4335 = vcombine.high %v4331, %v4331
      %v4336 = vcombine.high %v3808, %v3808
      %v4338 = vunpack.c.l.s4 1966171168
      %v4339 = vunpack.c.0.s8 %v4338
      %v4340 = vlaneseq
      %v4341 = vshrl.u32 %v4340, 7
      %v4342 = vsub.s32 %v4339, %v4341
      %v4343 = vrot.slane %v3808, %v4342
      %v4345 = vunpack.c.l.s4 1966171168
      %v4346 = vunpack.c.0.s8 %v4345
      %v4347 = vlaneseq
      %v4348 = vshrl.u32 %v4347, 7
      %v4349 = vsub.s32 %v4346, %v4348
      %v4350 = vrot.slane %v4336, %v4349
      %v4351 = vcombine.high %v4343, %v4343
      %v4352 = vcombine.high %v4350, %v4350
      %v4354 = vunpack.c.l.s4 1966171168
      %v4355 = vunpack.c.0.s8 %v4354
      %v4356 = vlaneseq
      %v4357 = vshrl.u32 %v4356, 7
      %v4358 = vsub.s32 %v4355, %v4357
      %v4359 = vrot.slane %v4343, %v4358
      %v4361 = vunpack.c.l.s4 1966171168
      %v4362 = vunpack.c.0.s8 %v4361
      %v4363 = vlaneseq
      %v4364 = vshrl.u32 %v4363, 7
      %v4365 = vsub.s32 %v4362, %v4364
      %v4366 = vrot.slane %v4350, %v4365
      %v4368 = vunpack.c.l.s4 1966171168
      %v4369 = vunpack.c.0.s8 %v4368
      %v4370 = vlaneseq
      %v4371 = vshrl.u32 %v4370, 7
      %v4372 = vsub.s32 %v4369, %v4371
      %v4373 = vrot.slane %v4351, %v4372
      %v4375 = vunpack.c.l.s4 1966171168
      %v4376 = vunpack.c.0.s8 %v4375
      %v4377 = vlaneseq
      %v4378 = vshrl.u32 %v4377, 7
      %v4379 = vsub.s32 %v4376, %v4378
      %v4380 = vrot.slane %v4352, %v4379
      %v4381 = vcombine.high %v4359, %v4359
      %v4382 = vcombine.high %v4366, %v4366
      %v4383 = vcombine.high %v4373, %v4373
      %v4384 = vcombine.high %v4380, %v4380
      %v4385 = vcombine.high %v3813, %v3813
      %v4387 = vunpack.c.l.s4 1966171168
      %v4388 = vunpack.c.0.s8 %v4387
      %v4389 = vlaneseq
      %v4390 = vshrl.u32 %v4389, 7
      %v4391 = vsub.s32 %v4388, %v4390
      %v4392 = vrot.slane %v3813, %v4391
      %v4394 = vunpack.c.l.s4 1966171168
      %v4395 = vunpack.c.0.s8 %v4394
      %v4396 = vlaneseq
      %v4397 = vshrl.u32 %v4396, 7
      %v4398 = vsub.s32 %v4395, %v4397
      %v4399 = vrot.slane %v4385, %v4398
      %v4400 = vcombine.high %v4392, %v4392
      %v4401 = vcombine.high %v4399, %v4399
      %v4403 = vunpack.c.l.s4 1966171168
      %v4404 = vunpack.c.0.s8 %v4403
      %v4405 = vlaneseq
      %v4406 = vshrl.u32 %v4405, 7
      %v4407 = vsub.s32 %v4404, %v4406
      %v4408 = vrot.slane %v4392, %v4407
      %v4410 = vunpack.c.l.s4 1966171168
      %v4411 = vunpack.c.0.s8 %v4410
      %v4412 = vlaneseq
      %v4413 = vshrl.u32 %v4412, 7
      %v4414 = vsub.s32 %v4411, %v4413
      %v4415 = vrot.slane %v4399, %v4414
      %v4417 = vunpack.c.l.s4 1966171168
      %v4418 = vunpack.c.0.s8 %v4417
      %v4419 = vlaneseq
      %v4420 = vshrl.u32 %v4419, 7
      %v4421 = vsub.s32 %v4418, %v4420
      %v4422 = vrot.slane %v4400, %v4421
      %v4424 = vunpack.c.l.s4 1966171168
      %v4425 = vunpack.c.0.s8 %v4424
      %v4426 = vlaneseq
      %v4427 = vshrl.u32 %v4426, 7
      %v4428 = vsub.s32 %v4425, %v4427
      %v4429 = vrot.slane %v4401, %v4428
      %v4430 = vcombine.high %v4408, %v4408
      %v4431 = vcombine.high %v4415, %v4415
      %v4432 = vcombine.high %v4422, %v4422
      %v4433 = vcombine.high %v4429, %v4429
      %v4434 = vcombine.high %v3818, %v3818
      %v4436 = vunpack.c.l.s4 1966171168
      %v4437 = vunpack.c.0.s8 %v4436
      %v4438 = vlaneseq
      %v4439 = vshrl.u32 %v4438, 7
      %v4440 = vsub.s32 %v4437, %v4439
      %v4441 = vrot.slane %v3818, %v4440
      %v4443 = vunpack.c.l.s4 1966171168
      %v4444 = vunpack.c.0.s8 %v4443
      %v4445 = vlaneseq
      %v4446 = vshrl.u32 %v4445, 7
      %v4447 = vsub.s32 %v4444, %v4446
      %v4448 = vrot.slane %v4434, %v4447
      %v4449 = vcombine.high %v4441, %v4441
      %v4450 = vcombine.high %v4448, %v4448
      %v4452 = vunpack.c.l.s4 1966171168
      %v4453 = vunpack.c.0.s8 %v4452
      %v4454 = vlaneseq
      %v4455 = vshrl.u32 %v4454, 7
      %v4456 = vsub.s32 %v4453, %v4455
      %v4457 = vrot.slane %v4441, %v4456
      %v4459 = vunpack.c.l.s4 1966171168
      %v4460 = vunpack.c.0.s8 %v4459
      %v4461 = vlaneseq
      %v4462 = vshrl.u32 %v4461, 7
      %v4463 = vsub.s32 %v4460, %v4462
      %v4464 = vrot.slane %v4448, %v4463
      %v4466 = vunpack.c.l.s4 1966171168
      %v4467 = vunpack.c.0.s8 %v4466
      %v4468 = vlaneseq
      %v4469 = vshrl.u32 %v4468, 7
      %v4470 = vsub.s32 %v4467, %v4469
      %v4471 = vrot.slane %v4449, %v4470
      %v4473 = vunpack.c.l.s4 1966171168
      %v4474 = vunpack.c.0.s8 %v4473
      %v4475 = vlaneseq
      %v4476 = vshrl.u32 %v4475, 7
      %v4477 = vsub.s32 %v4474, %v4476
      %v4478 = vrot.slane %v4450, %v4477
      %v4479 = vcombine.high %v4457, %v4457
      %v4480 = vcombine.high %v4464, %v4464
      %v4481 = vcombine.high %v4471, %v4471
      %v4482 = vcombine.high %v4478, %v4478
      %v4483 = vcombine.high %v3823, %v3823
      %v4485 = vunpack.c.l.s4 1966171168
      %v4486 = vunpack.c.0.s8 %v4485
      %v4487 = vlaneseq
      %v4488 = vshrl.u32 %v4487, 7
      %v4489 = vsub.s32 %v4486, %v4488
      %v4490 = vrot.slane %v3823, %v4489
      %v4492 = vunpack.c.l.s4 1966171168
      %v4493 = vunpack.c.0.s8 %v4492
      %v4494 = vlaneseq
      %v4495 = vshrl.u32 %v4494, 7
      %v4496 = vsub.s32 %v4493, %v4495
      %v4497 = vrot.slane %v4483, %v4496
      %v4498 = vcombine.high %v4490, %v4490
      %v4499 = vcombine.high %v4497, %v4497
      %v4501 = vunpack.c.l.s4 1966171168
      %v4502 = vunpack.c.0.s8 %v4501
      %v4503 = vlaneseq
      %v4504 = vshrl.u32 %v4503, 7
      %v4505 = vsub.s32 %v4502, %v4504
      %v4506 = vrot.slane %v4490, %v4505
      %v4508 = vunpack.c.l.s4 1966171168
      %v4509 = vunpack.c.0.s8 %v4508
      %v4510 = vlaneseq
      %v4511 = vshrl.u32 %v4510, 7
      %v4512 = vsub.s32 %v4509, %v4511
      %v4513 = vrot.slane %v4497, %v4512
      %v4515 = vunpack.c.l.s4 1966171168
      %v4516 = vunpack.c.0.s8 %v4515
      %v4517 = vlaneseq
      %v4518 = vshrl.u32 %v4517, 7
      %v4519 = vsub.s32 %v4516, %v4518
      %v4520 = vrot.slane %v4498, %v4519
      %v4522 = vunpack.c.l.s4 1966171168
      %v4523 = vunpack.c.0.s8 %v4522
      %v4524 = vlaneseq
      %v4525 = vshrl.u32 %v4524, 7
      %v4526 = vsub.s32 %v4523, %v4525
      %v4527 = vrot.slane %v4499, %v4526
      %v4528 = vcombine.high %v4506, %v4506
      %v4529 = vcombine.high %v4513, %v4513
      %v4530 = vcombine.high %v4520, %v4520
      %v4531 = vcombine.high %v4527, %v4527
      %v4532 = vcombine.high %v3828, %v3828
      %v4534 = vunpack.c.l.s4 1966171168
      %v4535 = vunpack.c.0.s8 %v4534
      %v4536 = vlaneseq
      %v4537 = vshrl.u32 %v4536, 7
      %v4538 = vsub.s32 %v4535, %v4537
      %v4539 = vrot.slane %v3828, %v4538
      %v4541 = vunpack.c.l.s4 1966171168
      %v4542 = vunpack.c.0.s8 %v4541
      %v4543 = vlaneseq
      %v4544 = vshrl.u32 %v4543, 7
      %v4545 = vsub.s32 %v4542, %v4544
      %v4546 = vrot.slane %v4532, %v4545
      %v4547 = vcombine.high %v4539, %v4539
      %v4548 = vcombine.high %v4546, %v4546
      %v4550 = vunpack.c.l.s4 1966171168
      %v4551 = vunpack.c.0.s8 %v4550
      %v4552 = vlaneseq
      %v4553 = vshrl.u32 %v4552, 7
      %v4554 = vsub.s32 %v4551, %v4553
      %v4555 = vrot.slane %v4539, %v4554
      %v4557 = vunpack.c.l.s4 1966171168
      %v4558 = vunpack.c.0.s8 %v4557
      %v4559 = vlaneseq
      %v4560 = vshrl.u32 %v4559, 7
      %v4561 = vsub.s32 %v4558, %v4560
      %v4562 = vrot.slane %v4546, %v4561
      %v4564 = vunpack.c.l.s4 1966171168
      %v4565 = vunpack.c.0.s8 %v4564
      %v4566 = vlaneseq
      %v4567 = vshrl.u32 %v4566, 7
      %v4568 = vsub.s32 %v4565, %v4567
      %v4569 = vrot.slane %v4547, %v4568
      %v4571 = vunpack.c.l.s4 1966171168
      %v4572 = vunpack.c.0.s8 %v4571
      %v4573 = vlaneseq
      %v4574 = vshrl.u32 %v4573, 7
      %v4575 = vsub.s32 %v4572, %v4574
      %v4576 = vrot.slane %v4548, %v4575
      %v4577 = vcombine.high %v4555, %v4555
      %v4578 = vcombine.high %v4562, %v4562
      %v4579 = vcombine.high %v4569, %v4569
      %v4580 = vcombine.high %v4576, %v4576
      %v4581 = vcombine.high %v3833, %v3833
      %v4583 = vunpack.c.l.s4 1966171168
      %v4584 = vunpack.c.0.s8 %v4583
      %v4585 = vlaneseq
      %v4586 = vshrl.u32 %v4585, 7
      %v4587 = vsub.s32 %v4584, %v4586
      %v4588 = vrot.slane %v3833, %v4587
      %v4590 = vunpack.c.l.s4 1966171168
      %v4591 = vunpack.c.0.s8 %v4590
      %v4592 = vlaneseq
      %v4593 = vshrl.u32 %v4592, 7
      %v4594 = vsub.s32 %v4591, %v4593
      %v4595 = vrot.slane %v4581, %v4594
      %v4596 = vcombine.high %v4588, %v4588
      %v4597 = vcombine.high %v4595, %v4595
      %v4599 = vunpack.c.l.s4 1966171168
      %v4600 = vunpack.c.0.s8 %v4599
      %v4601 = vlaneseq
      %v4602 = vshrl.u32 %v4601, 7
      %v4603 = vsub.s32 %v4600, %v4602
      %v4604 = vrot.slane %v4588, %v4603
      %v4606 = vunpack.c.l.s4 1966171168
      %v4607 = vunpack.c.0.s8 %v4606
      %v4608 = vlaneseq
      %v4609 = vshrl.u32 %v4608, 7
      %v4610 = vsub.s32 %v4607, %v4609
      %v4611 = vrot.slane %v4595, %v4610
      %v4613 = vunpack.c.l.s4 1966171168
      %v4614 = vunpack.c.0.s8 %v4613
      %v4615 = vlaneseq
      %v4616 = vshrl.u32 %v4615, 7
      %v4617 = vsub.s32 %v4614, %v4616
      %v4618 = vrot.slane %v4596, %v4617
      %v4620 = vunpack.c.l.s4 1966171168
      %v4621 = vunpack.c.0.s8 %v4620
      %v4622 = vlaneseq
      %v4623 = vshrl.u32 %v4622, 7
      %v4624 = vsub.s32 %v4621, %v4623
      %v4625 = vrot.slane %v4597, %v4624
      %v4626 = vcombine.high %v4604, %v4604
      %v4627 = vcombine.high %v4611, %v4611
      %v4628 = vcombine.high %v4618, %v4618
      %v4629 = vcombine.high %v4625, %v4625
      %v4630 = vcombine.high %v3838, %v3838
      %v4632 = vunpack.c.l.s4 1966171168
      %v4633 = vunpack.c.0.s8 %v4632
      %v4634 = vlaneseq
      %v4635 = vshrl.u32 %v4634, 7
      %v4636 = vsub.s32 %v4633, %v4635
      %v4637 = vrot.slane %v3838, %v4636
      %v4639 = vunpack.c.l.s4 1966171168
      %v4640 = vunpack.c.0.s8 %v4639
      %v4641 = vlaneseq
      %v4642 = vshrl.u32 %v4641, 7
      %v4643 = vsub.s32 %v4640, %v4642
      %v4644 = vrot.slane %v4630, %v4643
      %v4645 = vcombine.high %v4637, %v4637
      %v4646 = vcombine.high %v4644, %v4644
      %v4648 = vunpack.c.l.s4 1966171168
      %v4649 = vunpack.c.0.s8 %v4648
      %v4650 = vlaneseq
      %v4651 = vshrl.u32 %v4650, 7
      %v4652 = vsub.s32 %v4649, %v4651
      %v4653 = vrot.slane %v4637, %v4652
      %v4655 = vunpack.c.l.s4 1966171168
      %v4656 = vunpack.c.0.s8 %v4655
      %v4657 = vlaneseq
      %v4658 = vshrl.u32 %v4657, 7
      %v4659 = vsub.s32 %v4656, %v4658
      %v4660 = vrot.slane %v4644, %v4659
      %v4662 = vunpack.c.l.s4 1966171168
      %v4663 = vunpack.c.0.s8 %v4662
      %v4664 = vlaneseq
      %v4665 = vshrl.u32 %v4664, 7
      %v4666 = vsub.s32 %v4663, %v4665
      %v4667 = vrot.slane %v4645, %v4666
      %v4669 = vunpack.c.l.s4 1966171168
      %v4670 = vunpack.c.0.s8 %v4669
      %v4671 = vlaneseq
      %v4672 = vshrl.u32 %v4671, 7
      %v4673 = vsub.s32 %v4670, %v4672
      %v4674 = vrot.slane %v4646, %v4673
      %v4675 = vcombine.high %v4653, %v4653
      %v4676 = vcombine.high %v4660, %v4660
      %v4677 = vcombine.high %v4667, %v4667
      %v4678 = vcombine.high %v4674, %v4674
      %v4679 = vcombine.high %v3843, %v3843
      %v4681 = vunpack.c.l.s4 1966171168
      %v4682 = vunpack.c.0.s8 %v4681
      %v4683 = vlaneseq
      %v4684 = vshrl.u32 %v4683, 7
      %v4685 = vsub.s32 %v4682, %v4684
      %v4686 = vrot.slane %v3843, %v4685
      %v4688 = vunpack.c.l.s4 1966171168
      %v4689 = vunpack.c.0.s8 %v4688
      %v4690 = vlaneseq
      %v4691 = vshrl.u32 %v4690, 7
      %v4692 = vsub.s32 %v4689, %v4691
      %v4693 = vrot.slane %v4679, %v4692
      %v4694 = vcombine.high %v4686, %v4686
      %v4695 = vcombine.high %v4693, %v4693
      %v4697 = vunpack.c.l.s4 1966171168
      %v4698 = vunpack.c.0.s8 %v4697
      %v4699 = vlaneseq
      %v4700 = vshrl.u32 %v4699, 7
      %v4701 = vsub.s32 %v4698, %v4700
      %v4702 = vrot.slane %v4686, %v4701
      %v4704 = vunpack.c.l.s4 1966171168
      %v4705 = vunpack.c.0.s8 %v4704
      %v4706 = vlaneseq
      %v4707 = vshrl.u32 %v4706, 7
      %v4708 = vsub.s32 %v4705, %v4707
      %v4709 = vrot.slane %v4693, %v4708
      %v4711 = vunpack.c.l.s4 1966171168
      %v4712 = vunpack.c.0.s8 %v4711
      %v4713 = vlaneseq
      %v4714 = vshrl.u32 %v4713, 7
      %v4715 = vsub.s32 %v4712, %v4714
      %v4716 = vrot.slane %v4694, %v4715
      %v4718 = vunpack.c.l.s4 1966171168
      %v4719 = vunpack.c.0.s8 %v4718
      %v4720 = vlaneseq
      %v4721 = vshrl.u32 %v4720, 7
      %v4722 = vsub.s32 %v4719, %v4721
      %v4723 = vrot.slane %v4695, %v4722
      %v4724 = vcombine.high %v4702, %v4702
      %v4725 = vcombine.high %v4709, %v4709
      %v4726 = vcombine.high %v4716, %v4716
      %v4727 = vcombine.high %v4723, %v4723
      %v4728 = vcombine.high %v3848, %v3848
      %v4730 = vunpack.c.l.s4 1966171168
      %v4731 = vunpack.c.0.s8 %v4730
      %v4732 = vlaneseq
      %v4733 = vshrl.u32 %v4732, 7
      %v4734 = vsub.s32 %v4731, %v4733
      %v4735 = vrot.slane %v3848, %v4734
      %v4737 = vunpack.c.l.s4 1966171168
      %v4738 = vunpack.c.0.s8 %v4737
      %v4739 = vlaneseq
      %v4740 = vshrl.u32 %v4739, 7
      %v4741 = vsub.s32 %v4738, %v4740
      %v4742 = vrot.slane %v4728, %v4741
      %v4743 = vcombine.high %v4735, %v4735
      %v4744 = vcombine.high %v4742, %v4742
      %v4746 = vunpack.c.l.s4 1966171168
      %v4747 = vunpack.c.0.s8 %v4746
      %v4748 = vlaneseq
      %v4749 = vshrl.u32 %v4748, 7
      %v4750 = vsub.s32 %v4747, %v4749
      %v4751 = vrot.slane %v4735, %v4750
      %v4753 = vunpack.c.l.s4 1966171168
      %v4754 = vunpack.c.0.s8 %v4753
      %v4755 = vlaneseq
      %v4756 = vshrl.u32 %v4755, 7
      %v4757 = vsub.s32 %v4754, %v4756
      %v4758 = vrot.slane %v4742, %v4757
      %v4760 = vunpack.c.l.s4 1966171168
      %v4761 = vunpack.c.0.s8 %v4760
      %v4762 = vlaneseq
      %v4763 = vshrl.u32 %v4762, 7
      %v4764 = vsub.s32 %v4761, %v4763
      %v4765 = vrot.slane %v4743, %v4764
      %v4767 = vunpack.c.l.s4 1966171168
      %v4768 = vunpack.c.0.s8 %v4767
      %v4769 = vlaneseq
      %v4770 = vshrl.u32 %v4769, 7
      %v4771 = vsub.s32 %v4768, %v4770
      %v4772 = vrot.slane %v4744, %v4771
      %v4773 = vcombine.high %v4751, %v4751
      %v4774 = vcombine.high %v4758, %v4758
      %v4775 = vcombine.high %v4765, %v4765
      %v4776 = vcombine.high %v4772, %v4772
      %v4777 = vcombine.high %v3853, %v3853
      %v4779 = vunpack.c.l.s4 1966171168
      %v4780 = vunpack.c.0.s8 %v4779
      %v4781 = vlaneseq
      %v4782 = vshrl.u32 %v4781, 7
      %v4783 = vsub.s32 %v4780, %v4782
      %v4784 = vrot.slane %v3853, %v4783
      %v4786 = vunpack.c.l.s4 1966171168
      %v4787 = vunpack.c.0.s8 %v4786
      %v4788 = vlaneseq
      %v4789 = vshrl.u32 %v4788, 7
      %v4790 = vsub.s32 %v4787, %v4789
      %v4791 = vrot.slane %v4777, %v4790
      %v4792 = vcombine.high %v4784, %v4784
      %v4793 = vcombine.high %v4791, %v4791
      %v4795 = vunpack.c.l.s4 1966171168
      %v4796 = vunpack.c.0.s8 %v4795
      %v4797 = vlaneseq
      %v4798 = vshrl.u32 %v4797, 7
      %v4799 = vsub.s32 %v4796, %v4798
      %v4800 = vrot.slane %v4784, %v4799
      %v4802 = vunpack.c.l.s4 1966171168
      %v4803 = vunpack.c.0.s8 %v4802
      %v4804 = vlaneseq
      %v4805 = vshrl.u32 %v4804, 7
      %v4806 = vsub.s32 %v4803, %v4805
      %v4807 = vrot.slane %v4791, %v4806
      %v4809 = vunpack.c.l.s4 1966171168
      %v4810 = vunpack.c.0.s8 %v4809
      %v4811 = vlaneseq
      %v4812 = vshrl.u32 %v4811, 7
      %v4813 = vsub.s32 %v4810, %v4812
      %v4814 = vrot.slane %v4792, %v4813
      %v4816 = vunpack.c.l.s4 1966171168
      %v4817 = vunpack.c.0.s8 %v4816
      %v4818 = vlaneseq
      %v4819 = vshrl.u32 %v4818, 7
      %v4820 = vsub.s32 %v4817, %v4819
      %v4821 = vrot.slane %v4793, %v4820
      %v4822 = vcombine.high %v4800, %v4800
      %v4823 = vcombine.high %v4807, %v4807
      %v4824 = vcombine.high %v4814, %v4814
      %v4825 = vcombine.high %v4821, %v4821
      %v4970 = vcombine.high %v3948, %v3948
      %v4972 = vunpack.c.l.s4 1966171168
      %v4973 = vunpack.c.0.s8 %v4972
      %v4974 = vlaneseq
      %v4975 = vshrl.u32 %v4974, 7
      %v4976 = vsub.s32 %v4973, %v4975
      %v4977 = vrot.slane %v3948, %v4976
      %v4979 = vunpack.c.l.s4 1966171168
      %v4980 = vunpack.c.0.s8 %v4979
      %v4981 = vlaneseq
      %v4982 = vshrl.u32 %v4981, 7
      %v4983 = vsub.s32 %v4980, %v4982
      %v4984 = vrot.slane %v4970, %v4983
      %v4985 = vcombine.high %v4977, %v4977
      %v4986 = vcombine.high %v4984, %v4984
      %v4988 = vunpack.c.l.s4 1966171168
      %v4989 = vunpack.c.0.s8 %v4988
      %v4990 = vlaneseq
      %v4991 = vshrl.u32 %v4990, 7
      %v4992 = vsub.s32 %v4989, %v4991
      %v4993 = vrot.slane %v4977, %v4992
      %v4995 = vunpack.c.l.s4 1966171168
      %v4996 = vunpack.c.0.s8 %v4995
      %v4997 = vlaneseq
      %v4998 = vshrl.u32 %v4997, 7
      %v4999 = vsub.s32 %v4996, %v4998
      %v5000 = vrot.slane %v4984, %v4999
      %v5002 = vunpack.c.l.s4 1966171168
      %v5003 = vunpack.c.0.s8 %v5002
      %v5004 = vlaneseq
      %v5005 = vshrl.u32 %v5004, 7
      %v5006 = vsub.s32 %v5003, %v5005
      %v5007 = vrot.slane %v4985, %v5006
      %v5009 = vunpack.c.l.s4 1966171168
      %v5010 = vunpack.c.0.s8 %v5009
      %v5011 = vlaneseq
      %v5012 = vshrl.u32 %v5011, 7
      %v5013 = vsub.s32 %v5010, %v5012
      %v5014 = vrot.slane %v4986, %v5013
      %v5015 = vcombine.high %v4993, %v4993
      %v5016 = vcombine.high %v5000, %v5000
      %v5017 = vcombine.high %v5007, %v5007
      %v5018 = vcombine.high %v5014, %v5014
      %v5019 = vcombine.high %v3953, %v3953
      %v5021 = vunpack.c.l.s4 1966171168
      %v5022 = vunpack.c.0.s8 %v5021
      %v5023 = vlaneseq
      %v5024 = vshrl.u32 %v5023, 7
      %v5025 = vsub.s32 %v5022, %v5024
      %v5026 = vrot.slane %v3953, %v5025
      %v5028 = vunpack.c.l.s4 1966171168
      %v5029 = vunpack.c.0.s8 %v5028
      %v5030 = vlaneseq
      %v5031 = vshrl.u32 %v5030, 7
      %v5032 = vsub.s32 %v5029, %v5031
      %v5033 = vrot.slane %v5019, %v5032
      %v5034 = vcombine.high %v5026, %v5026
      %v5035 = vcombine.high %v5033, %v5033
      %v5037 = vunpack.c.l.s4 1966171168
      %v5038 = vunpack.c.0.s8 %v5037
      %v5039 = vlaneseq
      %v5040 = vshrl.u32 %v5039, 7
      %v5041 = vsub.s32 %v5038, %v5040
      %v5042 = vrot.slane %v5026, %v5041
      %v5044 = vunpack.c.l.s4 1966171168
      %v5045 = vunpack.c.0.s8 %v5044
      %v5046 = vlaneseq
      %v5047 = vshrl.u32 %v5046, 7
      %v5048 = vsub.s32 %v5045, %v5047
      %v5049 = vrot.slane %v5033, %v5048
      %v5051 = vunpack.c.l.s4 1966171168
      %v5052 = vunpack.c.0.s8 %v5051
      %v5053 = vlaneseq
      %v5054 = vshrl.u32 %v5053, 7
      %v5055 = vsub.s32 %v5052, %v5054
      %v5056 = vrot.slane %v5034, %v5055
      %v5058 = vunpack.c.l.s4 1966171168
      %v5059 = vunpack.c.0.s8 %v5058
      %v5060 = vlaneseq
      %v5061 = vshrl.u32 %v5060, 7
      %v5062 = vsub.s32 %v5059, %v5061
      %v5063 = vrot.slane %v5035, %v5062
      %v5064 = vcombine.high %v5042, %v5042
      %v5065 = vcombine.high %v5049, %v5049
      %v5066 = vcombine.high %v5056, %v5056
      %v5067 = vcombine.high %v5063, %v5063
      %v5068 = vcombine.high %v3958, %v3958
      %v5070 = vunpack.c.l.s4 1966171168
      %v5071 = vunpack.c.0.s8 %v5070
      %v5072 = vlaneseq
      %v5073 = vshrl.u32 %v5072, 7
      %v5074 = vsub.s32 %v5071, %v5073
      %v5075 = vrot.slane %v3958, %v5074
      %v5077 = vunpack.c.l.s4 1966171168
      %v5078 = vunpack.c.0.s8 %v5077
      %v5079 = vlaneseq
      %v5080 = vshrl.u32 %v5079, 7
      %v5081 = vsub.s32 %v5078, %v5080
      %v5082 = vrot.slane %v5068, %v5081
      %v5083 = vcombine.high %v5075, %v5075
      %v5084 = vcombine.high %v5082, %v5082
      %v5086 = vunpack.c.l.s4 1966171168
      %v5087 = vunpack.c.0.s8 %v5086
      %v5088 = vlaneseq
      %v5089 = vshrl.u32 %v5088, 7
      %v5090 = vsub.s32 %v5087, %v5089
      %v5091 = vrot.slane %v5075, %v5090
      %v5093 = vunpack.c.l.s4 1966171168
      %v5094 = vunpack.c.0.s8 %v5093
      %v5095 = vlaneseq
      %v5096 = vshrl.u32 %v5095, 7
      %v5097 = vsub.s32 %v5094, %v5096
      %v5098 = vrot.slane %v5082, %v5097
      %v5100 = vunpack.c.l.s4 1966171168
      %v5101 = vunpack.c.0.s8 %v5100
      %v5102 = vlaneseq
      %v5103 = vshrl.u32 %v5102, 7
      %v5104 = vsub.s32 %v5101, %v5103
      %v5105 = vrot.slane %v5083, %v5104
      %v5107 = vunpack.c.l.s4 1966171168
      %v5108 = vunpack.c.0.s8 %v5107
      %v5109 = vlaneseq
      %v5110 = vshrl.u32 %v5109, 7
      %v5111 = vsub.s32 %v5108, %v5110
      %v5112 = vrot.slane %v5084, %v5111
      %v5113 = vcombine.high %v5091, %v5091
      %v5114 = vcombine.high %v5098, %v5098
      %v5115 = vcombine.high %v5105, %v5105
      %v5116 = vcombine.high %v5112, %v5112
      %v5117 = vcombine.high %v3963, %v3963
      %v5119 = vunpack.c.l.s4 1966171168
      %v5120 = vunpack.c.0.s8 %v5119
      %v5121 = vlaneseq
      %v5122 = vshrl.u32 %v5121, 7
      %v5123 = vsub.s32 %v5120, %v5122
      %v5124 = vrot.slane %v3963, %v5123
      %v5126 = vunpack.c.l.s4 1966171168
      %v5127 = vunpack.c.0.s8 %v5126
      %v5128 = vlaneseq
      %v5129 = vshrl.u32 %v5128, 7
      %v5130 = vsub.s32 %v5127, %v5129
      %v5131 = vrot.slane %v5117, %v5130
      %v5132 = vcombine.high %v5124, %v5124
      %v5133 = vcombine.high %v5131, %v5131
      %v5135 = vunpack.c.l.s4 1966171168
      %v5136 = vunpack.c.0.s8 %v5135
      %v5137 = vlaneseq
      %v5138 = vshrl.u32 %v5137, 7
      %v5139 = vsub.s32 %v5136, %v5138
      %v5140 = vrot.slane %v5124, %v5139
      %v5142 = vunpack.c.l.s4 1966171168
      %v5143 = vunpack.c.0.s8 %v5142
      %v5144 = vlaneseq
      %v5145 = vshrl.u32 %v5144, 7
      %v5146 = vsub.s32 %v5143, %v5145
      %v5147 = vrot.slane %v5131, %v5146
      %v5149 = vunpack.c.l.s4 1966171168
      %v5150 = vunpack.c.0.s8 %v5149
      %v5151 = vlaneseq
      %v5152 = vshrl.u32 %v5151, 7
      %v5153 = vsub.s32 %v5150, %v5152
      %v5154 = vrot.slane %v5132, %v5153
      %v5156 = vunpack.c.l.s4 1966171168
      %v5157 = vunpack.c.0.s8 %v5156
      %v5158 = vlaneseq
      %v5159 = vshrl.u32 %v5158, 7
      %v5160 = vsub.s32 %v5157, %v5159
      %v5161 = vrot.slane %v5133, %v5160
      %v5162 = vcombine.high %v5140, %v5140
      %v5163 = vcombine.high %v5147, %v5147
      %v5164 = vcombine.high %v5154, %v5154
      %v5165 = vcombine.high %v5161, %v5161
      %v5166 = vcombine.high %v3968, %v3968
      %v5168 = vunpack.c.l.s4 1966171168
      %v5169 = vunpack.c.0.s8 %v5168
      %v5170 = vlaneseq
      %v5171 = vshrl.u32 %v5170, 7
      %v5172 = vsub.s32 %v5169, %v5171
      %v5173 = vrot.slane %v3968, %v5172
      %v5175 = vunpack.c.l.s4 1966171168
      %v5176 = vunpack.c.0.s8 %v5175
      %v5177 = vlaneseq
      %v5178 = vshrl.u32 %v5177, 7
      %v5179 = vsub.s32 %v5176, %v5178
      %v5180 = vrot.slane %v5166, %v5179
      %v5181 = vcombine.high %v5173, %v5173
      %v5182 = vcombine.high %v5180, %v5180
      %v5184 = vunpack.c.l.s4 1966171168
      %v5185 = vunpack.c.0.s8 %v5184
      %v5186 = vlaneseq
      %v5187 = vshrl.u32 %v5186, 7
      %v5188 = vsub.s32 %v5185, %v5187
      %v5189 = vrot.slane %v5173, %v5188
      %v5191 = vunpack.c.l.s4 1966171168
      %v5192 = vunpack.c.0.s8 %v5191
      %v5193 = vlaneseq
      %v5194 = vshrl.u32 %v5193, 7
      %v5195 = vsub.s32 %v5192, %v5194
      %v5196 = vrot.slane %v5180, %v5195
      %v5198 = vunpack.c.l.s4 1966171168
      %v5199 = vunpack.c.0.s8 %v5198
      %v5200 = vlaneseq
      %v5201 = vshrl.u32 %v5200, 7
      %v5202 = vsub.s32 %v5199, %v5201
      %v5203 = vrot.slane %v5181, %v5202
      %v5205 = vunpack.c.l.s4 1966171168
      %v5206 = vunpack.c.0.s8 %v5205
      %v5207 = vlaneseq
      %v5208 = vshrl.u32 %v5207, 7
      %v5209 = vsub.s32 %v5206, %v5208
      %v5210 = vrot.slane %v5182, %v5209
      %v5211 = vcombine.high %v5189, %v5189
      %v5212 = vcombine.high %v5196, %v5196
      %v5213 = vcombine.high %v5203, %v5203
      %v5214 = vcombine.high %v5210, %v5210
      %v5215 = vcombine.high %v3973, %v3973
      %v5217 = vunpack.c.l.s4 1966171168
      %v5218 = vunpack.c.0.s8 %v5217
      %v5219 = vlaneseq
      %v5220 = vshrl.u32 %v5219, 7
      %v5221 = vsub.s32 %v5218, %v5220
      %v5222 = vrot.slane %v3973, %v5221
      %v5224 = vunpack.c.l.s4 1966171168
      %v5225 = vunpack.c.0.s8 %v5224
      %v5226 = vlaneseq
      %v5227 = vshrl.u32 %v5226, 7
      %v5228 = vsub.s32 %v5225, %v5227
      %v5229 = vrot.slane %v5215, %v5228
      %v5230 = vcombine.high %v5222, %v5222
      %v5231 = vcombine.high %v5229, %v5229
      %v5233 = vunpack.c.l.s4 1966171168
      %v5234 = vunpack.c.0.s8 %v5233
      %v5235 = vlaneseq
      %v5236 = vshrl.u32 %v5235, 7
      %v5237 = vsub.s32 %v5234, %v5236
      %v5238 = vrot.slane %v5222, %v5237
      %v5240 = vunpack.c.l.s4 1966171168
      %v5241 = vunpack.c.0.s8 %v5240
      %v5242 = vlaneseq
      %v5243 = vshrl.u32 %v5242, 7
      %v5244 = vsub.s32 %v5241, %v5243
      %v5245 = vrot.slane %v5229, %v5244
      %v5247 = vunpack.c.l.s4 1966171168
      %v5248 = vunpack.c.0.s8 %v5247
      %v5249 = vlaneseq
      %v5250 = vshrl.u32 %v5249, 7
      %v5251 = vsub.s32 %v5248, %v5250
      %v5252 = vrot.slane %v5230, %v5251
      %v5254 = vunpack.c.l.s4 1966171168
      %v5255 = vunpack.c.0.s8 %v5254
      %v5256 = vlaneseq
      %v5257 = vshrl.u32 %v5256, 7
      %v5258 = vsub.s32 %v5255, %v5257
      %v5259 = vrot.slane %v5231, %v5258
      %v5260 = vcombine.high %v5238, %v5238
      %v5261 = vcombine.high %v5245, %v5245
      %v5262 = vcombine.high %v5252, %v5252
      %v5263 = vcombine.high %v5259, %v5259
      %v5264 = vcombine.high %v3978, %v3978
      %v5266 = vunpack.c.l.s4 1966171168
      %v5267 = vunpack.c.0.s8 %v5266
      %v5268 = vlaneseq
      %v5269 = vshrl.u32 %v5268, 7
      %v5270 = vsub.s32 %v5267, %v5269
      %v5271 = vrot.slane %v3978, %v5270
      %v5273 = vunpack.c.l.s4 1966171168
      %v5274 = vunpack.c.0.s8 %v5273
      %v5275 = vlaneseq
      %v5276 = vshrl.u32 %v5275, 7
      %v5277 = vsub.s32 %v5274, %v5276
      %v5278 = vrot.slane %v5264, %v5277
      %v5279 = vcombine.high %v5271, %v5271
      %v5280 = vcombine.high %v5278, %v5278
      %v5282 = vunpack.c.l.s4 1966171168
      %v5283 = vunpack.c.0.s8 %v5282
      %v5284 = vlaneseq
      %v5285 = vshrl.u32 %v5284, 7
      %v5286 = vsub.s32 %v5283, %v5285
      %v5287 = vrot.slane %v5271, %v5286
      %v5289 = vunpack.c.l.s4 1966171168
      %v5290 = vunpack.c.0.s8 %v5289
      %v5291 = vlaneseq
      %v5292 = vshrl.u32 %v5291, 7
      %v5293 = vsub.s32 %v5290, %v5292
      %v5294 = vrot.slane %v5278, %v5293
      %v5296 = vunpack.c.l.s4 1966171168
      %v5297 = vunpack.c.0.s8 %v5296
      %v5298 = vlaneseq
      %v5299 = vshrl.u32 %v5298, 7
      %v5300 = vsub.s32 %v5297, %v5299
      %v5301 = vrot.slane %v5279, %v5300
      %v5303 = vunpack.c.l.s4 1966171168
      %v5304 = vunpack.c.0.s8 %v5303
      %v5305 = vlaneseq
      %v5306 = vshrl.u32 %v5305, 7
      %v5307 = vsub.s32 %v5304, %v5306
      %v5308 = vrot.slane %v5280, %v5307
      %v5309 = vcombine.high %v5287, %v5287
      %v5310 = vcombine.high %v5294, %v5294
      %v5311 = vcombine.high %v5301, %v5301
      %v5312 = vcombine.high %v5308, %v5308
      %v5313 = vcombine.high %v3983, %v3983
      %v5315 = vunpack.c.l.s4 1966171168
      %v5316 = vunpack.c.0.s8 %v5315
      %v5317 = vlaneseq
      %v5318 = vshrl.u32 %v5317, 7
      %v5319 = vsub.s32 %v5316, %v5318
      %v5320 = vrot.slane %v3983, %v5319
      %v5322 = vunpack.c.l.s4 1966171168
      %v5323 = vunpack.c.0.s8 %v5322
      %v5324 = vlaneseq
      %v5325 = vshrl.u32 %v5324, 7
      %v5326 = vsub.s32 %v5323, %v5325
      %v5327 = vrot.slane %v5313, %v5326
      %v5328 = vcombine.high %v5320, %v5320
      %v5329 = vcombine.high %v5327, %v5327
      %v5331 = vunpack.c.l.s4 1966171168
      %v5332 = vunpack.c.0.s8 %v5331
      %v5333 = vlaneseq
      %v5334 = vshrl.u32 %v5333, 7
      %v5335 = vsub.s32 %v5332, %v5334
      %v5336 = vrot.slane %v5320, %v5335
      %v5338 = vunpack.c.l.s4 1966171168
      %v5339 = vunpack.c.0.s8 %v5338
      %v5340 = vlaneseq
      %v5341 = vshrl.u32 %v5340, 7
      %v5342 = vsub.s32 %v5339, %v5341
      %v5343 = vrot.slane %v5327, %v5342
      %v5345 = vunpack.c.l.s4 1966171168
      %v5346 = vunpack.c.0.s8 %v5345
      %v5347 = vlaneseq
      %v5348 = vshrl.u32 %v5347, 7
      %v5349 = vsub.s32 %v5346, %v5348
      %v5350 = vrot.slane %v5328, %v5349
      %v5352 = vunpack.c.l.s4 1966171168
      %v5353 = vunpack.c.0.s8 %v5352
      %v5354 = vlaneseq
      %v5355 = vshrl.u32 %v5354, 7
      %v5356 = vsub.s32 %v5353, %v5355
      %v5357 = vrot.slane %v5329, %v5356
      %v5358 = vcombine.high %v5336, %v5336
      %v5359 = vcombine.high %v5343, %v5343
      %v5360 = vcombine.high %v5350, %v5350
      %v5361 = vcombine.high %v5357, %v5357
      %v5362 = vcombine.high %v3988, %v3988
      %v5364 = vunpack.c.l.s4 1966171168
      %v5365 = vunpack.c.0.s8 %v5364
      %v5366 = vlaneseq
      %v5367 = vshrl.u32 %v5366, 7
      %v5368 = vsub.s32 %v5365, %v5367
      %v5369 = vrot.slane %v3988, %v5368
      %v5371 = vunpack.c.l.s4 1966171168
      %v5372 = vunpack.c.0.s8 %v5371
      %v5373 = vlaneseq
      %v5374 = vshrl.u32 %v5373, 7
      %v5375 = vsub.s32 %v5372, %v5374
      %v5376 = vrot.slane %v5362, %v5375
      %v5377 = vcombine.high %v5369, %v5369
      %v5378 = vcombine.high %v5376, %v5376
      %v5380 = vunpack.c.l.s4 1966171168
      %v5381 = vunpack.c.0.s8 %v5380
      %v5382 = vlaneseq
      %v5383 = vshrl.u32 %v5382, 7
      %v5384 = vsub.s32 %v5381, %v5383
      %v5385 = vrot.slane %v5369, %v5384
      %v5387 = vunpack.c.l.s4 1966171168
      %v5388 = vunpack.c.0.s8 %v5387
      %v5389 = vlaneseq
      %v5390 = vshrl.u32 %v5389, 7
      %v5391 = vsub.s32 %v5388, %v5390
      %v5392 = vrot.slane %v5376, %v5391
      %v5394 = vunpack.c.l.s4 1966171168
      %v5395 = vunpack.c.0.s8 %v5394
      %v5396 = vlaneseq
      %v5397 = vshrl.u32 %v5396, 7
      %v5398 = vsub.s32 %v5395, %v5397
      %v5399 = vrot.slane %v5377, %v5398
      %v5401 = vunpack.c.l.s4 1966171168
      %v5402 = vunpack.c.0.s8 %v5401
      %v5403 = vlaneseq
      %v5404 = vshrl.u32 %v5403, 7
      %v5405 = vsub.s32 %v5402, %v5404
      %v5406 = vrot.slane %v5378, %v5405
      %v5407 = vcombine.high %v5385, %v5385
      %v5408 = vcombine.high %v5392, %v5392
      %v5409 = vcombine.high %v5399, %v5399
      %v5410 = vcombine.high %v5406, %v5406
      %v5411 = vcombine.high %v3993, %v3993
      %v5413 = vunpack.c.l.s4 1966171168
      %v5414 = vunpack.c.0.s8 %v5413
      %v5415 = vlaneseq
      %v5416 = vshrl.u32 %v5415, 7
      %v5417 = vsub.s32 %v5414, %v5416
      %v5418 = vrot.slane %v3993, %v5417
      %v5420 = vunpack.c.l.s4 1966171168
      %v5421 = vunpack.c.0.s8 %v5420
      %v5422 = vlaneseq
      %v5423 = vshrl.u32 %v5422, 7
      %v5424 = vsub.s32 %v5421, %v5423
      %v5425 = vrot.slane %v5411, %v5424
      %v5426 = vcombine.high %v5418, %v5418
      %v5427 = vcombine.high %v5425, %v5425
      %v5429 = vunpack.c.l.s4 1966171168
      %v5430 = vunpack.c.0.s8 %v5429
      %v5431 = vlaneseq
      %v5432 = vshrl.u32 %v5431, 7
      %v5433 = vsub.s32 %v5430, %v5432
      %v5434 = vrot.slane %v5418, %v5433
      %v5436 = vunpack.c.l.s4 1966171168
      %v5437 = vunpack.c.0.s8 %v5436
      %v5438 = vlaneseq
      %v5439 = vshrl.u32 %v5438, 7
      %v5440 = vsub.s32 %v5437, %v5439
      %v5441 = vrot.slane %v5425, %v5440
      %v5443 = vunpack.c.l.s4 1966171168
      %v5444 = vunpack.c.0.s8 %v5443
      %v5445 = vlaneseq
      %v5446 = vshrl.u32 %v5445, 7
      %v5447 = vsub.s32 %v5444, %v5446
      %v5448 = vrot.slane %v5426, %v5447
      %v5450 = vunpack.c.l.s4 1966171168
      %v5451 = vunpack.c.0.s8 %v5450
      %v5452 = vlaneseq
      %v5453 = vshrl.u32 %v5452, 7
      %v5454 = vsub.s32 %v5451, %v5453
      %v5455 = vrot.slane %v5427, %v5454
      %v5456 = vcombine.high %v5434, %v5434
      %v5457 = vcombine.high %v5441, %v5441
      %v5458 = vcombine.high %v5448, %v5448
      %v5459 = vcombine.high %v5455, %v5455
      %v5460 = vcombine.high %v3998, %v3998
      %v5462 = vunpack.c.l.s4 1966171168
      %v5463 = vunpack.c.0.s8 %v5462
      %v5464 = vlaneseq
      %v5465 = vshrl.u32 %v5464, 7
      %v5466 = vsub.s32 %v5463, %v5465
      %v5467 = vrot.slane %v3998, %v5466
      %v5469 = vunpack.c.l.s4 1966171168
      %v5470 = vunpack.c.0.s8 %v5469
      %v5471 = vlaneseq
      %v5472 = vshrl.u32 %v5471, 7
      %v5473 = vsub.s32 %v5470, %v5472
      %v5474 = vrot.slane %v5460, %v5473
      %v5475 = vcombine.high %v5467, %v5467
      %v5476 = vcombine.high %v5474, %v5474
      %v5478 = vunpack.c.l.s4 1966171168
      %v5479 = vunpack.c.0.s8 %v5478
      %v5480 = vlaneseq
      %v5481 = vshrl.u32 %v5480, 7
      %v5482 = vsub.s32 %v5479, %v5481
      %v5483 = vrot.slane %v5467, %v5482
      %v5485 = vunpack.c.l.s4 1966171168
      %v5486 = vunpack.c.0.s8 %v5485
      %v5487 = vlaneseq
      %v5488 = vshrl.u32 %v5487, 7
      %v5489 = vsub.s32 %v5486, %v5488
      %v5490 = vrot.slane %v5474, %v5489
      %v5492 = vunpack.c.l.s4 1966171168
      %v5493 = vunpack.c.0.s8 %v5492
      %v5494 = vlaneseq
      %v5495 = vshrl.u32 %v5494, 7
      %v5496 = vsub.s32 %v5493, %v5495
      %v5497 = vrot.slane %v5475, %v5496
      %v5499 = vunpack.c.l.s4 1966171168
      %v5500 = vunpack.c.0.s8 %v5499
      %v5501 = vlaneseq
      %v5502 = vshrl.u32 %v5501, 7
      %v5503 = vsub.s32 %v5500, %v5502
      %v5504 = vrot.slane %v5476, %v5503
      %v5505 = vcombine.high %v5483, %v5483
      %v5506 = vcombine.high %v5490, %v5490
      %v5507 = vcombine.high %v5497, %v5497
      %v5508 = vcombine.high %v5504, %v5504
      %v5509 = vcombine.high %v4003, %v4003
      %v5511 = vunpack.c.l.s4 1966171168
      %v5512 = vunpack.c.0.s8 %v5511
      %v5513 = vlaneseq
      %v5514 = vshrl.u32 %v5513, 7
      %v5515 = vsub.s32 %v5512, %v5514
      %v5516 = vrot.slane %v4003, %v5515
      %v5518 = vunpack.c.l.s4 1966171168
      %v5519 = vunpack.c.0.s8 %v5518
      %v5520 = vlaneseq
      %v5521 = vshrl.u32 %v5520, 7
      %v5522 = vsub.s32 %v5519, %v5521
      %v5523 = vrot.slane %v5509, %v5522
      %v5524 = vcombine.high %v5516, %v5516
      %v5525 = vcombine.high %v5523, %v5523
      %v5527 = vunpack.c.l.s4 1966171168
      %v5528 = vunpack.c.0.s8 %v5527
      %v5529 = vlaneseq
      %v5530 = vshrl.u32 %v5529, 7
      %v5531 = vsub.s32 %v5528, %v5530
      %v5532 = vrot.slane %v5516, %v5531
      %v5534 = vunpack.c.l.s4 1966171168
      %v5535 = vunpack.c.0.s8 %v5534
      %v5536 = vlaneseq
      %v5537 = vshrl.u32 %v5536, 7
      %v5538 = vsub.s32 %v5535, %v5537
      %v5539 = vrot.slane %v5523, %v5538
      %v5541 = vunpack.c.l.s4 1966171168
      %v5542 = vunpack.c.0.s8 %v5541
      %v5543 = vlaneseq
      %v5544 = vshrl.u32 %v5543, 7
      %v5545 = vsub.s32 %v5542, %v5544
      %v5546 = vrot.slane %v5524, %v5545
      %v5548 = vunpack.c.l.s4 1966171168
      %v5549 = vunpack.c.0.s8 %v5548
      %v5550 = vlaneseq
      %v5551 = vshrl.u32 %v5550, 7
      %v5552 = vsub.s32 %v5549, %v5551
      %v5553 = vrot.slane %v5525, %v5552
      %v5554 = vcombine.high %v5532, %v5532
      %v5555 = vcombine.high %v5539, %v5539
      %v5556 = vcombine.high %v5546, %v5546
      %v5557 = vcombine.high %v5553, %v5553
      %v5558 = vcombine.high %v4008, %v4008
      %v5560 = vunpack.c.l.s4 1966171168
      %v5561 = vunpack.c.0.s8 %v5560
      %v5562 = vlaneseq
      %v5563 = vshrl.u32 %v5562, 7
      %v5564 = vsub.s32 %v5561, %v5563
      %v5565 = vrot.slane %v4008, %v5564
      %v5567 = vunpack.c.l.s4 1966171168
      %v5568 = vunpack.c.0.s8 %v5567
      %v5569 = vlaneseq
      %v5570 = vshrl.u32 %v5569, 7
      %v5571 = vsub.s32 %v5568, %v5570
      %v5572 = vrot.slane %v5558, %v5571
      %v5573 = vcombine.high %v5565, %v5565
      %v5574 = vcombine.high %v5572, %v5572
      %v5576 = vunpack.c.l.s4 1966171168
      %v5577 = vunpack.c.0.s8 %v5576
      %v5578 = vlaneseq
      %v5579 = vshrl.u32 %v5578, 7
      %v5580 = vsub.s32 %v5577, %v5579
      %v5581 = vrot.slane %v5565, %v5580
      %v5583 = vunpack.c.l.s4 1966171168
      %v5584 = vunpack.c.0.s8 %v5583
      %v5585 = vlaneseq
      %v5586 = vshrl.u32 %v5585, 7
      %v5587 = vsub.s32 %v5584, %v5586
      %v5588 = vrot.slane %v5572, %v5587
      %v5590 = vunpack.c.l.s4 1966171168
      %v5591 = vunpack.c.0.s8 %v5590
      %v5592 = vlaneseq
      %v5593 = vshrl.u32 %v5592, 7
      %v5594 = vsub.s32 %v5591, %v5593
      %v5595 = vrot.slane %v5573, %v5594
      %v5597 = vunpack.c.l.s4 1966171168
      %v5598 = vunpack.c.0.s8 %v5597
      %v5599 = vlaneseq
      %v5600 = vshrl.u32 %v5599, 7
      %v5601 = vsub.s32 %v5598, %v5600
      %v5602 = vrot.slane %v5574, %v5601
      %v5603 = vcombine.high %v5581, %v5581
      %v5604 = vcombine.high %v5588, %v5588
      %v5605 = vcombine.high %v5595, %v5595
      %v5606 = vcombine.high %v5602, %v5602
      %v5607 = vcombine.high %v4013, %v4013
      %v5609 = vunpack.c.l.s4 1966171168
      %v5610 = vunpack.c.0.s8 %v5609
      %v5611 = vlaneseq
      %v5612 = vshrl.u32 %v5611, 7
      %v5613 = vsub.s32 %v5610, %v5612
      %v5614 = vrot.slane %v4013, %v5613
      %v5616 = vunpack.c.l.s4 1966171168
      %v5617 = vunpack.c.0.s8 %v5616
      %v5618 = vlaneseq
      %v5619 = vshrl.u32 %v5618, 7
      %v5620 = vsub.s32 %v5617, %v5619
      %v5621 = vrot.slane %v5607, %v5620
      %v5622 = vcombine.high %v5614, %v5614
      %v5623 = vcombine.high %v5621, %v5621
      %v5625 = vunpack.c.l.s4 1966171168
      %v5626 = vunpack.c.0.s8 %v5625
      %v5627 = vlaneseq
      %v5628 = vshrl.u32 %v5627, 7
      %v5629 = vsub.s32 %v5626, %v5628
      %v5630 = vrot.slane %v5614, %v5629
      %v5632 = vunpack.c.l.s4 1966171168
      %v5633 = vunpack.c.0.s8 %v5632
      %v5634 = vlaneseq
      %v5635 = vshrl.u32 %v5634, 7
      %v5636 = vsub.s32 %v5633, %v5635
      %v5637 = vrot.slane %v5621, %v5636
      %v5639 = vunpack.c.l.s4 1966171168
      %v5640 = vunpack.c.0.s8 %v5639
      %v5641 = vlaneseq
      %v5642 = vshrl.u32 %v5641, 7
      %v5643 = vsub.s32 %v5640, %v5642
      %v5644 = vrot.slane %v5622, %v5643
      %v5646 = vunpack.c.l.s4 1966171168
      %v5647 = vunpack.c.0.s8 %v5646
      %v5648 = vlaneseq
      %v5649 = vshrl.u32 %v5648, 7
      %v5650 = vsub.s32 %v5647, %v5649
      %v5651 = vrot.slane %v5623, %v5650
      %v5652 = vcombine.high %v5630, %v5630
      %v5653 = vcombine.high %v5637, %v5637
      %v5654 = vcombine.high %v5644, %v5644
      %v5655 = vcombine.high %v5651, %v5651
      %v5656 = vcombine.high %v4018, %v4018
      %v5658 = vunpack.c.l.s4 1966171168
      %v5659 = vunpack.c.0.s8 %v5658
      %v5660 = vlaneseq
      %v5661 = vshrl.u32 %v5660, 7
      %v5662 = vsub.s32 %v5659, %v5661
      %v5663 = vrot.slane %v4018, %v5662
      %v5665 = vunpack.c.l.s4 1966171168
      %v5666 = vunpack.c.0.s8 %v5665
      %v5667 = vlaneseq
      %v5668 = vshrl.u32 %v5667, 7
      %v5669 = vsub.s32 %v5666, %v5668
      %v5670 = vrot.slane %v5656, %v5669
      %v5671 = vcombine.high %v5663, %v5663
      %v5672 = vcombine.high %v5670, %v5670
      %v5674 = vunpack.c.l.s4 1966171168
      %v5675 = vunpack.c.0.s8 %v5674
      %v5676 = vlaneseq
      %v5677 = vshrl.u32 %v5676, 7
      %v5678 = vsub.s32 %v5675, %v5677
      %v5679 = vrot.slane %v5663, %v5678
      %v5681 = vunpack.c.l.s4 1966171168
      %v5682 = vunpack.c.0.s8 %v5681
      %v5683 = vlaneseq
      %v5684 = vshrl.u32 %v5683, 7
      %v5685 = vsub.s32 %v5682, %v5684
      %v5686 = vrot.slane %v5670, %v5685
      %v5688 = vunpack.c.l.s4 1966171168
      %v5689 = vunpack.c.0.s8 %v5688
      %v5690 = vlaneseq
      %v5691 = vshrl.u32 %v5690, 7
      %v5692 = vsub.s32 %v5689, %v5691
      %v5693 = vrot.slane %v5671, %v5692
      %v5695 = vunpack.c.l.s4 1966171168
      %v5696 = vunpack.c.0.s8 %v5695
      %v5697 = vlaneseq
      %v5698 = vshrl.u32 %v5697, 7
      %v5699 = vsub.s32 %v5696, %v5698
      %v5700 = vrot.slane %v5672, %v5699
      %v5701 = vcombine.high %v5679, %v5679
      %v5702 = vcombine.high %v5686, %v5686
      %v5703 = vcombine.high %v5693, %v5693
      %v5704 = vcombine.high %v5700, %v5700
      %v5705 = vcombine.high %v4023, %v4023
      %v5707 = vunpack.c.l.s4 1966171168
      %v5708 = vunpack.c.0.s8 %v5707
      %v5709 = vlaneseq
      %v5710 = vshrl.u32 %v5709, 7
      %v5711 = vsub.s32 %v5708, %v5710
      %v5712 = vrot.slane %v4023, %v5711
      %v5714 = vunpack.c.l.s4 1966171168
      %v5715 = vunpack.c.0.s8 %v5714
      %v5716 = vlaneseq
      %v5717 = vshrl.u32 %v5716, 7
      %v5718 = vsub.s32 %v5715, %v5717
      %v5719 = vrot.slane %v5705, %v5718
      %v5720 = vcombine.high %v5712, %v5712
      %v5721 = vcombine.high %v5719, %v5719
      %v5723 = vunpack.c.l.s4 1966171168
      %v5724 = vunpack.c.0.s8 %v5723
      %v5725 = vlaneseq
      %v5726 = vshrl.u32 %v5725, 7
      %v5727 = vsub.s32 %v5724, %v5726
      %v5728 = vrot.slane %v5712, %v5727
      %v5730 = vunpack.c.l.s4 1966171168
      %v5731 = vunpack.c.0.s8 %v5730
      %v5732 = vlaneseq
      %v5733 = vshrl.u32 %v5732, 7
      %v5734 = vsub.s32 %v5731, %v5733
      %v5735 = vrot.slane %v5719, %v5734
      %v5737 = vunpack.c.l.s4 1966171168
      %v5738 = vunpack.c.0.s8 %v5737
      %v5739 = vlaneseq
      %v5740 = vshrl.u32 %v5739, 7
      %v5741 = vsub.s32 %v5738, %v5740
      %v5742 = vrot.slane %v5720, %v5741
      %v5744 = vunpack.c.l.s4 1966171168
      %v5745 = vunpack.c.0.s8 %v5744
      %v5746 = vlaneseq
      %v5747 = vshrl.u32 %v5746, 7
      %v5748 = vsub.s32 %v5745, %v5747
      %v5749 = vrot.slane %v5721, %v5748
      %v5750 = vcombine.high %v5728, %v5728
      %v5751 = vcombine.high %v5735, %v5735
      %v5752 = vcombine.high %v5742, %v5742
      %v5753 = vcombine.high %v5749, %v5749
      %v5754 = vlaneseq
      %v5755 = vshrl.u32 %v5754, 7
      %v5756 = vsub.s32 0, %v5755
      %v5757 = vrot.slane %v4993, %v5756
      %v5758 = vlaneseq
      %v5759 = vshrl.u32 %v5758, 7
      %v5760 = vsub.s32 0, %v5759
      %v5761 = vrot.slane %v5007, %v5760
      %v5762 = vlaneseq
      %v5763 = vshrl.u32 %v5762, 7
      %v5764 = vsub.s32 0, %v5763
      %v5765 = vrot.slane %v5015, %v5764
      %v5766 = vlaneseq
      %v5767 = vshrl.u32 %v5766, 7
      %v5768 = vsub.s32 0, %v5767
      %v5769 = vrot.slane %v5017, %v5768
      %v5770 = vlaneseq
      %v5771 = vshrl.u32 %v5770, 7
      %v5772 = vsub.s32 0, %v5771
      %v5773 = vrot.slane %v5000, %v5772
      %v5774 = vlaneseq
      %v5775 = vshrl.u32 %v5774, 7
      %v5776 = vsub.s32 0, %v5775
      %v5777 = vrot.slane %v5014, %v5776
      %v5778 = vlaneseq
      %v5779 = vshrl.u32 %v5778, 7
      %v5780 = vsub.s32 0, %v5779
      %v5781 = vrot.slane %v5016, %v5780
      %v5782 = vlaneseq
      %v5783 = vshrl.u32 %v5782, 7
      %v5784 = vsub.s32 0, %v5783
      %v5785 = vrot.slane %v5018, %v5784
      %v5786 = vlaneseq
      %v5787 = vshrl.u32 %v5786, 7
      %v5788 = vsub.s32 0, %v5787
      %v5789 = vrot.slane %v5042, %v5788
      %v5790 = vlaneseq
      %v5791 = vshrl.u32 %v5790, 7
      %v5792 = vsub.s32 0, %v5791
      %v5793 = vrot.slane %v5056, %v5792
      %v5794 = vlaneseq
      %v5795 = vshrl.u32 %v5794, 7
      %v5796 = vsub.s32 0, %v5795
      %v5797 = vrot.slane %v5064, %v5796
      %v5798 = vlaneseq
      %v5799 = vshrl.u32 %v5798, 7
      %v5800 = vsub.s32 0, %v5799
      %v5801 = vrot.slane %v5066, %v5800
      %v5802 = vlaneseq
      %v5803 = vshrl.u32 %v5802, 7
      %v5804 = vsub.s32 0, %v5803
      %v5805 = vrot.slane %v5049, %v5804
      %v5806 = vlaneseq
      %v5807 = vshrl.u32 %v5806, 7
      %v5808 = vsub.s32 0, %v5807
      %v5809 = vrot.slane %v5063, %v5808
      %v5810 = vlaneseq
      %v5811 = vshrl.u32 %v5810, 7
      %v5812 = vsub.s32 0, %v5811
      %v5813 = vrot.slane %v5065, %v5812
      %v5814 = vlaneseq
      %v5815 = vshrl.u32 %v5814, 7
      %v5816 = vsub.s32 0, %v5815
      %v5817 = vrot.slane %v5067, %v5816
      %v5818 = vlaneseq
      %v5819 = vshrl.u32 %v5818, 7
      %v5820 = vsub.s32 0, %v5819
      %v5821 = vrot.slane %v5091, %v5820
      %v5822 = vlaneseq
      %v5823 = vshrl.u32 %v5822, 7
      %v5824 = vsub.s32 0, %v5823
      %v5825 = vrot.slane %v5105, %v5824
      %v5826 = vlaneseq
      %v5827 = vshrl.u32 %v5826, 7
      %v5828 = vsub.s32 0, %v5827
      %v5829 = vrot.slane %v5113, %v5828
      %v5830 = vlaneseq
      %v5831 = vshrl.u32 %v5830, 7
      %v5832 = vsub.s32 0, %v5831
      %v5833 = vrot.slane %v5115, %v5832
      %v5834 = vlaneseq
      %v5835 = vshrl.u32 %v5834, 7
      %v5836 = vsub.s32 0, %v5835
      %v5837 = vrot.slane %v5098, %v5836
      %v5838 = vlaneseq
      %v5839 = vshrl.u32 %v5838, 7
      %v5840 = vsub.s32 0, %v5839
      %v5841 = vrot.slane %v5112, %v5840
      %v5842 = vlaneseq
      %v5843 = vshrl.u32 %v5842, 7
      %v5844 = vsub.s32 0, %v5843
      %v5845 = vrot.slane %v5114, %v5844
      %v5846 = vlaneseq
      %v5847 = vshrl.u32 %v5846, 7
      %v5848 = vsub.s32 0, %v5847
      %v5849 = vrot.slane %v5116, %v5848
      %v5850 = vlaneseq
      %v5851 = vshrl.u32 %v5850, 7
      %v5852 = vsub.s32 0, %v5851
      %v5853 = vrot.slane %v5140, %v5852
      %v5854 = vlaneseq
      %v5855 = vshrl.u32 %v5854, 7
      %v5856 = vsub.s32 0, %v5855
      %v5857 = vrot.slane %v5154, %v5856
      %v5858 = vlaneseq
      %v5859 = vshrl.u32 %v5858, 7
      %v5860 = vsub.s32 0, %v5859
      %v5861 = vrot.slane %v5162, %v5860
      %v5862 = vlaneseq
      %v5863 = vshrl.u32 %v5862, 7
      %v5864 = vsub.s32 0, %v5863
      %v5865 = vrot.slane %v5164, %v5864
      %v5866 = vlaneseq
      %v5867 = vshrl.u32 %v5866, 7
      %v5868 = vsub.s32 0, %v5867
      %v5869 = vrot.slane %v5147, %v5868
      %v5870 = vlaneseq
      %v5871 = vshrl.u32 %v5870, 7
      %v5872 = vsub.s32 0, %v5871
      %v5873 = vrot.slane %v5161, %v5872
      %v5874 = vlaneseq
      %v5875 = vshrl.u32 %v5874, 7
      %v5876 = vsub.s32 0, %v5875
      %v5877 = vrot.slane %v5163, %v5876
      %v5878 = vlaneseq
      %v5879 = vshrl.u32 %v5878, 7
      %v5880 = vsub.s32 0, %v5879
      %v5881 = vrot.slane %v5165, %v5880
      %v5882 = vlaneseq
      %v5883 = vshrl.u32 %v5882, 7
      %v5884 = vsub.s32 0, %v5883
      %v5885 = vrot.slane %v5189, %v5884
      %v5886 = vlaneseq
      %v5887 = vshrl.u32 %v5886, 7
      %v5888 = vsub.s32 0, %v5887
      %v5889 = vrot.slane %v5203, %v5888
      %v5890 = vlaneseq
      %v5891 = vshrl.u32 %v5890, 7
      %v5892 = vsub.s32 0, %v5891
      %v5893 = vrot.slane %v5211, %v5892
      %v5894 = vlaneseq
      %v5895 = vshrl.u32 %v5894, 7
      %v5896 = vsub.s32 0, %v5895
      %v5897 = vrot.slane %v5213, %v5896
      %v5898 = vlaneseq
      %v5899 = vshrl.u32 %v5898, 7
      %v5900 = vsub.s32 0, %v5899
      %v5901 = vrot.slane %v5196, %v5900
      %v5902 = vlaneseq
      %v5903 = vshrl.u32 %v5902, 7
      %v5904 = vsub.s32 0, %v5903
      %v5905 = vrot.slane %v5210, %v5904
      %v5906 = vlaneseq
      %v5907 = vshrl.u32 %v5906, 7
      %v5908 = vsub.s32 0, %v5907
      %v5909 = vrot.slane %v5212, %v5908
      %v5910 = vlaneseq
      %v5911 = vshrl.u32 %v5910, 7
      %v5912 = vsub.s32 0, %v5911
      %v5913 = vrot.slane %v5214, %v5912
      %v5914 = vlaneseq
      %v5915 = vshrl.u32 %v5914, 7
      %v5916 = vsub.s32 0, %v5915
      %v5917 = vrot.slane %v5238, %v5916
      %v5918 = vlaneseq
      %v5919 = vshrl.u32 %v5918, 7
      %v5920 = vsub.s32 0, %v5919
      %v5921 = vrot.slane %v5252, %v5920
      %v5922 = vlaneseq
      %v5923 = vshrl.u32 %v5922, 7
      %v5924 = vsub.s32 0, %v5923
      %v5925 = vrot.slane %v5260, %v5924
      %v5926 = vlaneseq
      %v5927 = vshrl.u32 %v5926, 7
      %v5928 = vsub.s32 0, %v5927
      %v5929 = vrot.slane %v5262, %v5928
      %v5930 = vlaneseq
      %v5931 = vshrl.u32 %v5930, 7
      %v5932 = vsub.s32 0, %v5931
      %v5933 = vrot.slane %v5245, %v5932
      %v5934 = vlaneseq
      %v5935 = vshrl.u32 %v5934, 7
      %v5936 = vsub.s32 0, %v5935
      %v5937 = vrot.slane %v5259, %v5936
      %v5938 = vlaneseq
      %v5939 = vshrl.u32 %v5938, 7
      %v5940 = vsub.s32 0, %v5939
      %v5941 = vrot.slane %v5261, %v5940
      %v5942 = vlaneseq
      %v5943 = vshrl.u32 %v5942, 7
      %v5944 = vsub.s32 0, %v5943
      %v5945 = vrot.slane %v5263, %v5944
      %v5946 = vlaneseq
      %v5947 = vshrl.u32 %v5946, 7
      %v5948 = vsub.s32 0, %v5947
      %v5949 = vrot.slane %v5287, %v5948
      %v5950 = vlaneseq
      %v5951 = vshrl.u32 %v5950, 7
      %v5952 = vsub.s32 0, %v5951
      %v5953 = vrot.slane %v5301, %v5952
      %v5954 = vlaneseq
      %v5955 = vshrl.u32 %v5954, 7
      %v5956 = vsub.s32 0, %v5955
      %v5957 = vrot.slane %v5309, %v5956
      %v5958 = vlaneseq
      %v5959 = vshrl.u32 %v5958, 7
      %v5960 = vsub.s32 0, %v5959
      %v5961 = vrot.slane %v5311, %v5960
      %v5962 = vlaneseq
      %v5963 = vshrl.u32 %v5962, 7
      %v5964 = vsub.s32 0, %v5963
      %v5965 = vrot.slane %v5294, %v5964
      %v5966 = vlaneseq
      %v5967 = vshrl.u32 %v5966, 7
      %v5968 = vsub.s32 0, %v5967
      %v5969 = vrot.slane %v5308, %v5968
      %v5970 = vlaneseq
      %v5971 = vshrl.u32 %v5970, 7
      %v5972 = vsub.s32 0, %v5971
      %v5973 = vrot.slane %v5310, %v5972
      %v5974 = vlaneseq
      %v5975 = vshrl.u32 %v5974, 7
      %v5976 = vsub.s32 0, %v5975
      %v5977 = vrot.slane %v5312, %v5976
      %v5978 = vlaneseq
      %v5979 = vshrl.u32 %v5978, 7
      %v5980 = vsub.s32 0, %v5979
      %v5981 = vrot.slane %v5336, %v5980
      %v5982 = vlaneseq
      %v5983 = vshrl.u32 %v5982, 7
      %v5984 = vsub.s32 0, %v5983
      %v5985 = vrot.slane %v5350, %v5984
      %v5986 = vlaneseq
      %v5987 = vshrl.u32 %v5986, 7
      %v5988 = vsub.s32 0, %v5987
      %v5989 = vrot.slane %v5358, %v5988
      %v5990 = vlaneseq
      %v5991 = vshrl.u32 %v5990, 7
      %v5992 = vsub.s32 0, %v5991
      %v5993 = vrot.slane %v5360, %v5992
      %v5994 = vlaneseq
      %v5995 = vshrl.u32 %v5994, 7
      %v5996 = vsub.s32 0, %v5995
      %v5997 = vrot.slane %v5343, %v5996
      %v5998 = vlaneseq
      %v5999 = vshrl.u32 %v5998, 7
      %v6000 = vsub.s32 0, %v5999
      %v6001 = vrot.slane %v5357, %v6000
      %v6002 = vlaneseq
      %v6003 = vshrl.u32 %v6002, 7
      %v6004 = vsub.s32 0, %v6003
      %v6005 = vrot.slane %v5359, %v6004
      %v6006 = vlaneseq
      %v6007 = vshrl.u32 %v6006, 7
      %v6008 = vsub.s32 0, %v6007
      %v6009 = vrot.slane %v5361, %v6008
      %v6010 = vlaneseq
      %v6011 = vshrl.u32 %v6010, 7
      %v6012 = vsub.s32 0, %v6011
      %v6013 = vrot.slane %v5385, %v6012
      %v6014 = vlaneseq
      %v6015 = vshrl.u32 %v6014, 7
      %v6016 = vsub.s32 0, %v6015
      %v6017 = vrot.slane %v5399, %v6016
      %v6018 = vlaneseq
      %v6019 = vshrl.u32 %v6018, 7
      %v6020 = vsub.s32 0, %v6019
      %v6021 = vrot.slane %v5407, %v6020
      %v6022 = vlaneseq
      %v6023 = vshrl.u32 %v6022, 7
      %v6024 = vsub.s32 0, %v6023
      %v6025 = vrot.slane %v5409, %v6024
      %v6026 = vlaneseq
      %v6027 = vshrl.u32 %v6026, 7
      %v6028 = vsub.s32 0, %v6027
      %v6029 = vrot.slane %v5392, %v6028
      %v6030 = vlaneseq
      %v6031 = vshrl.u32 %v6030, 7
      %v6032 = vsub.s32 0, %v6031
      %v6033 = vrot.slane %v5406, %v6032
      %v6034 = vlaneseq
      %v6035 = vshrl.u32 %v6034, 7
      %v6036 = vsub.s32 0, %v6035
      %v6037 = vrot.slane %v5408, %v6036
      %v6038 = vlaneseq
      %v6039 = vshrl.u32 %v6038, 7
      %v6040 = vsub.s32 0, %v6039
      %v6041 = vrot.slane %v5410, %v6040
      %v6042 = vlaneseq
      %v6043 = vshrl.u32 %v6042, 7
      %v6044 = vsub.s32 0, %v6043
      %v6045 = vrot.slane %v5434, %v6044
      %v6046 = vlaneseq
      %v6047 = vshrl.u32 %v6046, 7
      %v6048 = vsub.s32 0, %v6047
      %v6049 = vrot.slane %v5448, %v6048
      %v6050 = vlaneseq
      %v6051 = vshrl.u32 %v6050, 7
      %v6052 = vsub.s32 0, %v6051
      %v6053 = vrot.slane %v5456, %v6052
      %v6054 = vlaneseq
      %v6055 = vshrl.u32 %v6054, 7
      %v6056 = vsub.s32 0, %v6055
      %v6057 = vrot.slane %v5458, %v6056
      %v6058 = vlaneseq
      %v6059 = vshrl.u32 %v6058, 7
      %v6060 = vsub.s32 0, %v6059
      %v6061 = vrot.slane %v5441, %v6060
      %v6062 = vlaneseq
      %v6063 = vshrl.u32 %v6062, 7
      %v6064 = vsub.s32 0, %v6063
      %v6065 = vrot.slane %v5455, %v6064
      %v6066 = vlaneseq
      %v6067 = vshrl.u32 %v6066, 7
      %v6068 = vsub.s32 0, %v6067
      %v6069 = vrot.slane %v5457, %v6068
      %v6070 = vlaneseq
      %v6071 = vshrl.u32 %v6070, 7
      %v6072 = vsub.s32 0, %v6071
      %v6073 = vrot.slane %v5459, %v6072
      %v6074 = vlaneseq
      %v6075 = vshrl.u32 %v6074, 7
      %v6076 = vsub.s32 0, %v6075
      %v6077 = vrot.slane %v5483, %v6076
      %v6078 = vlaneseq
      %v6079 = vshrl.u32 %v6078, 7
      %v6080 = vsub.s32 0, %v6079
      %v6081 = vrot.slane %v5497, %v6080
      %v6082 = vlaneseq
      %v6083 = vshrl.u32 %v6082, 7
      %v6084 = vsub.s32 0, %v6083
      %v6085 = vrot.slane %v5505, %v6084
      %v6086 = vlaneseq
      %v6087 = vshrl.u32 %v6086, 7
      %v6088 = vsub.s32 0, %v6087
      %v6089 = vrot.slane %v5507, %v6088
      %v6090 = vlaneseq
      %v6091 = vshrl.u32 %v6090, 7
      %v6092 = vsub.s32 0, %v6091
      %v6093 = vrot.slane %v5490, %v6092
      %v6094 = vlaneseq
      %v6095 = vshrl.u32 %v6094, 7
      %v6096 = vsub.s32 0, %v6095
      %v6097 = vrot.slane %v5504, %v6096
      %v6098 = vlaneseq
      %v6099 = vshrl.u32 %v6098, 7
      %v6100 = vsub.s32 0, %v6099
      %v6101 = vrot.slane %v5506, %v6100
      %v6102 = vlaneseq
      %v6103 = vshrl.u32 %v6102, 7
      %v6104 = vsub.s32 0, %v6103
      %v6105 = vrot.slane %v5508, %v6104
      %v6106 = vlaneseq
      %v6107 = vshrl.u32 %v6106, 7
      %v6108 = vsub.s32 0, %v6107
      %v6109 = vrot.slane %v5532, %v6108
      %v6110 = vlaneseq
      %v6111 = vshrl.u32 %v6110, 7
      %v6112 = vsub.s32 0, %v6111
      %v6113 = vrot.slane %v5546, %v6112
      %v6114 = vlaneseq
      %v6115 = vshrl.u32 %v6114, 7
      %v6116 = vsub.s32 0, %v6115
      %v6117 = vrot.slane %v5554, %v6116
      %v6118 = vlaneseq
      %v6119 = vshrl.u32 %v6118, 7
      %v6120 = vsub.s32 0, %v6119
      %v6121 = vrot.slane %v5556, %v6120
      %v6122 = vlaneseq
      %v6123 = vshrl.u32 %v6122, 7
      %v6124 = vsub.s32 0, %v6123
      %v6125 = vrot.slane %v5539, %v6124
      %v6126 = vlaneseq
      %v6127 = vshrl.u32 %v6126, 7
      %v6128 = vsub.s32 0, %v6127
      %v6129 = vrot.slane %v5553, %v6128
      %v6130 = vlaneseq
      %v6131 = vshrl.u32 %v6130, 7
      %v6132 = vsub.s32 0, %v6131
      %v6133 = vrot.slane %v5555, %v6132
      %v6134 = vlaneseq
      %v6135 = vshrl.u32 %v6134, 7
      %v6136 = vsub.s32 0, %v6135
      %v6137 = vrot.slane %v5557, %v6136
      %v6138 = vlaneseq
      %v6139 = vshrl.u32 %v6138, 7
      %v6140 = vsub.s32 0, %v6139
      %v6141 = vrot.slane %v5581, %v6140
      %v6142 = vlaneseq
      %v6143 = vshrl.u32 %v6142, 7
      %v6144 = vsub.s32 0, %v6143
      %v6145 = vrot.slane %v5595, %v6144
      %v6146 = vlaneseq
      %v6147 = vshrl.u32 %v6146, 7
      %v6148 = vsub.s32 0, %v6147
      %v6149 = vrot.slane %v5603, %v6148
      %v6150 = vlaneseq
      %v6151 = vshrl.u32 %v6150, 7
      %v6152 = vsub.s32 0, %v6151
      %v6153 = vrot.slane %v5605, %v6152
      %v6154 = vlaneseq
      %v6155 = vshrl.u32 %v6154, 7
      %v6156 = vsub.s32 0, %v6155
      %v6157 = vrot.slane %v5588, %v6156
      %v6158 = vlaneseq
      %v6159 = vshrl.u32 %v6158, 7
      %v6160 = vsub.s32 0, %v6159
      %v6161 = vrot.slane %v5602, %v6160
      %v6162 = vlaneseq
      %v6163 = vshrl.u32 %v6162, 7
      %v6164 = vsub.s32 0, %v6163
      %v6165 = vrot.slane %v5604, %v6164
      %v6166 = vlaneseq
      %v6167 = vshrl.u32 %v6166, 7
      %v6168 = vsub.s32 0, %v6167
      %v6169 = vrot.slane %v5606, %v6168
      %v6170 = vlaneseq
      %v6171 = vshrl.u32 %v6170, 7
      %v6172 = vsub.s32 0, %v6171
      %v6173 = vrot.slane %v5630, %v6172
      %v6174 = vlaneseq
      %v6175 = vshrl.u32 %v6174, 7
      %v6176 = vsub.s32 0, %v6175
      %v6177 = vrot.slane %v5644, %v6176
      %v6178 = vlaneseq
      %v6179 = vshrl.u32 %v6178, 7
      %v6180 = vsub.s32 0, %v6179
      %v6181 = vrot.slane %v5652, %v6180
      %v6182 = vlaneseq
      %v6183 = vshrl.u32 %v6182, 7
      %v6184 = vsub.s32 0, %v6183
      %v6185 = vrot.slane %v5654, %v6184
      %v6186 = vlaneseq
      %v6187 = vshrl.u32 %v6186, 7
      %v6188 = vsub.s32 0, %v6187
      %v6189 = vrot.slane %v5637, %v6188
      %v6190 = vlaneseq
      %v6191 = vshrl.u32 %v6190, 7
      %v6192 = vsub.s32 0, %v6191
      %v6193 = vrot.slane %v5651, %v6192
      %v6194 = vlaneseq
      %v6195 = vshrl.u32 %v6194, 7
      %v6196 = vsub.s32 0, %v6195
      %v6197 = vrot.slane %v5653, %v6196
      %v6198 = vlaneseq
      %v6199 = vshrl.u32 %v6198, 7
      %v6200 = vsub.s32 0, %v6199
      %v6201 = vrot.slane %v5655, %v6200
      %v6202 = vlaneseq
      %v6203 = vshrl.u32 %v6202, 7
      %v6204 = vsub.s32 0, %v6203
      %v6205 = vrot.slane %v5679, %v6204
      %v6206 = vlaneseq
      %v6207 = vshrl.u32 %v6206, 7
      %v6208 = vsub.s32 0, %v6207
      %v6209 = vrot.slane %v5693, %v6208
      %v6210 = vlaneseq
      %v6211 = vshrl.u32 %v6210, 7
      %v6212 = vsub.s32 0, %v6211
      %v6213 = vrot.slane %v5701, %v6212
      %v6214 = vlaneseq
      %v6215 = vshrl.u32 %v6214, 7
      %v6216 = vsub.s32 0, %v6215
      %v6217 = vrot.slane %v5703, %v6216
      %v6218 = vlaneseq
      %v6219 = vshrl.u32 %v6218, 7
      %v6220 = vsub.s32 0, %v6219
      %v6221 = vrot.slane %v5686, %v6220
      %v6222 = vlaneseq
      %v6223 = vshrl.u32 %v6222, 7
      %v6224 = vsub.s32 0, %v6223
      %v6225 = vrot.slane %v5700, %v6224
      %v6226 = vlaneseq
      %v6227 = vshrl.u32 %v6226, 7
      %v6228 = vsub.s32 0, %v6227
      %v6229 = vrot.slane %v5702, %v6228
      %v6230 = vlaneseq
      %v6231 = vshrl.u32 %v6230, 7
      %v6232 = vsub.s32 0, %v6231
      %v6233 = vrot.slane %v5704, %v6232
      %v6234 = vlaneseq
      %v6235 = vshrl.u32 %v6234, 7
      %v6236 = vsub.s32 0, %v6235
      %v6237 = vrot.slane %v5728, %v6236
      %v6238 = vlaneseq
      %v6239 = vshrl.u32 %v6238, 7
      %v6240 = vsub.s32 0, %v6239
      %v6241 = vrot.slane %v5742, %v6240
      %v6242 = vlaneseq
      %v6243 = vshrl.u32 %v6242, 7
      %v6244 = vsub.s32 0, %v6243
      %v6245 = vrot.slane %v5750, %v6244
      %v6246 = vlaneseq
      %v6247 = vshrl.u32 %v6246, 7
      %v6248 = vsub.s32 0, %v6247
      %v6249 = vrot.slane %v5752, %v6248
      %v6250 = vlaneseq
      %v6251 = vshrl.u32 %v6250, 7
      %v6252 = vsub.s32 0, %v6251
      %v6253 = vrot.slane %v5735, %v6252
      %v6254 = vlaneseq
      %v6255 = vshrl.u32 %v6254, 7
      %v6256 = vsub.s32 0, %v6255
      %v6257 = vrot.slane %v5749, %v6256
      %v6258 = vlaneseq
      %v6259 = vshrl.u32 %v6258, 7
      %v6260 = vsub.s32 0, %v6259
      %v6261 = vrot.slane %v5751, %v6260
      %v6262 = vlaneseq
      %v6263 = vshrl.u32 %v6262, 7
      %v6264 = vsub.s32 0, %v6263
      %v6265 = vrot.slane %v5753, %v6264
      %v6394 = vsel %vm3412, %v4065, %v5757
      %v6395 = vsel %vm3412, %v4079, %v5761
      %v6396 = vsel %vm3412, %v4087, %v5765
      %v6397 = vsel %vm3412, %v4089, %v5769
      %v6398 = vsel %vm3412, %v4072, %v5773
      %v6399 = vsel %vm3412, %v4086, %v5777
      %v6400 = vsel %vm3412, %v4088, %v5781
      %v6401 = vsel %vm3412, %v4090, %v5785
      %v6402 = vsel %vm3412, %v4114, %v5789
      %v6403 = vsel %vm3412, %v4128, %v5793
      %v6404 = vsel %vm3412, %v4136, %v5797
      %v6405 = vsel %vm3412, %v4138, %v5801
      %v6406 = vsel %vm3412, %v4121, %v5805
      %v6407 = vsel %vm3412, %v4135, %v5809
      %v6408 = vsel %vm3412, %v4137, %v5813
      %v6409 = vsel %vm3412, %v4139, %v5817
      %v6410 = vsel %vm3412, %v4163, %v5821
      %v6411 = vsel %vm3412, %v4177, %v5825
      %v6412 = vsel %vm3412, %v4185, %v5829
      %v6413 = vsel %vm3412, %v4187, %v5833
      %v6414 = vsel %vm3412, %v4170, %v5837
      %v6415 = vsel %vm3412, %v4184, %v5841
      %v6416 = vsel %vm3412, %v4186, %v5845
      %v6417 = vsel %vm3412, %v4188, %v5849
      %v6418 = vsel %vm3412, %v4212, %v5853
      %v6419 = vsel %vm3412, %v4226, %v5857
      %v6420 = vsel %vm3412, %v4234, %v5861
      %v6421 = vsel %vm3412, %v4236, %v5865
      %v6422 = vsel %vm3412, %v4219, %v5869
      %v6423 = vsel %vm3412, %v4233, %v5873
      %v6424 = vsel %vm3412, %v4235, %v5877
      %v6425 = vsel %vm3412, %v4237, %v5881
      %v6426 = vsel %vm3412, %v4261, %v5885
      %v6427 = vsel %vm3412, %v4275, %v5889
      %v6428 = vsel %vm3412, %v4283, %v5893
      %v6429 = vsel %vm3412, %v4285, %v5897
      %v6430 = vsel %vm3412, %v4268, %v5901
      %v6431 = vsel %vm3412, %v4282, %v5905
      %v6432 = vsel %vm3412, %v4284, %v5909
      %v6433 = vsel %vm3412, %v4286, %v5913
      %v6434 = vsel %vm3412, %v4310, %v5917
      %v6435 = vsel %vm3412, %v4324, %v5921
      %v6436 = vsel %vm3412, %v4332, %v5925
      %v6437 = vsel %vm3412, %v4334, %v5929
      %v6438 = vsel %vm3412, %v4317, %v5933
      %v6439 = vsel %vm3412, %v4331, %v5937
      %v6440 = vsel %vm3412, %v4333, %v5941
      %v6441 = vsel %vm3412, %v4335, %v5945
      %v6442 = vsel %vm3412, %v4359, %v5949
      %v6443 = vsel %vm3412, %v4373, %v5953
      %v6444 = vsel %vm3412, %v4381, %v5957
      %v6445 = vsel %vm3412, %v4383, %v5961
      %v6446 = vsel %vm3412, %v4366, %v5965
      %v6447 = vsel %vm3412, %v4380, %v5969
      %v6448 = vsel %vm3412, %v4382, %v5973
      %v6449 = vsel %vm3412, %v4384, %v5977
      %v6450 = vsel %vm3412, %v4408, %v5981
      %v6451 = vsel %vm3412, %v4422, %v5985
      %v6452 = vsel %vm3412, %v4430, %v5989
      %v6453 = vsel %vm3412, %v4432, %v5993
      %v6454 = vsel %vm3412, %v4415, %v5997
      %v6455 = vsel %vm3412, %v4429, %v6001
      %v6456 = vsel %vm3412, %v4431, %v6005
      %v6457 = vsel %vm3412, %v4433, %v6009
      %v6458 = vsel %vm3412, %v4457, %v6013
      %v6459 = vsel %vm3412, %v4471, %v6017
      %v6460 = vsel %vm3412, %v4479, %v6021
      %v6461 = vsel %vm3412, %v4481, %v6025
      %v6462 = vsel %vm3412, %v4464, %v6029
      %v6463 = vsel %vm3412, %v4478, %v6033
      %v6464 = vsel %vm3412, %v4480, %v6037
      %v6465 = vsel %vm3412, %v4482, %v6041
      %v6466 = vsel %vm3412, %v4506, %v6045
      %v6467 = vsel %vm3412, %v4520, %v6049
      %v6468 = vsel %vm3412, %v4528, %v6053
      %v6469 = vsel %vm3412, %v4530, %v6057
      %v6470 = vsel %vm3412, %v4513, %v6061
      %v6471 = vsel %vm3412, %v4527, %v6065
      %v6472 = vsel %vm3412, %v4529, %v6069
      %v6473 = vsel %vm3412, %v4531, %v6073
      %v6474 = vsel %vm3412, %v4555, %v6077
      %v6475 = vsel %vm3412, %v4569, %v6081
      %v6476 = vsel %vm3412, %v4577, %v6085
      %v6477 = vsel %vm3412, %v4579, %v6089
      %v6478 = vsel %vm3412, %v4562, %v6093
      %v6479 = vsel %vm3412, %v4576, %v6097
      %v6480 = vsel %vm3412, %v4578, %v6101
      %v6481 = vsel %vm3412, %v4580, %v6105
      %v6482 = vsel %vm3412, %v4604, %v6109
      %v6483 = vsel %vm3412, %v4618, %v6113
      %v6484 = vsel %vm3412, %v4626, %v6117
      %v6485 = vsel %vm3412, %v4628, %v6121
      %v6486 = vsel %vm3412, %v4611, %v6125
      %v6487 = vsel %vm3412, %v4625, %v6129
      %v6488 = vsel %vm3412, %v4627, %v6133
      %v6489 = vsel %vm3412, %v4629, %v6137
      %v6490 = vsel %vm3412, %v4653, %v6141
      %v6491 = vsel %vm3412, %v4667, %v6145
      %v6492 = vsel %vm3412, %v4675, %v6149
      %v6493 = vsel %vm3412, %v4677, %v6153
      %v6494 = vsel %vm3412, %v4660, %v6157
      %v6495 = vsel %vm3412, %v4674, %v6161
      %v6496 = vsel %vm3412, %v4676, %v6165
      %v6497 = vsel %vm3412, %v4678, %v6169
      %v6498 = vsel %vm3412, %v4702, %v6173
      %v6499 = vsel %vm3412, %v4716, %v6177
      %v6500 = vsel %vm3412, %v4724, %v6181
      %v6501 = vsel %vm3412, %v4726, %v6185
      %v6502 = vsel %vm3412, %v4709, %v6189
      %v6503 = vsel %vm3412, %v4723, %v6193
      %v6504 = vsel %vm3412, %v4725, %v6197
      %v6505 = vsel %vm3412, %v4727, %v6201
      %v6506 = vsel %vm3412, %v4751, %v6205
      %v6507 = vsel %vm3412, %v4765, %v6209
      %v6508 = vsel %vm3412, %v4773, %v6213
      %v6509 = vsel %vm3412, %v4775, %v6217
      %v6510 = vsel %vm3412, %v4758, %v6221
      %v6511 = vsel %vm3412, %v4772, %v6225
      %v6512 = vsel %vm3412, %v4774, %v6229
      %v6513 = vsel %vm3412, %v4776, %v6233
      %v6514 = vsel %vm3412, %v4800, %v6237
      %v6515 = vsel %vm3412, %v4814, %v6241
      %v6516 = vsel %vm3412, %v4822, %v6245
      %v6517 = vsel %vm3412, %v4824, %v6249
      %v6518 = vsel %vm3412, %v4807, %v6253
      %v6519 = vsel %vm3412, %v4821, %v6257
      %v6520 = vsel %vm3412, %v4823, %v6261
      %v6521 = vsel %vm3412, %v4825, %v6265
      %s6522 = scalar_lea.vmem %s208, 32
      %6523 = vst.msk [vmem:[%s6522] sm:$0x3] %vm3541, %v6394
      %6524 = vst.msk [vmem:[%s6522 + $0x2] sm:$0x3] %vm3541, %v6395
      %6525 = vst.msk [vmem:[%s6522 + $0x4] sm:$0x3] %vm3541, %v6396
      %6526 = vst.msk [vmem:[%s6522 + $0x6] sm:$0x3] %vm3541, %v6397
      %6527 = vst.msk [vmem:[%s6522 + $0x8] sm:$0x3] %vm3541, %v6398
      %6528 = vst.msk [vmem:[%s6522 + $0xa] sm:$0x3] %vm3541, %v6399
      %6529 = vst.msk [vmem:[%s6522 + $0xc] sm:$0x3] %vm3541, %v6400
      %6530 = vst.msk [vmem:[%s6522 + $0xe] sm:$0x3] %vm3541, %v6401
      %6531 = vst.msk [vmem:[%s6522 + $0x10] sm:$0x3] %vm3541, %v6402
      %6532 = vst.msk [vmem:[%s6522 + $0x12] sm:$0x3] %vm3541, %v6403
      %6533 = vst.msk [vmem:[%s6522 + $0x14] sm:$0x3] %vm3541, %v6404
      %6534 = vst.msk [vmem:[%s6522 + $0x16] sm:$0x3] %vm3541, %v6405
      %6535 = vst.msk [vmem:[%s6522 + $0x18] sm:$0x3] %vm3541, %v6406
      %6536 = vst.msk [vmem:[%s6522 + $0x1a] sm:$0x3] %vm3541, %v6407
      %6537 = vst.msk [vmem:[%s6522 + $0x1c] sm:$0x3] %vm3541, %v6408
      %6538 = vst.msk [vmem:[%s6522 + $0x1e] sm:$0x3] %vm3541, %v6409
      %6539 = vst.msk [vmem:[%s6522 + $0x40] sm:$0x3] %vm3541, %v6410
      %6540 = vst.msk [vmem:[%s6522 + $0x42] sm:$0x3] %vm3541, %v6411
      %6541 = vst.msk [vmem:[%s6522 + $0x44] sm:$0x3] %vm3541, %v6412
      %6542 = vst.msk [vmem:[%s6522 + $0x46] sm:$0x3] %vm3541, %v6413
      %6543 = vst.msk [vmem:[%s6522 + $0x48] sm:$0x3] %vm3541, %v6414
      %6544 = vst.msk [vmem:[%s6522 + $0x4a] sm:$0x3] %vm3541, %v6415
      %6545 = vst.msk [vmem:[%s6522 + $0x4c] sm:$0x3] %vm3541, %v6416
      %6546 = vst.msk [vmem:[%s6522 + $0x4e] sm:$0x3] %vm3541, %v6417
      %6547 = vst.msk [vmem:[%s6522 + $0x50] sm:$0x3] %vm3541, %v6418
      %6548 = vst.msk [vmem:[%s6522 + $0x52] sm:$0x3] %vm3541, %v6419
      %6549 = vst.msk [vmem:[%s6522 + $0x54] sm:$0x3] %vm3541, %v6420
      %6550 = vst.msk [vmem:[%s6522 + $0x56] sm:$0x3] %vm3541, %v6421
      %6551 = vst.msk [vmem:[%s6522 + $0x58] sm:$0x3] %vm3541, %v6422
      %6552 = vst.msk [vmem:[%s6522 + $0x5a] sm:$0x3] %vm3541, %v6423
      %6553 = vst.msk [vmem:[%s6522 + $0x5c] sm:$0x3] %vm3541, %v6424
      %6554 = vst.msk [vmem:[%s6522 + $0x5e] sm:$0x3] %vm3541, %v6425
      %6555 = vst.msk [vmem:[%s6522 + $0x80] sm:$0x3] %vm3541, %v6426
      %6556 = vst.msk [vmem:[%s6522 + $0x82] sm:$0x3] %vm3541, %v6427
      %6557 = vst.msk [vmem:[%s6522 + $0x84] sm:$0x3] %vm3541, %v6428
      %6558 = vst.msk [vmem:[%s6522 + $0x86] sm:$0x3] %vm3541, %v6429
      %6559 = vst.msk [vmem:[%s6522 + $0x88] sm:$0x3] %vm3541, %v6430
      %6560 = vst.msk [vmem:[%s6522 + $0x8a] sm:$0x3] %vm3541, %v6431
      %6561 = vst.msk [vmem:[%s6522 + $0x8c] sm:$0x3] %vm3541, %v6432
      %6562 = vst.msk [vmem:[%s6522 + $0x8e] sm:$0x3] %vm3541, %v6433
      %6563 = vst.msk [vmem:[%s6522 + $0x90] sm:$0x3] %vm3541, %v6434
      %6564 = vst.msk [vmem:[%s6522 + $0x92] sm:$0x3] %vm3541, %v6435
      %6565 = vst.msk [vmem:[%s6522 + $0x94] sm:$0x3] %vm3541, %v6436
      %6566 = vst.msk [vmem:[%s6522 + $0x96] sm:$0x3] %vm3541, %v6437
      %6567 = vst.msk [vmem:[%s6522 + $0x98] sm:$0x3] %vm3541, %v6438
      %6568 = vst.msk [vmem:[%s6522 + $0x9a] sm:$0x3] %vm3541, %v6439
      %6569 = vst.msk [vmem:[%s6522 + $0x9c] sm:$0x3] %vm3541, %v6440
      %6570 = vst.msk [vmem:[%s6522 + $0x9e] sm:$0x3] %vm3541, %v6441
      %6571 = vst.msk [vmem:[%s6522 + $0xc0] sm:$0x3] %vm3541, %v6442
      %6572 = vst.msk [vmem:[%s6522 + $0xc2] sm:$0x3] %vm3541, %v6443
      %6573 = vst.msk [vmem:[%s6522 + $0xc4] sm:$0x3] %vm3541, %v6444
      %6574 = vst.msk [vmem:[%s6522 + $0xc6] sm:$0x3] %vm3541, %v6445
      %6575 = vst.msk [vmem:[%s6522 + $0xc8] sm:$0x3] %vm3541, %v6446
      %6576 = vst.msk [vmem:[%s6522 + $0xca] sm:$0x3] %vm3541, %v6447
      %6577 = vst.msk [vmem:[%s6522 + $0xcc] sm:$0x3] %vm3541, %v6448
      %6578 = vst.msk [vmem:[%s6522 + $0xce] sm:$0x3] %vm3541, %v6449
      %6579 = vst.msk [vmem:[%s6522 + $0xd0] sm:$0x3] %vm3541, %v6450
      %6580 = vst.msk [vmem:[%s6522 + $0xd2] sm:$0x3] %vm3541, %v6451
      %6581 = vst.msk [vmem:[%s6522 + $0xd4] sm:$0x3] %vm3541, %v6452
      %6582 = vst.msk [vmem:[%s6522 + $0xd6] sm:$0x3] %vm3541, %v6453
      %6583 = vst.msk [vmem:[%s6522 + $0xd8] sm:$0x3] %vm3541, %v6454
      %6584 = vst.msk [vmem:[%s6522 + $0xda] sm:$0x3] %vm3541, %v6455
      %6585 = vst.msk [vmem:[%s6522 + $0xdc] sm:$0x3] %vm3541, %v6456
      %6586 = vst.msk [vmem:[%s6522 + $0xde] sm:$0x3] %vm3541, %v6457
      %6587 = vst.msk [vmem:[%s6522 + $0x100] sm:$0x3] %vm3541, %v6458
      %6588 = vst.msk [vmem:[%s6522 + $0x102] sm:$0x3] %vm3541, %v6459
      %6589 = vst.msk [vmem:[%s6522 + $0x104] sm:$0x3] %vm3541, %v6460
      %6590 = vst.msk [vmem:[%s6522 + $0x106] sm:$0x3] %vm3541, %v6461
      %6591 = vst.msk [vmem:[%s6522 + $0x108] sm:$0x3] %vm3541, %v6462
      %6592 = vst.msk [vmem:[%s6522 + $0x10a] sm:$0x3] %vm3541, %v6463
      %6593 = vst.msk [vmem:[%s6522 + $0x10c] sm:$0x3] %vm3541, %v6464
      %6594 = vst.msk [vmem:[%s6522 + $0x10e] sm:$0x3] %vm3541, %v6465
      %6595 = vst.msk [vmem:[%s6522 + $0x110] sm:$0x3] %vm3541, %v6466
      %6596 = vst.msk [vmem:[%s6522 + $0x112] sm:$0x3] %vm3541, %v6467
      %6597 = vst.msk [vmem:[%s6522 + $0x114] sm:$0x3] %vm3541, %v6468
      %6598 = vst.msk [vmem:[%s6522 + $0x116] sm:$0x3] %vm3541, %v6469
      %6599 = vst.msk [vmem:[%s6522 + $0x118] sm:$0x3] %vm3541, %v6470
      %6600 = vst.msk [vmem:[%s6522 + $0x11a] sm:$0x3] %vm3541, %v6471
      %6601 = vst.msk [vmem:[%s6522 + $0x11c] sm:$0x3] %vm3541, %v6472
      %6602 = vst.msk [vmem:[%s6522 + $0x11e] sm:$0x3] %vm3541, %v6473
      %6603 = vst.msk [vmem:[%s6522 + $0x140] sm:$0x3] %vm3541, %v6474
      %6604 = vst.msk [vmem:[%s6522 + $0x142] sm:$0x3] %vm3541, %v6475
      %6605 = vst.msk [vmem:[%s6522 + $0x144] sm:$0x3] %vm3541, %v6476
      %6606 = vst.msk [vmem:[%s6522 + $0x146] sm:$0x3] %vm3541, %v6477
      %6607 = vst.msk [vmem:[%s6522 + $0x148] sm:$0x3] %vm3541, %v6478
      %6608 = vst.msk [vmem:[%s6522 + $0x14a] sm:$0x3] %vm3541, %v6479
      %6609 = vst.msk [vmem:[%s6522 + $0x14c] sm:$0x3] %vm3541, %v6480
      %6610 = vst.msk [vmem:[%s6522 + $0x14e] sm:$0x3] %vm3541, %v6481
      %6611 = vst.msk [vmem:[%s6522 + $0x150] sm:$0x3] %vm3541, %v6482
      %6612 = vst.msk [vmem:[%s6522 + $0x152] sm:$0x3] %vm3541, %v6483
      %6613 = vst.msk [vmem:[%s6522 + $0x154] sm:$0x3] %vm3541, %v6484
      %6614 = vst.msk [vmem:[%s6522 + $0x156] sm:$0x3] %vm3541, %v6485
      %6615 = vst.msk [vmem:[%s6522 + $0x158] sm:$0x3] %vm3541, %v6486
      %6616 = vst.msk [vmem:[%s6522 + $0x15a] sm:$0x3] %vm3541, %v6487
      %6617 = vst.msk [vmem:[%s6522 + $0x15c] sm:$0x3] %vm3541, %v6488
      %6618 = vst.msk [vmem:[%s6522 + $0x15e] sm:$0x3] %vm3541, %v6489
      %6619 = vst.msk [vmem:[%s6522 + $0x180] sm:$0x3] %vm3541, %v6490
      %6620 = vst.msk [vmem:[%s6522 + $0x182] sm:$0x3] %vm3541, %v6491
      %6621 = vst.msk [vmem:[%s6522 + $0x184] sm:$0x3] %vm3541, %v6492
      %6622 = vst.msk [vmem:[%s6522 + $0x186] sm:$0x3] %vm3541, %v6493
      %6623 = vst.msk [vmem:[%s6522 + $0x188] sm:$0x3] %vm3541, %v6494
      %6624 = vst.msk [vmem:[%s6522 + $0x18a] sm:$0x3] %vm3541, %v6495
      %6625 = vst.msk [vmem:[%s6522 + $0x18c] sm:$0x3] %vm3541, %v6496
      %6626 = vst.msk [vmem:[%s6522 + $0x18e] sm:$0x3] %vm3541, %v6497
      %6627 = vst.msk [vmem:[%s6522 + $0x190] sm:$0x3] %vm3541, %v6498
      %6628 = vst.msk [vmem:[%s6522 + $0x192] sm:$0x3] %vm3541, %v6499
      %6629 = vst.msk [vmem:[%s6522 + $0x194] sm:$0x3] %vm3541, %v6500
      %6630 = vst.msk [vmem:[%s6522 + $0x196] sm:$0x3] %vm3541, %v6501
      %6631 = vst.msk [vmem:[%s6522 + $0x198] sm:$0x3] %vm3541, %v6502
      %6632 = vst.msk [vmem:[%s6522 + $0x19a] sm:$0x3] %vm3541, %v6503
      %6633 = vst.msk [vmem:[%s6522 + $0x19c] sm:$0x3] %vm3541, %v6504
      %6634 = vst.msk [vmem:[%s6522 + $0x19e] sm:$0x3] %vm3541, %v6505
      %6635 = vst.msk [vmem:[%s6522 + $0x1c0] sm:$0x3] %vm3541, %v6506
      %6636 = vst.msk [vmem:[%s6522 + $0x1c2] sm:$0x3] %vm3541, %v6507
      %6637 = vst.msk [vmem:[%s6522 + $0x1c4] sm:$0x3] %vm3541, %v6508
      %6638 = vst.msk [vmem:[%s6522 + $0x1c6] sm:$0x3] %vm3541, %v6509
      %6639 = vst.msk [vmem:[%s6522 + $0x1c8] sm:$0x3] %vm3541, %v6510
      %6640 = vst.msk [vmem:[%s6522 + $0x1ca] sm:$0x3] %vm3541, %v6511
      %6641 = vst.msk [vmem:[%s6522 + $0x1cc] sm:$0x3] %vm3541, %v6512
      %6642 = vst.msk [vmem:[%s6522 + $0x1ce] sm:$0x3] %vm3541, %v6513
      %6643 = vst.msk [vmem:[%s6522 + $0x1d0] sm:$0x3] %vm3541, %v6514
      %6644 = vst.msk [vmem:[%s6522 + $0x1d2] sm:$0x3] %vm3541, %v6515
      %6645 = vst.msk [vmem:[%s6522 + $0x1d4] sm:$0x3] %vm3541, %v6516
      %6646 = vst.msk [vmem:[%s6522 + $0x1d6] sm:$0x3] %vm3541, %v6517
      %6647 = vst.msk [vmem:[%s6522 + $0x1d8] sm:$0x3] %vm3541, %v6518
      %6648 = vst.msk [vmem:[%s6522 + $0x1da] sm:$0x3] %vm3541, %v6519
      %6649 = vst.msk [vmem:[%s6522 + $0x1dc] sm:$0x3] %vm3541, %v6520
      %6650 = vst.msk [vmem:[%s6522 + $0x1de] sm:$0x3] %vm3541, %v6521
      %s6651 = smul.u32 8, %s19
      %p6652 = scmp.lt.s32.totalorder %s18, 1
      %s6653 = scalar_select %p6652, %s18, 1
      %p6654 = scmp.lt.s32.totalorder %s6651, 15
      %s6655 = scalar_select %p6654, %s6651, 15
      %s6656 = smul.addr %s6655, 32
      %s6657 = smul.addr %s6653, 512
      %s6658 = sadd.s32 %s6656, %s6657
      %s6659 = smul.addr %s6658, 2
      %s6660 = scalar_lea.vmem %s3, %s6659
      // Predicated region
      $region33: #{tpu_custom_call.1} parent=31 // pred_check
        %p6661 = pneg %p116
      $region34: #{tpu_custom_call.1} parent=31 // pred_check_branch
        %6663 = sbr.rel (%p6661) target = $region36
      $region35: #{tpu_custom_call.1} parent=31 // pred_region
        %s6664 = smul.u32 8, %s19
      $region36: #{tpu_custom_call.1} parent=31 // pred_fallthru
        _
    $region32: #{tpu_custom_call.1} parent=5 // pred_fallthru
      _
    %p6665 = scmp.le.s32.totalorder 2, %s9
    // Predicated region
    $region37: #{tpu_custom_call.1} parent=5 // pred_check
      %p6666 = pneg %p6665
    $region38: #{tpu_custom_call.1} parent=5 // pred_check_branch
      %6668 = sbr.rel (%p6666) target = $region40
    $region39: #{tpu_custom_call.1} parent=5 // pred_region
      %s6669 = ssub.s32 %s9, 2
      // Predicated region
      $region41: #{tpu_custom_call.1} parent=39 // pred_check
        %p6670 = pneg %p122
      $region42: #{tpu_custom_call.1} parent=39 // pred_check_branch
        %6672 = sbr.rel (%p6670) target = $region44
      $region43: #{tpu_custom_call.1} parent=39 // pred_region
        %s6673 = smul.u32 8, %s21
        %p6674 = scmp.lt.s32.totalorder %s20, 1
        %s6675 = scalar_select %p6674, %s20, 1
        %p6676 = scmp.lt.s32.totalorder %s6673, 15
        %s6677 = scalar_select %p6676, %s6673, 15
        %s6678 = smul.addr %s6677, 32
        %s6679 = smul.addr %s6675, 512
        %s6680 = sadd.s32 %s6678, %s6679
        %s6681 = smul.addr %s6680, 2
        %s6682 = scalar_lea.vmem %s3, %s6681
      $region44: #{tpu_custom_call.1} parent=39 // pred_fallthru
        _
    $region40: #{tpu_custom_call.1} parent=5 // pred_fallthru
      _
  $region6: #{tpu_custom_call.1} parent=0 // loop_footer
    %s13 = sadd.s32 1, %s9
  $region7: #{tpu_custom_call.1} parent=0 // loop_footer_branch
    %8 = sbr.rel target = $region3
  $region8: #{tpu_custom_call.1} parent=0 // loop_exit
    _

</llo_original>
